<compile_context>
chip_gen: v5e
topology: v5e:2x2
jax: 0.10.0
libtpu: 0.0.40
codegen_flags: <defaults>
</compile_context>

<pallas_src>
import jax
import jax.numpy as jnp
from jax.experimental import pallas as pl
from jax.experimental.pallas import tpu as pltpu

LATENT_DIM = 100
LATENT_PAD = 128                       # latent zero-padded to one full lane tile
MNIST_IMAGE_SIZE = 28
OUT_DIM = MNIST_IMAGE_SIZE * MNIST_IMAGE_SIZE   # 784 (NOT padded; see notes)
GENERATOR_LAYER_SIZES = [128, 256, 512, 1024]
BN_EPS = 1e-5


def _leaky_relu(x, slope=0.2):
    return jnp.where(x > 0, x, slope * x)


def _batchnorm_train(h, gamma, beta):
    """BatchNorm1d training-mode forward (two-pass, f32), exact torch math:
    biased batch variance, eps inside rsqrt, affine gamma/beta."""
    mean = jnp.mean(h, axis=0, keepdims=True)
    var = jnp.mean((h - mean) * (h - mean), axis=0, keepdims=True)
    inv = jax.lax.rsqrt(var + BN_EPS)
    return (h - mean) * (inv * gamma) + beta


def generator_kernel(x_ref,
                     w1_ref, b1_ref,
                     w2_ref, g2_ref, be2_ref,
                     w3_ref, g3_ref, be3_ref,
                     w4_ref, g4_ref, be4_ref,
                     w5_ref, b5_ref,
                     o_ref):
    """Whole generator forward; whole batch resident in VMEM (grid-less).

    Dot operands are bf16, accumulation + elementwise math in f32.
    Biases before BatchNorm layers are omitted (exactly cancelled by the
    batch-mean subtraction in training-mode BN).
    """
    x = x_ref[...]                                            # (B, 128) bf16

    # Linear(100->128) + LeakyReLU(0.2)                       (no BatchNorm)
    h = jnp.dot(x, w1_ref[...], preferred_element_type=jnp.float32) + b1_ref[...]
    h = _leaky_relu(h)

    # Linear(128->256) + BatchNorm1d + LeakyReLU(0.2)
    h = jnp.dot(h.astype(jnp.bfloat16), w2_ref[...],
                preferred_element_type=jnp.float32)
    h = _leaky_relu(_batchnorm_train(h, g2_ref[...], be2_ref[...]))

    # Linear(256->512) + BatchNorm1d + LeakyReLU(0.2)
    h = jnp.dot(h.astype(jnp.bfloat16), w3_ref[...],
                preferred_element_type=jnp.float32)
    h = _leaky_relu(_batchnorm_train(h, g3_ref[...], be3_ref[...]))

    # Linear(512->1024) + BatchNorm1d + LeakyReLU(0.2)
    h = jnp.dot(h.astype(jnp.bfloat16), w4_ref[...],
                preferred_element_type=jnp.float32)
    h = _leaky_relu(_batchnorm_train(h, g4_ref[...], be4_ref[...]))

    # Linear(1024->784) + Tanh   (natural width; tiny masked tail store is fine)
    h = jnp.dot(h.astype(jnp.bfloat16), w5_ref[...],
                preferred_element_type=jnp.float32) + b5_ref[...]
    o_ref[...] = jnp.tanh(h)


def init_params(key):
    """Deterministic init mimicking PyTorch nn.Linear default (U(-1/sqrt(fan_in), +))."""
    dims = [LATENT_DIM] + GENERATOR_LAYER_SIZES + [OUT_DIM]
    params = {}
    for i in range(5):
        fan_in, fan_out = dims[i], dims[i + 1]
        key, kw, kb = jax.random.split(key, 3)
        bound = 1.0 / (fan_in ** 0.5)
        params[f"w{i+1}"] = jax.random.uniform(
            kw, (fan_in, fan_out), jnp.float32, -bound, bound)
        params[f"b{i+1}"] = jax.random.uniform(
            kb, (1, fan_out), jnp.float32, -bound, bound)
    # BatchNorm affine params for layers 2, 3, 4 (gamma=1, beta=0 at init)
    for i, n in zip((2, 3, 4), GENERATOR_LAYER_SIZES[1:]):
        params[f"g{i}"] = jnp.ones((1, n), jnp.float32)
        params[f"be{i}"] = jnp.zeros((1, n), jnp.float32)
    return params


def prepare_generator_params(params):
    """ONE-TIME preparation: pad w1's K dim 100->128 and cast matmul operands
    to bf16. Call this once (e.g. after each optimizer step), NOT per forward
    call — the forward pass consumes the returned tuple directly, so no
    pad/convert HBM traffic is paid on the per-call critical path."""
    bf16 = jnp.bfloat16
    w1_p = (jnp.zeros((LATENT_PAD, GENERATOR_LAYER_SIZES[0]), jnp.float32)
            .at[:LATENT_DIM, :].set(params["w1"]))
    prepared = (
        w1_p.astype(bf16), params["b1"],
        params["w2"].astype(bf16), params["g2"], params["be2"],
        params["w3"].astype(bf16), params["g3"], params["be3"],
        params["w4"].astype(bf16), params["g4"], params["be4"],
        params["w5"].astype(bf16), params["b5"],            # natural 1024x784
    )
    # Materialize now so per-call jit traces see plain device arrays.
    return jax.tree_util.tree_map(jnp.asarray, prepared)


def generator_forward(x, prepared):
    """x: (B, LATENT_DIM) f32, prepared: output of prepare_generator_params.
    Returns (B, 1, 28, 28) f32 (NCHW, like torch)."""
    batch = x.shape[0]
    x_flat = x.reshape(batch, -1)                 # nn.Flatten()
    # Only the tiny (B, 100) -> (B, 128) latent pad + bf16 cast is per-call.
    x_p = (jnp.zeros((batch, LATENT_PAD), jnp.float32)
           .at[:, :LATENT_DIM].set(x_flat).astype(jnp.bfloat16))

    vmem = pl.BlockSpec(memory_space=pltpu.MemorySpace.VMEM)
    n_in = 1 + len(prepared)
    out = pl.pallas_call(
        generator_kernel,
        out_shape=jax.ShapeDtypeStruct((batch, OUT_DIM), jnp.float32),
        in_specs=[vmem] * n_in,
        out_specs=vmem,
        # ~3.2 MB of bf16 weights + small activations; 32 MiB cap is safe on
        # v5e/v6e (128 MiB VMEM) and on v7x (64 MiB VMEM). Raise on v5e/v6e
        # (and batch-tile on v7x) only if the resident batch grows very large.
        compiler_params=pltpu.CompilerParams(vmem_limit_bytes=32 * 1024 * 1024),
    )(x_p, *prepared)

    # Reshape like torch.reshape(x, (B, 1, 28, 28)).
    return out.reshape(batch, 1, MNIST_IMAGE_SIZE, MNIST_IMAGE_SIZE)


def _reference_forward(x, params):
    """Pure-JAX reference with exact torch training-mode semantics (two-pass BN,
    biases included); matmul operands cast to bf16 to match the kernel's
    precision choice (f32 accumulation)."""
    def dot_bf16(a, w):
        return jnp.dot(a.astype(jnp.bfloat16), w.astype(jnp.bfloat16),
                       preferred_element_type=jnp.float32)

    h = x.reshape(x.shape[0], -1)
    h = _leaky_relu(dot_bf16(h, params["w1"]) + params["b1"])
    for i in (2, 3, 4):
        h = dot_bf16(h, params[f"w{i}"]) + params[f"b{i}"]
        mean = jnp.mean(h, axis=0, keepdims=True)
        var = jnp.mean((h - mean) ** 2, axis=0, keepdims=True)
        h = (h - mean) * jax.lax.rsqrt(var + BN_EPS) * params[f"g{i}"] + params[f"be{i}"]
        h = _leaky_relu(h)
    h = jnp.tanh(dot_bf16(h, params["w5"]) + params["b5"])
    return h.reshape(x.shape[0], 1, MNIST_IMAGE_SIZE, MNIST_IMAGE_SIZE)


if __name__ == "__main__":
    key = jax.random.PRNGKey(0)
    key, kx = jax.random.split(key)

    batch_size = 8
    x = jax.random.normal(kx, (batch_size, LATENT_DIM), jnp.float32)

    params = init_params(key)
    prepared = prepare_generator_params(params)   # one-time pad + bf16 cast

    fwd = jax.jit(generator_forward)
    out = jax.block_until_ready(fwd(x, prepared))

    assert out.shape == (batch_size, 1, MNIST_IMAGE_SIZE, MNIST_IMAGE_SIZE)
    assert jnp.isfinite(out).all()

    ref = _reference_forward(x, params)
    # Tolerance accounts for bf16 rounding of intermediate activations
    # (outputs are in [-1, 1] after tanh).
    assert jnp.allclose(out, ref, atol=1e-2, rtol=1e-2), "mismatch vs reference"

    print("KERNEL_OK")
</pallas_src>

<mosaic_0001>
module attributes {stable_mosaic.version = 11 : i64} {
  func.func @generator_kernel(%arg0: memref<8x128xbf16, #tpu.memory_space<vmem>>, %arg1: memref<128x128xbf16, #tpu.memory_space<vmem>>, %arg2: memref<1x128xf32, #tpu.memory_space<vmem>>, %arg3: memref<128x256xbf16, #tpu.memory_space<vmem>>, %arg4: memref<1x256xf32, #tpu.memory_space<vmem>>, %arg5: memref<1x256xf32, #tpu.memory_space<vmem>>, %arg6: memref<256x512xbf16, #tpu.memory_space<vmem>>, %arg7: memref<1x512xf32, #tpu.memory_space<vmem>>, %arg8: memref<1x512xf32, #tpu.memory_space<vmem>>, %arg9: memref<512x1024xbf16, #tpu.memory_space<vmem>>, %arg10: memref<1x1024xf32, #tpu.memory_space<vmem>>, %arg11: memref<1x1024xf32, #tpu.memory_space<vmem>>, %arg12: memref<1024x784xbf16, #tpu.memory_space<vmem>>, %arg13: memref<1x784xf32, #tpu.memory_space<vmem>>, %arg14: memref<8x784xf32, #tpu.memory_space<vmem>>) attributes {dimension_semantics = [], scalar_prefetch = 0 : i64, scratch_operands = 0 : i64, tpu.core_type = #tpu.core_type<tc>} {
    %c0 = arith.constant 0 : index
    %c0_0 = arith.constant 0 : index
    %0 = vector.load %arg0[%c0, %c0_0] : memref<8x128xbf16, #tpu.memory_space<vmem>>, vector<8x128xbf16>
    %c0_1 = arith.constant 0 : index
    %c0_2 = arith.constant 0 : index
    %1 = vector.load %arg1[%c0_1, %c0_2] : memref<128x128xbf16, #tpu.memory_space<vmem>>, vector<128x128xbf16>
    %cst = arith.constant dense<0.000000e+00> : vector<8x128xf32>
    %2 = tpu.matmul %0, %1, %cst {dimension_numbers = #tpu.dot_dimension_numbers<[1], [0], [0], [1], [0, 0, 1, 1], [], []>} : vector<8x128xbf16>, vector<128x128xbf16>, vector<8x128xf32> -> vector<8x128xf32>
    %c0_3 = arith.constant 0 : index
    %c0_4 = arith.constant 0 : index
    %3 = vector.load %arg2[%c0_3, %c0_4] : memref<1x128xf32, #tpu.memory_space<vmem>>, vector<1x128xf32>
    %4 = vector.broadcast %3 : vector<1x128xf32> to vector<8x128xf32>
    %5 = arith.addf %2, %4 : vector<8x128xf32>
    %cst_5 = arith.constant 0.000000e+00 : f32
    %6 = vector.broadcast %cst_5 : f32 to vector<8x128xf32>
    %7 = arith.cmpf ogt, %5, %6 : vector<8x128xf32>
    %cst_6 = arith.constant 2.000000e-01 : f32
    %8 = vector.broadcast %cst_6 : f32 to vector<8x128xf32>
    %9 = arith.mulf %8, %5 : vector<8x128xf32>
    %10 = arith.select %7, %5, %9 : vector<8x128xi1>, vector<8x128xf32>
    %11 = arith.truncf %10 : vector<8x128xf32> to vector<8x128xbf16>
    %c0_7 = arith.constant 0 : index
    %c0_8 = arith.constant 0 : index
    %12 = vector.load %arg3[%c0_7, %c0_8] : memref<128x256xbf16, #tpu.memory_space<vmem>>, vector<128x256xbf16>
    %cst_9 = arith.constant dense<0.000000e+00> : vector<8x256xf32>
    %13 = tpu.matmul %11, %12, %cst_9 {dimension_numbers = #tpu.dot_dimension_numbers<[1], [0], [0], [1], [0, 0, 1, 1], [], []>} : vector<8x128xbf16>, vector<128x256xbf16>, vector<8x256xf32> -> vector<8x256xf32>
    %c0_10 = arith.constant 0 : index
    %c0_11 = arith.constant 0 : index
    %14 = vector.load %arg4[%c0_10, %c0_11] : memref<1x256xf32, #tpu.memory_space<vmem>>, vector<1x256xf32>
    %c0_12 = arith.constant 0 : index
    %c0_13 = arith.constant 0 : index
    %15 = vector.load %arg5[%c0_12, %c0_13] : memref<1x256xf32, #tpu.memory_space<vmem>>, vector<1x256xf32>
    %cst_14 = arith.constant dense<0.000000e+00> : vector<256xf32>
    %16 = vector.multi_reduction <add>, %13, %cst_14 [0] : vector<8x256xf32> to vector<256xf32>
    %17 = vector.shape_cast %16 : vector<256xf32> to vector<1x256xf32>
    %cst_15 = arith.constant 8.000000e+00 : f32
    %18 = vector.broadcast %cst_15 : f32 to vector<1x256xf32>
    %19 = arith.divf %17, %18 : vector<1x256xf32>
    %20 = vector.broadcast %19 : vector<1x256xf32> to vector<8x256xf32>
    %21 = arith.subf %13, %20 : vector<8x256xf32>
    %22 = vector.broadcast %19 : vector<1x256xf32> to vector<8x256xf32>
    %23 = arith.subf %13, %22 : vector<8x256xf32>
    %24 = arith.mulf %21, %23 : vector<8x256xf32>
    %cst_16 = arith.constant dense<0.000000e+00> : vector<256xf32>
    %25 = vector.multi_reduction <add>, %24, %cst_16 [0] : vector<8x256xf32> to vector<256xf32>
    %26 = vector.shape_cast %25 : vector<256xf32> to vector<1x256xf32>
    %cst_17 = arith.constant 8.000000e+00 : f32
    %27 = vector.broadcast %cst_17 : f32 to vector<1x256xf32>
    %28 = arith.divf %26, %27 : vector<1x256xf32>
    %cst_18 = arith.constant 9.99999974E-6 : f32
    %29 = vector.broadcast %cst_18 : f32 to vector<1x256xf32>
    %30 = arith.addf %28, %29 : vector<1x256xf32>
    %31 = math.rsqrt %30 : vector<1x256xf32>
    %32 = vector.broadcast %19 : vector<1x256xf32> to vector<8x256xf32>
    %33 = arith.subf %13, %32 : vector<8x256xf32>
    %34 = arith.mulf %31, %14 : vector<1x256xf32>
    %35 = vector.broadcast %34 : vector<1x256xf32> to vector<8x256xf32>
    %36 = arith.mulf %33, %35 : vector<8x256xf32>
    %37 = vector.broadcast %15 : vector<1x256xf32> to vector<8x256xf32>
    %38 = arith.addf %36, %37 : vector<8x256xf32>
    %cst_19 = arith.constant 0.000000e+00 : f32
    %39 = vector.broadcast %cst_19 : f32 to vector<8x256xf32>
    %40 = arith.cmpf ogt, %38, %39 : vector<8x256xf32>
    %cst_20 = arith.constant 2.000000e-01 : f32
    %41 = vector.broadcast %cst_20 : f32 to vector<8x256xf32>
    %42 = arith.mulf %41, %38 : vector<8x256xf32>
    %43 = arith.select %40, %38, %42 : vector<8x256xi1>, vector<8x256xf32>
    %44 = arith.truncf %43 : vector<8x256xf32> to vector<8x256xbf16>
    %c0_21 = arith.constant 0 : index
    %c0_22 = arith.constant 0 : index
    %45 = vector.load %arg6[%c0_21, %c0_22] : memref<256x512xbf16, #tpu.memory_space<vmem>>, vector<256x512xbf16>
    %cst_23 = arith.constant dense<0.000000e+00> : vector<8x512xf32>
    %46 = tpu.matmul %44, %45, %cst_23 {dimension_numbers = #tpu.dot_dimension_numbers<[1], [0], [0], [1], [0, 0, 1, 1], [], []>} : vector<8x256xbf16>, vector<256x512xbf16>, vector<8x512xf32> -> vector<8x512xf32>
    %c0_24 = arith.constant 0 : index
    %c0_25 = arith.constant 0 : index
    %47 = vector.load %arg7[%c0_24, %c0_25] : memref<1x512xf32, #tpu.memory_space<vmem>>, vector<1x512xf32>
    %c0_26 = arith.constant 0 : index
    %c0_27 = arith.constant 0 : index
    %48 = vector.load %arg8[%c0_26, %c0_27] : memref<1x512xf32, #tpu.memory_space<vmem>>, vector<1x512xf32>
    %cst_28 = arith.constant dense<0.000000e+00> : vector<512xf32>
    %49 = vector.multi_reduction <add>, %46, %cst_28 [0] : vector<8x512xf32> to vector<512xf32>
    %50 = vector.shape_cast %49 : vector<512xf32> to vector<1x512xf32>
    %cst_29 = arith.constant 8.000000e+00 : f32
    %51 = vector.broadcast %cst_29 : f32 to vector<1x512xf32>
    %52 = arith.divf %50, %51 : vector<1x512xf32>
    %53 = vector.broadcast %52 : vector<1x512xf32> to vector<8x512xf32>
    %54 = arith.subf %46, %53 : vector<8x512xf32>
    %55 = vector.broadcast %52 : vector<1x512xf32> to vector<8x512xf32>
    %56 = arith.subf %46, %55 : vector<8x512xf32>
    %57 = arith.mulf %54, %56 : vector<8x512xf32>
    %cst_30 = arith.constant dense<0.000000e+00> : vector<512xf32>
    %58 = vector.multi_reduction <add>, %57, %cst_30 [0] : vector<8x512xf32> to vector<512xf32>
    %59 = vector.shape_cast %58 : vector<512xf32> to vector<1x512xf32>
    %cst_31 = arith.constant 8.000000e+00 : f32
    %60 = vector.broadcast %cst_31 : f32 to vector<1x512xf32>
    %61 = arith.divf %59, %60 : vector<1x512xf32>
    %cst_32 = arith.constant 9.99999974E-6 : f32
    %62 = vector.broadcast %cst_32 : f32 to vector<1x512xf32>
    %63 = arith.addf %61, %62 : vector<1x512xf32>
    %64 = math.rsqrt %63 : vector<1x512xf32>
    %65 = vector.broadcast %52 : vector<1x512xf32> to vector<8x512xf32>
    %66 = arith.subf %46, %65 : vector<8x512xf32>
    %67 = arith.mulf %64, %47 : vector<1x512xf32>
    %68 = vector.broadcast %67 : vector<1x512xf32> to vector<8x512xf32>
    %69 = arith.mulf %66, %68 : vector<8x512xf32>
    %70 = vector.broadcast %48 : vector<1x512xf32> to vector<8x512xf32>
    %71 = arith.addf %69, %70 : vector<8x512xf32>
    %cst_33 = arith.constant 0.000000e+00 : f32
    %72 = vector.broadcast %cst_33 : f32 to vector<8x512xf32>
    %73 = arith.cmpf ogt, %71, %72 : vector<8x512xf32>
    %cst_34 = arith.constant 2.000000e-01 : f32
    %74 = vector.broadcast %cst_34 : f32 to vector<8x512xf32>
    %75 = arith.mulf %74, %71 : vector<8x512xf32>
    %76 = arith.select %73, %71, %75 : vector<8x512xi1>, vector<8x512xf32>
    %77 = arith.truncf %76 : vector<8x512xf32> to vector<8x512xbf16>
    %c0_35 = arith.constant 0 : index
    %c0_36 = arith.constant 0 : index
    %78 = vector.load %arg9[%c0_35, %c0_36] : memref<512x1024xbf16, #tpu.memory_space<vmem>>, vector<512x1024xbf16>
    %cst_37 = arith.constant dense<0.000000e+00> : vector<8x1024xf32>
    %79 = tpu.matmul %77, %78, %cst_37 {dimension_numbers = #tpu.dot_dimension_numbers<[1], [0], [0], [1], [0, 0, 1, 1], [], []>} : vector<8x512xbf16>, vector<512x1024xbf16>, vector<8x1024xf32> -> vector<8x1024xf32>
    %c0_38 = arith.constant 0 : index
    %c0_39 = arith.constant 0 : index
    %80 = vector.load %arg10[%c0_38, %c0_39] : memref<1x1024xf32, #tpu.memory_space<vmem>>, vector<1x1024xf32>
    %c0_40 = arith.constant 0 : index
    %c0_41 = arith.constant 0 : index
    %81 = vector.load %arg11[%c0_40, %c0_41] : memref<1x1024xf32, #tpu.memory_space<vmem>>, vector<1x1024xf32>
    %cst_42 = arith.constant dense<0.000000e+00> : vector<1024xf32>
    %82 = vector.multi_reduction <add>, %79, %cst_42 [0] : vector<8x1024xf32> to vector<1024xf32>
    %83 = vector.shape_cast %82 : vector<1024xf32> to vector<1x1024xf32>
    %cst_43 = arith.constant 8.000000e+00 : f32
    %84 = vector.broadcast %cst_43 : f32 to vector<1x1024xf32>
    %85 = arith.divf %83, %84 : vector<1x1024xf32>
    %86 = vector.broadcast %85 : vector<1x1024xf32> to vector<8x1024xf32>
    %87 = arith.subf %79, %86 : vector<8x1024xf32>
    %88 = vector.broadcast %85 : vector<1x1024xf32> to vector<8x1024xf32>
    %89 = arith.subf %79, %88 : vector<8x1024xf32>
    %90 = arith.mulf %87, %89 : vector<8x1024xf32>
    %cst_44 = arith.constant dense<0.000000e+00> : vector<1024xf32>
    %91 = vector.multi_reduction <add>, %90, %cst_44 [0] : vector<8x1024xf32> to vector<1024xf32>
    %92 = vector.shape_cast %91 : vector<1024xf32> to vector<1x1024xf32>
    %cst_45 = arith.constant 8.000000e+00 : f32
    %93 = vector.broadcast %cst_45 : f32 to vector<1x1024xf32>
    %94 = arith.divf %92, %93 : vector<1x1024xf32>
    %cst_46 = arith.constant 9.99999974E-6 : f32
    %95 = vector.broadcast %cst_46 : f32 to vector<1x1024xf32>
    %96 = arith.addf %94, %95 : vector<1x1024xf32>
    %97 = math.rsqrt %96 : vector<1x1024xf32>
    %98 = vector.broadcast %85 : vector<1x1024xf32> to vector<8x1024xf32>
    %99 = arith.subf %79, %98 : vector<8x1024xf32>
    %100 = arith.mulf %97, %80 : vector<1x1024xf32>
    %101 = vector.broadcast %100 : vector<1x1024xf32> to vector<8x1024xf32>
    %102 = arith.mulf %99, %101 : vector<8x1024xf32>
    %103 = vector.broadcast %81 : vector<1x1024xf32> to vector<8x1024xf32>
    %104 = arith.addf %102, %103 : vector<8x1024xf32>
    %cst_47 = arith.constant 0.000000e+00 : f32
    %105 = vector.broadcast %cst_47 : f32 to vector<8x1024xf32>
    %106 = arith.cmpf ogt, %104, %105 : vector<8x1024xf32>
    %cst_48 = arith.constant 2.000000e-01 : f32
    %107 = vector.broadcast %cst_48 : f32 to vector<8x1024xf32>
    %108 = arith.mulf %107, %104 : vector<8x1024xf32>
    %109 = arith.select %106, %104, %108 : vector<8x1024xi1>, vector<8x1024xf32>
    %110 = arith.truncf %109 : vector<8x1024xf32> to vector<8x1024xbf16>
    %c0_49 = arith.constant 0 : index
    %c0_50 = arith.constant 0 : index
    %111 = vector.load %arg12[%c0_49, %c0_50] : memref<1024x784xbf16, #tpu.memory_space<vmem>>, vector<1024x784xbf16>
    %cst_51 = arith.constant dense<0.000000e+00> : vector<8x784xf32>
    %112 = tpu.matmul %110, %111, %cst_51 {dimension_numbers = #tpu.dot_dimension_numbers<[1], [0], [0], [1], [0, 0, 1, 1], [], []>} : vector<8x1024xbf16>, vector<1024x784xbf16>, vector<8x784xf32> -> vector<8x784xf32>
    %c0_52 = arith.constant 0 : index
    %c0_53 = arith.constant 0 : index
    %113 = vector.load %arg13[%c0_52, %c0_53] : memref<1x784xf32, #tpu.memory_space<vmem>>, vector<1x784xf32>
    %114 = vector.broadcast %113 : vector<1x784xf32> to vector<8x784xf32>
    %115 = arith.addf %112, %114 : vector<8x784xf32>
    %116 = math.tanh %115 : vector<8x784xf32>
    %c0_54 = arith.constant 0 : index
    %c0_55 = arith.constant 0 : index
    %117 = vector.load %arg14[%c0_54, %c0_55] : memref<8x784xf32, #tpu.memory_space<vmem>>, vector<8x784xf32>
    tpu.vector_store %arg14[%c0_54, %c0_55], %116 {strides = array<i32>} : memref<8x784xf32, #tpu.memory_space<vmem>>, vector<8x784xf32>,
    return
  }
}

</mosaic_0001>

<llo_original>
// kernel: generator_forward.1
$region0: #{generator_forward.1}
  #allocation0 [shape = 'u32[]', space=smem, size = 0x4, offset = 0x4, fixed_abs, tag = 'smem constant byte address 0x4 - core index']
  #allocation1 [shape = 'u32[72,128]{1,0:T(1,128)}', space=vmem, size = 0x9000, scoped, tag = 'internal scratch']
  %s0 = inlined_call_operand.vmem [shape: bf16[8,128], index: 0, kind: input, shape index: {}]
  %s1 = inlined_call_operand.vmem [shape: bf16[128,128], index: 1, kind: input, shape index: {}]
  %s2 = inlined_call_operand.vmem [shape: f32[1,128], index: 2, kind: input, shape index: {}]
  %s3 = inlined_call_operand.vmem [shape: bf16[128,256], index: 3, kind: input, shape index: {}]
  %s4 = inlined_call_operand.vmem [shape: f32[1,256], index: 4, kind: input, shape index: {}]
  %s5 = inlined_call_operand.vmem [shape: f32[1,256], index: 5, kind: input, shape index: {}]
  %s6 = inlined_call_operand.vmem [shape: bf16[256,512], index: 6, kind: input, shape index: {}]
  %s7 = inlined_call_operand.vmem [shape: f32[1,512], index: 7, kind: input, shape index: {}]
  %s8 = inlined_call_operand.vmem [shape: f32[1,512], index: 8, kind: input, shape index: {}]
  %s9 = inlined_call_operand.vmem [shape: bf16[512,1024], index: 9, kind: input, shape index: {}]
  %s10 = inlined_call_operand.vmem [shape: f32[1,1024], index: 10, kind: input, shape index: {}]
  %s11 = inlined_call_operand.vmem [shape: f32[1,1024], index: 11, kind: input, shape index: {}]
  %s12 = inlined_call_operand.vmem [shape: bf16[1024,784], index: 12, kind: input, shape index: {}]
  %s13 = inlined_call_operand.vmem [shape: f32[1,784], index: 13, kind: input, shape index: {}]
  %s14 = inlined_call_operand.vmem [shape: f32[8,784], index: 14, kind: output, shape index: {}]
  %s15 = sld [smem:[#allocation0]]
  $region66: #{generator_forward.1} parent=0
    _
  %s17 = ssub.s32 1, %s15
  %s18 = scalar_select 0, %s17, %s15
  // Predicated region
  $region2: #{generator_forward.1} parent=0 // pred_check
    _
  $region3: #{generator_forward.1} parent=0 // pred_check_branch
    %20 = sbr.rel (0) target = $region5
  $region4: #{generator_forward.1} parent=0 // pred_region
    _
  $region5: #{generator_forward.1} parent=0 // pred_fallthru
    _
  // Predicated region
  $region6: #{generator_forward.1} parent=0 // pred_check
    _
  $region7: #{generator_forward.1} parent=0 // pred_check_branch
    %22 = sbr.rel (0) target = $region9
  $region8: #{generator_forward.1} parent=0 // pred_region
    _
  $region9: #{generator_forward.1} parent=0 // pred_fallthru
    _
  // Predicated region
  $region10: #{generator_forward.1} parent=0 // pred_check
    _
  $region11: #{generator_forward.1} parent=0 // pred_check_branch
    %24 = sbr.rel (0) target = $region13
  $region12: #{generator_forward.1} parent=0 // pred_region
    _
  $region13: #{generator_forward.1} parent=0 // pred_fallthru
    _
  // Predicated region
  $region14: #{generator_forward.1} parent=0 // pred_check
    _
  $region15: #{generator_forward.1} parent=0 // pred_check_branch
    %26 = sbr.rel (0) target = $region17
  $region16: #{generator_forward.1} parent=0 // pred_region
    _
  $region17: #{generator_forward.1} parent=0 // pred_fallthru
    _
  // Predicated region
  $region18: #{generator_forward.1} parent=0 // pred_check
    _
  $region19: #{generator_forward.1} parent=0 // pred_check_branch
    %28 = sbr.rel (0) target = $region21
  $region20: #{generator_forward.1} parent=0 // pred_region
    _
  $region21: #{generator_forward.1} parent=0 // pred_fallthru
    _
  // Predicated region
  $region22: #{generator_forward.1} parent=0 // pred_check
    _
  $region23: #{generator_forward.1} parent=0 // pred_check_branch
    %30 = sbr.rel (0) target = $region25
  $region24: #{generator_forward.1} parent=0 // pred_region
    _
  $region25: #{generator_forward.1} parent=0 // pred_fallthru
    _
  // Predicated region
  $region26: #{generator_forward.1} parent=0 // pred_check
    _
  $region27: #{generator_forward.1} parent=0 // pred_check_branch
    %32 = sbr.rel (0) target = $region29
  $region28: #{generator_forward.1} parent=0 // pred_region
    _
  $region29: #{generator_forward.1} parent=0 // pred_fallthru
    _
  // Predicated region
  $region30: #{generator_forward.1} parent=0 // pred_check
    _
  $region31: #{generator_forward.1} parent=0 // pred_check_branch
    %34 = sbr.rel (0) target = $region33
  $region32: #{generator_forward.1} parent=0 // pred_region
    _
  $region33: #{generator_forward.1} parent=0 // pred_fallthru
    _
  // Predicated region
  $region34: #{generator_forward.1} parent=0 // pred_check
    _
  $region35: #{generator_forward.1} parent=0 // pred_check_branch
    %36 = sbr.rel (0) target = $region37
  $region36: #{generator_forward.1} parent=0 // pred_region
    _
  $region37: #{generator_forward.1} parent=0 // pred_fallthru
    _
  // Predicated region
  $region38: #{generator_forward.1} parent=0 // pred_check
    _
  $region39: #{generator_forward.1} parent=0 // pred_check_branch
    %38 = sbr.rel (0) target = $region41
  $region40: #{generator_forward.1} parent=0 // pred_region
    _
  $region41: #{generator_forward.1} parent=0 // pred_fallthru
    _
  // Predicated region
  $region42: #{generator_forward.1} parent=0 // pred_check
    _
  $region43: #{generator_forward.1} parent=0 // pred_check_branch
    %40 = sbr.rel (0) target = $region45
  $region44: #{generator_forward.1} parent=0 // pred_region
    _
  $region45: #{generator_forward.1} parent=0 // pred_fallthru
    _
  // Predicated region
  $region46: #{generator_forward.1} parent=0 // pred_check
    _
  $region47: #{generator_forward.1} parent=0 // pred_check_branch
    %42 = sbr.rel (0) target = $region49
  $region48: #{generator_forward.1} parent=0 // pred_region
    _
  $region49: #{generator_forward.1} parent=0 // pred_fallthru
    _
  // Predicated region
  $region50: #{generator_forward.1} parent=0 // pred_check
    _
  $region51: #{generator_forward.1} parent=0 // pred_check_branch
    %44 = sbr.rel (0) target = $region53
  $region52: #{generator_forward.1} parent=0 // pred_region
    _
  $region53: #{generator_forward.1} parent=0 // pred_fallthru
    _
  // Predicated region
  $region54: #{generator_forward.1} parent=0 // pred_check
    _
  $region55: #{generator_forward.1} parent=0 // pred_check_branch
    %46 = sbr.rel (0) target = $region57
  $region56: #{generator_forward.1} parent=0 // pred_region
    _
  $region57: #{generator_forward.1} parent=0 // pred_fallthru
    _
  %v47 = vld [vmem:[%s0] sm:$0xf]
  %v48 = vld [vmem:[%s1] sm:$0xf]
  %v49 = vld [vmem:[%s1 + $0x4] sm:$0xf]
  %v50 = vld [vmem:[%s1 + $0x8] sm:$0xf]
  %v51 = vld [vmem:[%s1 + $0xc] sm:$0xf]
  %v52 = vld [vmem:[%s1 + $0x10] sm:$0xf]
  %v53 = vld [vmem:[%s1 + $0x14] sm:$0xf]
  %v54 = vld [vmem:[%s1 + $0x18] sm:$0xf]
  %v55 = vld [vmem:[%s1 + $0x1c] sm:$0xf]
  %v56 = vld [vmem:[%s1 + $0x20] sm:$0xf]
  %v57 = vld [vmem:[%s1 + $0x24] sm:$0xf]
  %v58 = vld [vmem:[%s1 + $0x28] sm:$0xf]
  %v59 = vld [vmem:[%s1 + $0x2c] sm:$0xf]
  %v60 = vld [vmem:[%s1 + $0x30] sm:$0xf]
  %v61 = vld [vmem:[%s1 + $0x34] sm:$0xf]
  %v62 = vld [vmem:[%s1 + $0x38] sm:$0xf]
  %v63 = vld [vmem:[%s1 + $0x3c] sm:$0xf]
  %v64 = vld [vmem:[%s2] sm:$0x1]
  %v66 = vperm.slane %v64, 0
  %v84 = vunpack.c.l.b16 %v48
  %v85 = vunpack.c.l.b16 %v49
  %v86 = vunpack.c.l.b16 %v50
  %v87 = vunpack.c.l.b16 %v51
  %v88 = vunpack.c.l.b16 %v52
  %v89 = vunpack.c.l.b16 %v53
  %v90 = vunpack.c.l.b16 %v54
  %v91 = vunpack.c.l.b16 %v55
  %v92 = vunpack.c.l.b16 %v56
  %v93 = vunpack.c.l.b16 %v57
  %v94 = vunpack.c.l.b16 %v58
  %v95 = vunpack.c.l.b16 %v59
  %v96 = vunpack.c.l.b16 %v60
  %v97 = vunpack.c.l.b16 %v61
  %v98 = vunpack.c.l.b16 %v62
  %v99 = vunpack.c.l.b16 %v63
  %v100 = vpack.c.b16 %v85, %v84
  %v101 = vpack.c.b16 %v87, %v86
  %v102 = vpack.c.b16 %v89, %v88
  %v103 = vpack.c.b16 %v91, %v90
  %v104 = vpack.c.b16 %v93, %v92
  %v105 = vpack.c.b16 %v95, %v94
  %v106 = vpack.c.b16 %v97, %v96
  %v107 = vpack.c.b16 %v99, %v98
  %116 = vmatpush.bf16.msra.mxu0 %v107
  %117 = vmatpush.bf16.msra.mxu0 %v106
  %118 = vmatpush.bf16.msra.mxu0 %v105
  %119 = vmatpush.bf16.msra.mxu0 %v104
  %120 = vmatpush.bf16.msra.mxu0 %v103
  %121 = vmatpush.bf16.msra.mxu0 %v102
  %122 = vmatpush.bf16.msra.mxu0 %v101
  %123 = vmatpush.bf16.msra.mxu0 %v100
  %124 = vmatmul.bf16.gmra.mxu0 %v47
  %v125 = vpop.f32.mrf.mxu0
  %v126 = vadd.f32 %v66, %v125
  %v127 = vpop.f32.mrf.mxu0
  %128 = vdwg.mxu0
  %vm129 = vcmp.gt.f32.partialorder %v126, 0.0
  %v130 = vmul.f32 %v126, 0.2
  %v131 = vsel %vm129, %v126, %v130
  %v132 = vpack.c.bf16 %v131, %v131
  %v133 = vld [vmem:[%s3] sm:$0xff]
  %v134 = vld [vmem:[%s3 + $0x8] sm:$0xff]
  %v135 = vld [vmem:[%s3 + $0x10] sm:$0xff]
  %v136 = vld [vmem:[%s3 + $0x18] sm:$0xff]
  %v137 = vld [vmem:[%s3 + $0x20] sm:$0xff]
  %v138 = vld [vmem:[%s3 + $0x28] sm:$0xff]
  %v139 = vld [vmem:[%s3 + $0x30] sm:$0xff]
  %v140 = vld [vmem:[%s3 + $0x38] sm:$0xff]
  %v141 = vld [vmem:[%s3 + $0x40] sm:$0xff]
  %v142 = vld [vmem:[%s3 + $0x48] sm:$0xff]
  %v143 = vld [vmem:[%s3 + $0x50] sm:$0xff]
  %v144 = vld [vmem:[%s3 + $0x58] sm:$0xff]
  %v145 = vld [vmem:[%s3 + $0x60] sm:$0xff]
  %v146 = vld [vmem:[%s3 + $0x68] sm:$0xff]
  %v147 = vld [vmem:[%s3 + $0x70] sm:$0xff]
  %v148 = vld [vmem:[%s3 + $0x78] sm:$0xff]
  %v165 = vunpack.c.l.b16 %v133
  %v166 = vunpack.c.h.b16 %v133
  %v167 = vunpack.c.l.b16 %v134
  %v168 = vunpack.c.h.b16 %v134
  %v169 = vunpack.c.l.b16 %v135
  %v170 = vunpack.c.h.b16 %v135
  %v171 = vunpack.c.l.b16 %v136
  %v172 = vunpack.c.h.b16 %v136
  %v173 = vunpack.c.l.b16 %v137
  %v174 = vunpack.c.h.b16 %v137
  %v175 = vunpack.c.l.b16 %v138
  %v176 = vunpack.c.h.b16 %v138
  %v177 = vunpack.c.l.b16 %v139
  %v178 = vunpack.c.h.b16 %v139
  %v179 = vunpack.c.l.b16 %v140
  %v180 = vunpack.c.h.b16 %v140
  %v181 = vunpack.c.l.b16 %v141
  %v182 = vunpack.c.h.b16 %v141
  %v183 = vunpack.c.l.b16 %v142
  %v184 = vunpack.c.h.b16 %v142
  %v185 = vunpack.c.l.b16 %v143
  %v186 = vunpack.c.h.b16 %v143
  %v187 = vunpack.c.l.b16 %v144
  %v188 = vunpack.c.h.b16 %v144
  %v189 = vunpack.c.l.b16 %v145
  %v190 = vunpack.c.h.b16 %v145
  %v191 = vunpack.c.l.b16 %v146
  %v192 = vunpack.c.h.b16 %v146
  %v193 = vunpack.c.l.b16 %v147
  %v194 = vunpack.c.h.b16 %v147
  %v195 = vunpack.c.l.b16 %v148
  %v196 = vunpack.c.h.b16 %v148
  %v197 = vpack.c.b16 %v167, %v165
  %v198 = vpack.c.b16 %v168, %v166
  %v199 = vpack.c.b16 %v171, %v169
  %v200 = vpack.c.b16 %v172, %v170
  %v201 = vpack.c.b16 %v175, %v173
  %v202 = vpack.c.b16 %v176, %v174
  %v203 = vpack.c.b16 %v179, %v177
  %v204 = vpack.c.b16 %v180, %v178
  %v205 = vpack.c.b16 %v183, %v181
  %v206 = vpack.c.b16 %v184, %v182
  %v207 = vpack.c.b16 %v187, %v185
  %v208 = vpack.c.b16 %v188, %v186
  %v209 = vpack.c.b16 %v191, %v189
  %v210 = vpack.c.b16 %v192, %v190
  %v211 = vpack.c.b16 %v195, %v193
  %v212 = vpack.c.b16 %v196, %v194
  %229 = vmatpush.bf16.msra.mxu0 %v211
  %230 = vmatpush.bf16.msra.mxu0 %v209
  %231 = vmatpush.bf16.msra.mxu0 %v207
  %232 = vmatpush.bf16.msra.mxu0 %v205
  %233 = vmatpush.bf16.msra.mxu0 %v203
  %234 = vmatpush.bf16.msra.mxu0 %v201
  %235 = vmatpush.bf16.msra.mxu0 %v199
  %236 = vmatpush.bf16.msra.mxu0 %v197
  %237 = vmatmul.bf16.gmra.mxu0 %v132
  %v238 = vpop.f32.mrf.mxu0
  %v239 = vadd.f32 0.0, %v238
  %v240 = vpop.f32.mrf.mxu0
  %241 = vdwg.mxu0
  %242 = vmatpush.bf16.msra.mxu0 %v212
  %243 = vmatpush.bf16.msra.mxu0 %v210
  %244 = vmatpush.bf16.msra.mxu0 %v208
  %245 = vmatpush.bf16.msra.mxu0 %v206
  %246 = vmatpush.bf16.msra.mxu0 %v204
  %247 = vmatpush.bf16.msra.mxu0 %v202
  %248 = vmatpush.bf16.msra.mxu0 %v200
  %249 = vmatpush.bf16.msra.mxu0 %v198
  %250 = vmatmul.bf16.gmra.mxu0 %v132
  %v251 = vpop.f32.mrf.mxu0
  %v252 = vadd.f32 0.0, %v251
  %v253 = vpop.f32.mrf.mxu0
  %254 = vdwg.mxu0
  %v255 = vld [vmem:[%s4] sm:$0x3]
  %v256 = vld [vmem:[%s5] sm:$0x3]
  %v257 = vrot.slane %v239, 4
  %v258 = vadd.f32 %v239, %v257
  %v259 = vrot.slane %v258, 2
  %v260 = vadd.f32 %v258, %v259
  %v261 = vrot.slane %v260, 1
  %v262 = vadd.f32 %v260, %v261
  %v263 = vrot.slane %v252, 4
  %v264 = vadd.f32 %v252, %v263
  %v265 = vrot.slane %v264, 2
  %v266 = vadd.f32 %v264, %v265
  %v267 = vrot.slane %v266, 1
  %v268 = vadd.f32 %v266, %v267
  %v269 = vrcp.pop 8.0
  %v270 = vmul.f32 8.0, %v269
  %v271 = vsub.f32 1.0, %v270
  %v272 = vmul.f32 %v269, %v271
  %v273 = vadd.f32 %v269, %v272
  %vm274 = vweird.f32 %v269
  %v275 = vsel %vm274, %v269, %v273
  %v276 = vmul.f32 %v262, %v275
  %v277 = vmul.f32 %v268, %v275
  %v278 = vsub.f32 %v239, %v276
  %v279 = vsub.f32 %v252, %v277
  %v280 = vmul.f32 %v278, %v278
  %v281 = vmul.f32 %v279, %v279
  %v282 = vrot.slane %v280, 4
  %v283 = vadd.f32 %v280, %v282
  %v284 = vrot.slane %v283, 2
  %v285 = vadd.f32 %v283, %v284
  %v286 = vrot.slane %v285, 1
  %v287 = vadd.f32 %v285, %v286
  %v288 = vrot.slane %v281, 4
  %v289 = vadd.f32 %v281, %v288
  %v290 = vrot.slane %v289, 2
  %v291 = vadd.f32 %v289, %v290
  %v292 = vrot.slane %v291, 1
  %v293 = vadd.f32 %v291, %v292
  %v294 = vmul.f32 %v287, %v275
  %v295 = vmul.f32 %v293, %v275
  %v296 = vadd.f32 %v294, 1e-05
  %v297 = vadd.f32 %v295, 1e-05
  %v298 = vrsqrt.pop %v296
  %v299 = vmul.f32 %v298, %v296
  %v300 = vmul.f32 %v299, %v298
  %v301 = vmul.f32 0.5, %v300
  %v302 = vsub.f32 1.5, %v301
  %v303 = vmul.f32 %v298, %v302
  %vm304 = vweird.f32 %v296
  %vm305 = vweird.f32 %v298
  %vm306 = vmor %vm304, %vm305
  %v307 = vsel %vm306, %v298, %v303
  %v308 = vrsqrt.pop %v297
  %v309 = vmul.f32 %v308, %v297
  %v310 = vmul.f32 %v309, %v308
  %v311 = vmul.f32 0.5, %v310
  %v312 = vsub.f32 1.5, %v311
  %v313 = vmul.f32 %v308, %v312
  %vm314 = vweird.f32 %v297
  %vm315 = vweird.f32 %v308
  %vm316 = vmor %vm314, %vm315
  %v317 = vsel %vm316, %v308, %v313
  %v319 = vperm.slane %v255, 0
  %v320 = vperm.slane %v255, 1
  %v323 = vmul.f32 %v307, %v319
  %v324 = vmul.f32 %v317, %v320
  %v325 = vperm.slane %v323, 0
  %v326 = vperm.slane %v324, 0
  %v327 = vmul.f32 %v278, %v325
  %v328 = vmul.f32 %v279, %v326
  %v330 = vperm.slane %v256, 0
  %v331 = vperm.slane %v256, 1
  %v334 = vadd.f32 %v327, %v330
  %v335 = vadd.f32 %v328, %v331
  %vm336 = vcmp.gt.f32.partialorder %v334, 0.0
  %vm337 = vcmp.gt.f32.partialorder %v335, 0.0
  %v338 = vmul.f32 %v334, 0.2
  %v339 = vmul.f32 %v335, 0.2
  %v340 = vsel %vm336, %v334, %v338
  %v341 = vsel %vm337, %v335, %v339
  %v342 = vpack.c.bf16 %v340, %v340
  %v343 = vpack.c.bf16 %v341, %v341
  %v344 = vld [vmem:[%s6] sm:$0xff]
  %v345 = vld [vmem:[%s6 + $0x8] sm:$0xff]
  %v346 = vld [vmem:[%s6 + $0x10] sm:$0xff]
  %v347 = vld [vmem:[%s6 + $0x18] sm:$0xff]
  %v348 = vld [vmem:[%s6 + $0x20] sm:$0xff]
  %v349 = vld [vmem:[%s6 + $0x28] sm:$0xff]
  %v350 = vld [vmem:[%s6 + $0x30] sm:$0xff]
  %v351 = vld [vmem:[%s6 + $0x38] sm:$0xff]
  %v352 = vld [vmem:[%s6 + $0x40] sm:$0xff]
  %v353 = vld [vmem:[%s6 + $0x48] sm:$0xff]
  %v354 = vld [vmem:[%s6 + $0x50] sm:$0xff]
  %v355 = vld [vmem:[%s6 + $0x58] sm:$0xff]
  %v356 = vld [vmem:[%s6 + $0x60] sm:$0xff]
  %v357 = vld [vmem:[%s6 + $0x68] sm:$0xff]
  %v358 = vld [vmem:[%s6 + $0x70] sm:$0xff]
  %v359 = vld [vmem:[%s6 + $0x78] sm:$0xff]
  %v360 = vld [vmem:[%s6 + $0x80] sm:$0xff]
  %v361 = vld [vmem:[%s6 + $0x88] sm:$0xff]
  %v362 = vld [vmem:[%s6 + $0x90] sm:$0xff]
  %v363 = vld [vmem:[%s6 + $0x98] sm:$0xff]
  %v364 = vld [vmem:[%s6 + $0xa0] sm:$0xff]
  %v365 = vld [vmem:[%s6 + $0xa8] sm:$0xff]
  %v366 = vld [vmem:[%s6 + $0xb0] sm:$0xff]
  %v367 = vld [vmem:[%s6 + $0xb8] sm:$0xff]
  %v368 = vld [vmem:[%s6 + $0xc0] sm:$0xff]
  %v369 = vld [vmem:[%s6 + $0xc8] sm:$0xff]
  %v370 = vld [vmem:[%s6 + $0xd0] sm:$0xff]
  %v371 = vld [vmem:[%s6 + $0xd8] sm:$0xff]
  %v372 = vld [vmem:[%s6 + $0xe0] sm:$0xff]
  %v373 = vld [vmem:[%s6 + $0xe8] sm:$0xff]
  %v374 = vld [vmem:[%s6 + $0xf0] sm:$0xff]
  %v375 = vld [vmem:[%s6 + $0xf8] sm:$0xff]
  %v376 = vld [vmem:[%s6 + $0x100] sm:$0xff]
  %v377 = vld [vmem:[%s6 + $0x108] sm:$0xff]
  %v378 = vld [vmem:[%s6 + $0x110] sm:$0xff]
  %v379 = vld [vmem:[%s6 + $0x118] sm:$0xff]
  %v380 = vld [vmem:[%s6 + $0x120] sm:$0xff]
  %v381 = vld [vmem:[%s6 + $0x128] sm:$0xff]
  %v382 = vld [vmem:[%s6 + $0x130] sm:$0xff]
  %v383 = vld [vmem:[%s6 + $0x138] sm:$0xff]
  %v384 = vld [vmem:[%s6 + $0x140] sm:$0xff]
  %v385 = vld [vmem:[%s6 + $0x148] sm:$0xff]
  %v386 = vld [vmem:[%s6 + $0x150] sm:$0xff]
  %v387 = vld [vmem:[%s6 + $0x158] sm:$0xff]
  %v388 = vld [vmem:[%s6 + $0x160] sm:$0xff]
  %v389 = vld [vmem:[%s6 + $0x168] sm:$0xff]
  %v390 = vld [vmem:[%s6 + $0x170] sm:$0xff]
  %v391 = vld [vmem:[%s6 + $0x178] sm:$0xff]
  %v392 = vld [vmem:[%s6 + $0x180] sm:$0xff]
  %v393 = vld [vmem:[%s6 + $0x188] sm:$0xff]
  %v394 = vld [vmem:[%s6 + $0x190] sm:$0xff]
  %v395 = vld [vmem:[%s6 + $0x198] sm:$0xff]
  %v396 = vld [vmem:[%s6 + $0x1a0] sm:$0xff]
  %v397 = vld [vmem:[%s6 + $0x1a8] sm:$0xff]
  %v398 = vld [vmem:[%s6 + $0x1b0] sm:$0xff]
  %v399 = vld [vmem:[%s6 + $0x1b8] sm:$0xff]
  %v400 = vld [vmem:[%s6 + $0x1c0] sm:$0xff]
  %v401 = vld [vmem:[%s6 + $0x1c8] sm:$0xff]
  %v402 = vld [vmem:[%s6 + $0x1d0] sm:$0xff]
  %v403 = vld [vmem:[%s6 + $0x1d8] sm:$0xff]
  %v404 = vld [vmem:[%s6 + $0x1e0] sm:$0xff]
  %v405 = vld [vmem:[%s6 + $0x1e8] sm:$0xff]
  %v406 = vld [vmem:[%s6 + $0x1f0] sm:$0xff]
  %v407 = vld [vmem:[%s6 + $0x1f8] sm:$0xff]
  %v472 = vunpack.c.l.b16 %v344
  %v473 = vunpack.c.h.b16 %v344
  %v474 = vunpack.c.l.b16 %v345
  %v475 = vunpack.c.h.b16 %v345
  %v476 = vunpack.c.l.b16 %v346
  %v477 = vunpack.c.h.b16 %v346
  %v478 = vunpack.c.l.b16 %v347
  %v479 = vunpack.c.h.b16 %v347
  %v480 = vunpack.c.l.b16 %v348
  %v481 = vunpack.c.h.b16 %v348
  %v482 = vunpack.c.l.b16 %v349
  %v483 = vunpack.c.h.b16 %v349
  %v484 = vunpack.c.l.b16 %v350
  %v485 = vunpack.c.h.b16 %v350
  %v486 = vunpack.c.l.b16 %v351
  %v487 = vunpack.c.h.b16 %v351
  %v488 = vunpack.c.l.b16 %v352
  %v489 = vunpack.c.h.b16 %v352
  %v490 = vunpack.c.l.b16 %v353
  %v491 = vunpack.c.h.b16 %v353
  %v492 = vunpack.c.l.b16 %v354
  %v493 = vunpack.c.h.b16 %v354
  %v494 = vunpack.c.l.b16 %v355
  %v495 = vunpack.c.h.b16 %v355
  %v496 = vunpack.c.l.b16 %v356
  %v497 = vunpack.c.h.b16 %v356
  %v498 = vunpack.c.l.b16 %v357
  %v499 = vunpack.c.h.b16 %v357
  %v500 = vunpack.c.l.b16 %v358
  %v501 = vunpack.c.h.b16 %v358
  %v502 = vunpack.c.l.b16 %v359
  %v503 = vunpack.c.h.b16 %v359
  %v504 = vunpack.c.l.b16 %v360
  %v505 = vunpack.c.h.b16 %v360
  %v506 = vunpack.c.l.b16 %v361
  %v507 = vunpack.c.h.b16 %v361
  %v508 = vunpack.c.l.b16 %v362
  %v509 = vunpack.c.h.b16 %v362
  %v510 = vunpack.c.l.b16 %v363
  %v511 = vunpack.c.h.b16 %v363
  %v512 = vunpack.c.l.b16 %v364
  %v513 = vunpack.c.h.b16 %v364
  %v514 = vunpack.c.l.b16 %v365
  %v515 = vunpack.c.h.b16 %v365
  %v516 = vunpack.c.l.b16 %v366
  %v517 = vunpack.c.h.b16 %v366
  %v518 = vunpack.c.l.b16 %v367
  %v519 = vunpack.c.h.b16 %v367
  %v520 = vunpack.c.l.b16 %v368
  %v521 = vunpack.c.h.b16 %v368
  %v522 = vunpack.c.l.b16 %v369
  %v523 = vunpack.c.h.b16 %v369
  %v524 = vunpack.c.l.b16 %v370
  %v525 = vunpack.c.h.b16 %v370
  %v526 = vunpack.c.l.b16 %v371
  %v527 = vunpack.c.h.b16 %v371
  %v528 = vunpack.c.l.b16 %v372
  %v529 = vunpack.c.h.b16 %v372
  %v530 = vunpack.c.l.b16 %v373
  %v531 = vunpack.c.h.b16 %v373
  %v532 = vunpack.c.l.b16 %v374
  %v533 = vunpack.c.h.b16 %v374
  %v534 = vunpack.c.l.b16 %v375
  %v535 = vunpack.c.h.b16 %v375
  %v536 = vunpack.c.l.b16 %v376
  %v537 = vunpack.c.h.b16 %v376
  %v538 = vunpack.c.l.b16 %v377
  %v539 = vunpack.c.h.b16 %v377
  %v540 = vunpack.c.l.b16 %v378
  %v541 = vunpack.c.h.b16 %v378
  %v542 = vunpack.c.l.b16 %v379
  %v543 = vunpack.c.h.b16 %v379
  %v544 = vunpack.c.l.b16 %v380
  %v545 = vunpack.c.h.b16 %v380
  %v546 = vunpack.c.l.b16 %v381
  %v547 = vunpack.c.h.b16 %v381
  %v548 = vunpack.c.l.b16 %v382
  %v549 = vunpack.c.h.b16 %v382
  %v550 = vunpack.c.l.b16 %v383
  %v551 = vunpack.c.h.b16 %v383
  %v552 = vunpack.c.l.b16 %v384
  %v553 = vunpack.c.h.b16 %v384
  %v554 = vunpack.c.l.b16 %v385
  %v555 = vunpack.c.h.b16 %v385
  %v556 = vunpack.c.l.b16 %v386
  %v557 = vunpack.c.h.b16 %v386
  %v558 = vunpack.c.l.b16 %v387
  %v559 = vunpack.c.h.b16 %v387
  %v560 = vunpack.c.l.b16 %v388
  %v561 = vunpack.c.h.b16 %v388
  %v562 = vunpack.c.l.b16 %v389
  %v563 = vunpack.c.h.b16 %v389
  %v564 = vunpack.c.l.b16 %v390
  %v565 = vunpack.c.h.b16 %v390
  %v566 = vunpack.c.l.b16 %v391
  %v567 = vunpack.c.h.b16 %v391
  %v568 = vunpack.c.l.b16 %v392
  %v569 = vunpack.c.h.b16 %v392
  %v570 = vunpack.c.l.b16 %v393
  %v571 = vunpack.c.h.b16 %v393
  %v572 = vunpack.c.l.b16 %v394
  %v573 = vunpack.c.h.b16 %v394
  %v574 = vunpack.c.l.b16 %v395
  %v575 = vunpack.c.h.b16 %v395
  %v576 = vunpack.c.l.b16 %v396
  %v577 = vunpack.c.h.b16 %v396
  %v578 = vunpack.c.l.b16 %v397
  %v579 = vunpack.c.h.b16 %v397
  %v580 = vunpack.c.l.b16 %v398
  %v581 = vunpack.c.h.b16 %v398
  %v582 = vunpack.c.l.b16 %v399
  %v583 = vunpack.c.h.b16 %v399
  %v584 = vunpack.c.l.b16 %v400
  %v585 = vunpack.c.h.b16 %v400
  %v586 = vunpack.c.l.b16 %v401
  %v587 = vunpack.c.h.b16 %v401
  %v588 = vunpack.c.l.b16 %v402
  %v589 = vunpack.c.h.b16 %v402
  %v590 = vunpack.c.l.b16 %v403
  %v591 = vunpack.c.h.b16 %v403
  %v592 = vunpack.c.l.b16 %v404
  %v593 = vunpack.c.h.b16 %v404
  %v594 = vunpack.c.l.b16 %v405
  %v595 = vunpack.c.h.b16 %v405
  %v596 = vunpack.c.l.b16 %v406
  %v597 = vunpack.c.h.b16 %v406
  %v598 = vunpack.c.l.b16 %v407
  %v599 = vunpack.c.h.b16 %v407
  %v600 = vpack.c.b16 %v476, %v472
  %v601 = vpack.c.b16 %v477, %v473
  %v602 = vpack.c.b16 %v478, %v474
  %v603 = vpack.c.b16 %v479, %v475
  %v604 = vpack.c.b16 %v484, %v480
  %v605 = vpack.c.b16 %v485, %v481
  %v606 = vpack.c.b16 %v486, %v482
  %v607 = vpack.c.b16 %v487, %v483
  %v608 = vpack.c.b16 %v492, %v488
  %v609 = vpack.c.b16 %v493, %v489
  %v610 = vpack.c.b16 %v494, %v490
  %v611 = vpack.c.b16 %v495, %v491
  %v612 = vpack.c.b16 %v500, %v496
  %v613 = vpack.c.b16 %v501, %v497
  %v614 = vpack.c.b16 %v502, %v498
  %v615 = vpack.c.b16 %v503, %v499
  %v616 = vpack.c.b16 %v508, %v504
  %v617 = vpack.c.b16 %v509, %v505
  %v618 = vpack.c.b16 %v510, %v506
  %v619 = vpack.c.b16 %v511, %v507
  %v620 = vpack.c.b16 %v516, %v512
  %v621 = vpack.c.b16 %v517, %v513
  %v622 = vpack.c.b16 %v518, %v514
  %v623 = vpack.c.b16 %v519, %v515
  %v624 = vpack.c.b16 %v524, %v520
  %v625 = vpack.c.b16 %v525, %v521
  %v626 = vpack.c.b16 %v526, %v522
  %v627 = vpack.c.b16 %v527, %v523
  %v628 = vpack.c.b16 %v532, %v528
  %v629 = vpack.c.b16 %v533, %v529
  %v630 = vpack.c.b16 %v534, %v530
  %v631 = vpack.c.b16 %v535, %v531
  %v632 = vpack.c.b16 %v540, %v536
  %v633 = vpack.c.b16 %v541, %v537
  %v634 = vpack.c.b16 %v542, %v538
  %v635 = vpack.c.b16 %v543, %v539
  %v636 = vpack.c.b16 %v548, %v544
  %v637 = vpack.c.b16 %v549, %v545
  %v638 = vpack.c.b16 %v550, %v546
  %v639 = vpack.c.b16 %v551, %v547
  %v640 = vpack.c.b16 %v556, %v552
  %v641 = vpack.c.b16 %v557, %v553
  %v642 = vpack.c.b16 %v558, %v554
  %v643 = vpack.c.b16 %v559, %v555
  %v644 = vpack.c.b16 %v564, %v560
  %v645 = vpack.c.b16 %v565, %v561
  %v646 = vpack.c.b16 %v566, %v562
  %v647 = vpack.c.b16 %v567, %v563
  %v648 = vpack.c.b16 %v572, %v568
  %v649 = vpack.c.b16 %v573, %v569
  %v650 = vpack.c.b16 %v574, %v570
  %v651 = vpack.c.b16 %v575, %v571
  %v652 = vpack.c.b16 %v580, %v576
  %v653 = vpack.c.b16 %v581, %v577
  %v654 = vpack.c.b16 %v582, %v578
  %v655 = vpack.c.b16 %v583, %v579
  %v656 = vpack.c.b16 %v588, %v584
  %v657 = vpack.c.b16 %v589, %v585
  %v658 = vpack.c.b16 %v590, %v586
  %v659 = vpack.c.b16 %v591, %v587
  %v660 = vpack.c.b16 %v596, %v592
  %v661 = vpack.c.b16 %v597, %v593
  %v662 = vpack.c.b16 %v598, %v594
  %v663 = vpack.c.b16 %v599, %v595
  %728 = vmatpush.bf16.msra.mxu0 %v628
  %729 = vmatpush.bf16.msra.mxu0 %v624
  %730 = vmatpush.bf16.msra.mxu0 %v620
  %731 = vmatpush.bf16.msra.mxu0 %v616
  %732 = vmatpush.bf16.msra.mxu0 %v612
  %733 = vmatpush.bf16.msra.mxu0 %v608
  %734 = vmatpush.bf16.msra.mxu0 %v604
  %735 = vmatpush.bf16.msra.mxu0 %v600
  %736 = vmatmul.bf16.gmra.mxu0 %v342
  %v737 = vpop.f32.mrf.mxu0
  %v738 = vadd.f32 0.0, %v737
  %v739 = vpop.f32.mrf.mxu0
  %740 = vdwg.mxu0
  %741 = vmatpush.bf16.msra.mxu0 %v660
  %742 = vmatpush.bf16.msra.mxu0 %v656
  %743 = vmatpush.bf16.msra.mxu0 %v652
  %744 = vmatpush.bf16.msra.mxu0 %v648
  %745 = vmatpush.bf16.msra.mxu0 %v644
  %746 = vmatpush.bf16.msra.mxu0 %v640
  %747 = vmatpush.bf16.msra.mxu0 %v636
  %748 = vmatpush.bf16.msra.mxu0 %v632
  %749 = vmatmul.bf16.gmra.mxu0 %v343
  %v750 = vpop.f32.mrf.mxu0
  %v751 = vadd.f32 %v738, %v750
  %v752 = vpop.f32.mrf.mxu0
  %753 = vdwg.mxu0
  %754 = vmatpush.bf16.msra.mxu0 %v629
  %755 = vmatpush.bf16.msra.mxu0 %v625
  %756 = vmatpush.bf16.msra.mxu0 %v621
  %757 = vmatpush.bf16.msra.mxu0 %v617
  %758 = vmatpush.bf16.msra.mxu0 %v613
  %759 = vmatpush.bf16.msra.mxu0 %v609
  %760 = vmatpush.bf16.msra.mxu0 %v605
  %761 = vmatpush.bf16.msra.mxu0 %v601
  %762 = vmatmul.bf16.gmra.mxu0 %v342
  %v763 = vpop.f32.mrf.mxu0
  %v764 = vadd.f32 0.0, %v763
  %v765 = vpop.f32.mrf.mxu0
  %766 = vdwg.mxu0
  %767 = vmatpush.bf16.msra.mxu0 %v661
  %768 = vmatpush.bf16.msra.mxu0 %v657
  %769 = vmatpush.bf16.msra.mxu0 %v653
  %770 = vmatpush.bf16.msra.mxu0 %v649
  %771 = vmatpush.bf16.msra.mxu0 %v645
  %772 = vmatpush.bf16.msra.mxu0 %v641
  %773 = vmatpush.bf16.msra.mxu0 %v637
  %774 = vmatpush.bf16.msra.mxu0 %v633
  %775 = vmatmul.bf16.gmra.mxu0 %v343
  %v776 = vpop.f32.mrf.mxu0
  %v777 = vadd.f32 %v764, %v776
  %v778 = vpop.f32.mrf.mxu0
  %779 = vdwg.mxu0
  %780 = vmatpush.bf16.msra.mxu0 %v630
  %781 = vmatpush.bf16.msra.mxu0 %v626
  %782 = vmatpush.bf16.msra.mxu0 %v622
  %783 = vmatpush.bf16.msra.mxu0 %v618
  %784 = vmatpush.bf16.msra.mxu0 %v614
  %785 = vmatpush.bf16.msra.mxu0 %v610
  %786 = vmatpush.bf16.msra.mxu0 %v606
  %787 = vmatpush.bf16.msra.mxu0 %v602
  %788 = vmatmul.bf16.gmra.mxu0 %v342
  %v789 = vpop.f32.mrf.mxu0
  %v790 = vadd.f32 0.0, %v789
  %v791 = vpop.f32.mrf.mxu0
  %792 = vdwg.mxu0
  %793 = vmatpush.bf16.msra.mxu0 %v662
  %794 = vmatpush.bf16.msra.mxu0 %v658
  %795 = vmatpush.bf16.msra.mxu0 %v654
  %796 = vmatpush.bf16.msra.mxu0 %v650
  %797 = vmatpush.bf16.msra.mxu0 %v646
  %798 = vmatpush.bf16.msra.mxu0 %v642
  %799 = vmatpush.bf16.msra.mxu0 %v638
  %800 = vmatpush.bf16.msra.mxu0 %v634
  %801 = vmatmul.bf16.gmra.mxu0 %v343
  %v802 = vpop.f32.mrf.mxu0
  %v803 = vadd.f32 %v790, %v802
  %v804 = vpop.f32.mrf.mxu0
  %805 = vdwg.mxu0
  %806 = vmatpush.bf16.msra.mxu0 %v631
  %807 = vmatpush.bf16.msra.mxu0 %v627
  %808 = vmatpush.bf16.msra.mxu0 %v623
  %809 = vmatpush.bf16.msra.mxu0 %v619
  %810 = vmatpush.bf16.msra.mxu0 %v615
  %811 = vmatpush.bf16.msra.mxu0 %v611
  %812 = vmatpush.bf16.msra.mxu0 %v607
  %813 = vmatpush.bf16.msra.mxu0 %v603
  %814 = vmatmul.bf16.gmra.mxu0 %v342
  %v815 = vpop.f32.mrf.mxu0
  %v816 = vadd.f32 0.0, %v815
  %v817 = vpop.f32.mrf.mxu0
  %818 = vdwg.mxu0
  %819 = vmatpush.bf16.msra.mxu0 %v663
  %820 = vmatpush.bf16.msra.mxu0 %v659
  %821 = vmatpush.bf16.msra.mxu0 %v655
  %822 = vmatpush.bf16.msra.mxu0 %v651
  %823 = vmatpush.bf16.msra.mxu0 %v647
  %824 = vmatpush.bf16.msra.mxu0 %v643
  %825 = vmatpush.bf16.msra.mxu0 %v639
  %826 = vmatpush.bf16.msra.mxu0 %v635
  %827 = vmatmul.bf16.gmra.mxu0 %v343
  %v828 = vpop.f32.mrf.mxu0
  %v829 = vadd.f32 %v816, %v828
  %v830 = vpop.f32.mrf.mxu0
  %831 = vdwg.mxu0
  %v832 = vld [vmem:[%s7] sm:$0xf]
  %v833 = vld [vmem:[%s8] sm:$0xf]
  %v834 = vrot.slane %v751, 4
  %v835 = vadd.f32 %v751, %v834
  %v836 = vrot.slane %v835, 2
  %v837 = vadd.f32 %v835, %v836
  %v838 = vrot.slane %v837, 1
  %v839 = vadd.f32 %v837, %v838
  %v840 = vrot.slane %v777, 4
  %v841 = vadd.f32 %v777, %v840
  %v842 = vrot.slane %v841, 2
  %v843 = vadd.f32 %v841, %v842
  %v844 = vrot.slane %v843, 1
  %v845 = vadd.f32 %v843, %v844
  %v846 = vrot.slane %v803, 4
  %v847 = vadd.f32 %v803, %v846
  %v848 = vrot.slane %v847, 2
  %v849 = vadd.f32 %v847, %v848
  %v850 = vrot.slane %v849, 1
  %v851 = vadd.f32 %v849, %v850
  %v852 = vrot.slane %v829, 4
  %v853 = vadd.f32 %v829, %v852
  %v854 = vrot.slane %v853, 2
  %v855 = vadd.f32 %v853, %v854
  %v856 = vrot.slane %v855, 1
  %v857 = vadd.f32 %v855, %v856
  %v858 = vmul.f32 %v839, %v275
  %v859 = vmul.f32 %v845, %v275
  %v860 = vmul.f32 %v851, %v275
  %v861 = vmul.f32 %v857, %v275
  %v862 = vsub.f32 %v751, %v858
  %v863 = vsub.f32 %v777, %v859
  %v864 = vsub.f32 %v803, %v860
  %v865 = vsub.f32 %v829, %v861
  %v866 = vmul.f32 %v862, %v862
  %v867 = vmul.f32 %v863, %v863
  %v868 = vmul.f32 %v864, %v864
  %v869 = vmul.f32 %v865, %v865
  %v870 = vrot.slane %v866, 4
  %v871 = vadd.f32 %v866, %v870
  %v872 = vrot.slane %v871, 2
  %v873 = vadd.f32 %v871, %v872
  %v874 = vrot.slane %v873, 1
  %v875 = vadd.f32 %v873, %v874
  %v876 = vrot.slane %v867, 4
  %v877 = vadd.f32 %v867, %v876
  %v878 = vrot.slane %v877, 2
  %v879 = vadd.f32 %v877, %v878
  %v880 = vrot.slane %v879, 1
  %v881 = vadd.f32 %v879, %v880
  %v882 = vrot.slane %v868, 4
  %v883 = vadd.f32 %v868, %v882
  %v884 = vrot.slane %v883, 2
  %v885 = vadd.f32 %v883, %v884
  %v886 = vrot.slane %v885, 1
  %v887 = vadd.f32 %v885, %v886
  %v888 = vrot.slane %v869, 4
  %v889 = vadd.f32 %v869, %v888
  %v890 = vrot.slane %v889, 2
  %v891 = vadd.f32 %v889, %v890
  %v892 = vrot.slane %v891, 1
  %v893 = vadd.f32 %v891, %v892
  %v894 = vmul.f32 %v875, %v275
  %v895 = vmul.f32 %v881, %v275
  %v896 = vmul.f32 %v887, %v275
  %v897 = vmul.f32 %v893, %v275
  %v898 = vadd.f32 %v894, 1e-05
  %v899 = vadd.f32 %v895, 1e-05
  %v900 = vadd.f32 %v896, 1e-05
  %v901 = vadd.f32 %v897, 1e-05
  %v902 = vrsqrt.pop %v898
  %v903 = vmul.f32 %v902, %v898
  %v904 = vmul.f32 %v903, %v902
  %v905 = vmul.f32 0.5, %v904
  %v906 = vsub.f32 1.5, %v905
  %v907 = vmul.f32 %v902, %v906
  %vm908 = vweird.f32 %v898
  %vm909 = vweird.f32 %v902
  %vm910 = vmor %vm908, %vm909
  %v911 = vsel %vm910, %v902, %v907
  %v912 = vrsqrt.pop %v899
  %v913 = vmul.f32 %v912, %v899
  %v914 = vmul.f32 %v913, %v912
  %v915 = vmul.f32 0.5, %v914
  %v916 = vsub.f32 1.5, %v915
  %v917 = vmul.f32 %v912, %v916
  %vm918 = vweird.f32 %v899
  %vm919 = vweird.f32 %v912
  %vm920 = vmor %vm918, %vm919
  %v921 = vsel %vm920, %v912, %v917
  %v922 = vrsqrt.pop %v900
  %v923 = vmul.f32 %v922, %v900
  %v924 = vmul.f32 %v923, %v922
  %v925 = vmul.f32 0.5, %v924
  %v926 = vsub.f32 1.5, %v925
  %v927 = vmul.f32 %v922, %v926
  %vm928 = vweird.f32 %v900
  %vm929 = vweird.f32 %v922
  %vm930 = vmor %vm928, %vm929
  %v931 = vsel %vm930, %v922, %v927
  %v932 = vrsqrt.pop %v901
  %v933 = vmul.f32 %v932, %v901
  %v934 = vmul.f32 %v933, %v932
  %v935 = vmul.f32 0.5, %v934
  %v936 = vsub.f32 1.5, %v935
  %v937 = vmul.f32 %v932, %v936
  %vm938 = vweird.f32 %v901
  %vm939 = vweird.f32 %v932
  %vm940 = vmor %vm938, %vm939
  %v941 = vsel %vm940, %v932, %v937
  %v943 = vperm.slane %v832, 0
  %v944 = vperm.slane %v832, 1
  %v945 = vperm.slane %v832, 2
  %v946 = vperm.slane %v832, 3
  %v951 = vmul.f32 %v911, %v943
  %v952 = vmul.f32 %v921, %v944
  %v953 = vmul.f32 %v931, %v945
  %v954 = vmul.f32 %v941, %v946
  %v955 = vperm.slane %v951, 0
  %v956 = vperm.slane %v952, 0
  %v957 = vperm.slane %v953, 0
  %v958 = vperm.slane %v954, 0
  %v959 = vmul.f32 %v862, %v955
  %v960 = vmul.f32 %v863, %v956
  %v961 = vmul.f32 %v864, %v957
  %v962 = vmul.f32 %v865, %v958
  %v964 = vperm.slane %v833, 0
  %v965 = vperm.slane %v833, 1
  %v966 = vperm.slane %v833, 2
  %v967 = vperm.slane %v833, 3
  %v972 = vadd.f32 %v959, %v964
  %v973 = vadd.f32 %v960, %v965
  %v974 = vadd.f32 %v961, %v966
  %v975 = vadd.f32 %v962, %v967
  %vm976 = vcmp.gt.f32.partialorder %v972, 0.0
  %vm977 = vcmp.gt.f32.partialorder %v973, 0.0
  %vm978 = vcmp.gt.f32.partialorder %v974, 0.0
  %vm979 = vcmp.gt.f32.partialorder %v975, 0.0
  %v980 = vmul.f32 %v972, 0.2
  %v981 = vmul.f32 %v973, 0.2
  %v982 = vmul.f32 %v974, 0.2
  %v983 = vmul.f32 %v975, 0.2
  %v984 = vsel %vm976, %v972, %v980
  %v985 = vsel %vm977, %v973, %v981
  %v986 = vsel %vm978, %v974, %v982
  %v987 = vsel %vm979, %v975, %v983
  %v988 = vpack.c.bf16 %v984, %v984
  %v989 = vpack.c.bf16 %v985, %v985
  %v990 = vpack.c.bf16 %v986, %v986
  %v991 = vpack.c.bf16 %v987, %v987
  %v992 = vld [vmem:[%s9] sm:$0xff]
  %v993 = vld [vmem:[%s9 + $0x8] sm:$0xff]
  %v994 = vld [vmem:[%s9 + $0x10] sm:$0xff]
  %v995 = vld [vmem:[%s9 + $0x18] sm:$0xff]
  %v996 = vld [vmem:[%s9 + $0x20] sm:$0xff]
  %v997 = vld [vmem:[%s9 + $0x28] sm:$0xff]
  %v998 = vld [vmem:[%s9 + $0x30] sm:$0xff]
  %v999 = vld [vmem:[%s9 + $0x38] sm:$0xff]
  %v1000 = vld [vmem:[%s9 + $0x40] sm:$0xff]
  %v1001 = vld [vmem:[%s9 + $0x48] sm:$0xff]
  %v1002 = vld [vmem:[%s9 + $0x50] sm:$0xff]
  %v1003 = vld [vmem:[%s9 + $0x58] sm:$0xff]
  %v1004 = vld [vmem:[%s9 + $0x60] sm:$0xff]
  %v1005 = vld [vmem:[%s9 + $0x68] sm:$0xff]
  %v1006 = vld [vmem:[%s9 + $0x70] sm:$0xff]
  %v1007 = vld [vmem:[%s9 + $0x78] sm:$0xff]
  %v1008 = vld [vmem:[%s9 + $0x80] sm:$0xff]
  %v1009 = vld [vmem:[%s9 + $0x88] sm:$0xff]
  %v1010 = vld [vmem:[%s9 + $0x90] sm:$0xff]
  %v1011 = vld [vmem:[%s9 + $0x98] sm:$0xff]
  %v1012 = vld [vmem:[%s9 + $0xa0] sm:$0xff]
  %v1013 = vld [vmem:[%s9 + $0xa8] sm:$0xff]
  %v1014 = vld [vmem:[%s9 + $0xb0] sm:$0xff]
  %v1015 = vld [vmem:[%s9 + $0xb8] sm:$0xff]
  %v1016 = vld [vmem:[%s9 + $0xc0] sm:$0xff]
  %v1017 = vld [vmem:[%s9 + $0xc8] sm:$0xff]
  %v1018 = vld [vmem:[%s9 + $0xd0] sm:$0xff]
  %v1019 = vld [vmem:[%s9 + $0xd8] sm:$0xff]
  %v1020 = vld [vmem:[%s9 + $0xe0] sm:$0xff]
  %v1021 = vld [vmem:[%s9 + $0xe8] sm:$0xff]
  %v1022 = vld [vmem:[%s9 + $0xf0] sm:$0xff]
  %v1023 = vld [vmem:[%s9 + $0xf8] sm:$0xff]
  %v1024 = vld [vmem:[%s9 + $0x100] sm:$0xff]
  %v1025 = vld [vmem:[%s9 + $0x108] sm:$0xff]
  %v1026 = vld [vmem:[%s9 + $0x110] sm:$0xff]
  %v1027 = vld [vmem:[%s9 + $0x118] sm:$0xff]
  %v1028 = vld [vmem:[%s9 + $0x120] sm:$0xff]
  %v1029 = vld [vmem:[%s9 + $0x128] sm:$0xff]
  %v1030 = vld [vmem:[%s9 + $0x130] sm:$0xff]
  %v1031 = vld [vmem:[%s9 + $0x138] sm:$0xff]
  %v1032 = vld [vmem:[%s9 + $0x140] sm:$0xff]
  %v1033 = vld [vmem:[%s9 + $0x148] sm:$0xff]
  %v1034 = vld [vmem:[%s9 + $0x150] sm:$0xff]
  %v1035 = vld [vmem:[%s9 + $0x158] sm:$0xff]
  %v1036 = vld [vmem:[%s9 + $0x160] sm:$0xff]
  %v1037 = vld [vmem:[%s9 + $0x168] sm:$0xff]
  %v1038 = vld [vmem:[%s9 + $0x170] sm:$0xff]
  %v1039 = vld [vmem:[%s9 + $0x178] sm:$0xff]
  %v1040 = vld [vmem:[%s9 + $0x180] sm:$0xff]
  %v1041 = vld [vmem:[%s9 + $0x188] sm:$0xff]
  %v1042 = vld [vmem:[%s9 + $0x190] sm:$0xff]
  %v1043 = vld [vmem:[%s9 + $0x198] sm:$0xff]
  %v1044 = vld [vmem:[%s9 + $0x1a0] sm:$0xff]
  %v1045 = vld [vmem:[%s9 + $0x1a8] sm:$0xff]
  %v1046 = vld [vmem:[%s9 + $0x1b0] sm:$0xff]
  %v1047 = vld [vmem:[%s9 + $0x1b8] sm:$0xff]
  %v1048 = vld [vmem:[%s9 + $0x1c0] sm:$0xff]
  %v1049 = vld [vmem:[%s9 + $0x1c8] sm:$0xff]
  %v1050 = vld [vmem:[%s9 + $0x1d0] sm:$0xff]
  %v1051 = vld [vmem:[%s9 + $0x1d8] sm:$0xff]
  %v1052 = vld [vmem:[%s9 + $0x1e0] sm:$0xff]
  %v1053 = vld [vmem:[%s9 + $0x1e8] sm:$0xff]
  %v1054 = vld [vmem:[%s9 + $0x1f0] sm:$0xff]
  %v1055 = vld [vmem:[%s9 + $0x1f8] sm:$0xff]
  %v1056 = vld [vmem:[%s9 + $0x200] sm:$0xff]
  %v1057 = vld [vmem:[%s9 + $0x208] sm:$0xff]
  %v1058 = vld [vmem:[%s9 + $0x210] sm:$0xff]
  %v1059 = vld [vmem:[%s9 + $0x218] sm:$0xff]
  %v1060 = vld [vmem:[%s9 + $0x220] sm:$0xff]
  %v1061 = vld [vmem:[%s9 + $0x228] sm:$0xff]
  %v1062 = vld [vmem:[%s9 + $0x230] sm:$0xff]
  %v1063 = vld [vmem:[%s9 + $0x238] sm:$0xff]
  %v1064 = vld [vmem:[%s9 + $0x240] sm:$0xff]
  %v1065 = vld [vmem:[%s9 + $0x248] sm:$0xff]
  %v1066 = vld [vmem:[%s9 + $0x250] sm:$0xff]
  %v1067 = vld [vmem:[%s9 + $0x258] sm:$0xff]
  %v1068 = vld [vmem:[%s9 + $0x260] sm:$0xff]
  %v1069 = vld [vmem:[%s9 + $0x268] sm:$0xff]
  %v1070 = vld [vmem:[%s9 + $0x270] sm:$0xff]
  %v1071 = vld [vmem:[%s9 + $0x278] sm:$0xff]
  %v1072 = vld [vmem:[%s9 + $0x280] sm:$0xff]
  %v1073 = vld [vmem:[%s9 + $0x288] sm:$0xff]
  %v1074 = vld [vmem:[%s9 + $0x290] sm:$0xff]
  %v1075 = vld [vmem:[%s9 + $0x298] sm:$0xff]
  %v1076 = vld [vmem:[%s9 + $0x2a0] sm:$0xff]
  %v1077 = vld [vmem:[%s9 + $0x2a8] sm:$0xff]
  %v1078 = vld [vmem:[%s9 + $0x2b0] sm:$0xff]
  %v1079 = vld [vmem:[%s9 + $0x2b8] sm:$0xff]
  %v1080 = vld [vmem:[%s9 + $0x2c0] sm:$0xff]
  %v1081 = vld [vmem:[%s9 + $0x2c8] sm:$0xff]
  %v1082 = vld [vmem:[%s9 + $0x2d0] sm:$0xff]
  %v1083 = vld [vmem:[%s9 + $0x2d8] sm:$0xff]
  %v1084 = vld [vmem:[%s9 + $0x2e0] sm:$0xff]
  %v1085 = vld [vmem:[%s9 + $0x2e8] sm:$0xff]
  %v1086 = vld [vmem:[%s9 + $0x2f0] sm:$0xff]
  %v1087 = vld [vmem:[%s9 + $0x2f8] sm:$0xff]
  %v1088 = vld [vmem:[%s9 + $0x300] sm:$0xff]
  %v1089 = vld [vmem:[%s9 + $0x308] sm:$0xff]
  %v1090 = vld [vmem:[%s9 + $0x310] sm:$0xff]
  %v1091 = vld [vmem:[%s9 + $0x318] sm:$0xff]
  %v1092 = vld [vmem:[%s9 + $0x320] sm:$0xff]
  %v1093 = vld [vmem:[%s9 + $0x328] sm:$0xff]
  %v1094 = vld [vmem:[%s9 + $0x330] sm:$0xff]
  %v1095 = vld [vmem:[%s9 + $0x338] sm:$0xff]
  %v1096 = vld [vmem:[%s9 + $0x340] sm:$0xff]
  %v1097 = vld [vmem:[%s9 + $0x348] sm:$0xff]
  %v1098 = vld [vmem:[%s9 + $0x350] sm:$0xff]
  %v1099 = vld [vmem:[%s9 + $0x358] sm:$0xff]
  %v1100 = vld [vmem:[%s9 + $0x360] sm:$0xff]
  %v1101 = vld [vmem:[%s9 + $0x368] sm:$0xff]
  %v1102 = vld [vmem:[%s9 + $0x370] sm:$0xff]
  %v1103 = vld [vmem:[%s9 + $0x378] sm:$0xff]
  %v1104 = vld [vmem:[%s9 + $0x380] sm:$0xff]
  %v1105 = vld [vmem:[%s9 + $0x388] sm:$0xff]
  %v1106 = vld [vmem:[%s9 + $0x390] sm:$0xff]
  %v1107 = vld [vmem:[%s9 + $0x398] sm:$0xff]
  %v1108 = vld [vmem:[%s9 + $0x3a0] sm:$0xff]
  %v1109 = vld [vmem:[%s9 + $0x3a8] sm:$0xff]
  %v1110 = vld [vmem:[%s9 + $0x3b0] sm:$0xff]
  %v1111 = vld [vmem:[%s9 + $0x3b8] sm:$0xff]
  %v1112 = vld [vmem:[%s9 + $0x3c0] sm:$0xff]
  %v1113 = vld [vmem:[%s9 + $0x3c8] sm:$0xff]
  %v1114 = vld [vmem:[%s9 + $0x3d0] sm:$0xff]
  %v1115 = vld [vmem:[%s9 + $0x3d8] sm:$0xff]
  %v1116 = vld [vmem:[%s9 + $0x3e0] sm:$0xff]
  %v1117 = vld [vmem:[%s9 + $0x3e8] sm:$0xff]
  %v1118 = vld [vmem:[%s9 + $0x3f0] sm:$0xff]
  %v1119 = vld [vmem:[%s9 + $0x3f8] sm:$0xff]
  %v1120 = vld [vmem:[%s9 + $0x400] sm:$0xff]
  %v1121 = vld [vmem:[%s9 + $0x408] sm:$0xff]
  %v1122 = vld [vmem:[%s9 + $0x410] sm:$0xff]
  %v1123 = vld [vmem:[%s9 + $0x418] sm:$0xff]
  %v1124 = vld [vmem:[%s9 + $0x420] sm:$0xff]
  %v1125 = vld [vmem:[%s9 + $0x428] sm:$0xff]
  %v1126 = vld [vmem:[%s9 + $0x430] sm:$0xff]
  %v1127 = vld [vmem:[%s9 + $0x438] sm:$0xff]
  %v1128 = vld [vmem:[%s9 + $0x440] sm:$0xff]
  %v1129 = vld [vmem:[%s9 + $0x448] sm:$0xff]
  %v1130 = vld [vmem:[%s9 + $0x450] sm:$0xff]
  %v1131 = vld [vmem:[%s9 + $0x458] sm:$0xff]
  %v1132 = vld [vmem:[%s9 + $0x460] sm:$0xff]
  %v1133 = vld [vmem:[%s9 + $0x468] sm:$0xff]
  %v1134 = vld [vmem:[%s9 + $0x470] sm:$0xff]
  %v1135 = vld [vmem:[%s9 + $0x478] sm:$0xff]
  %v1136 = vld [vmem:[%s9 + $0x480] sm:$0xff]
  %v1137 = vld [vmem:[%s9 + $0x488] sm:$0xff]
  %v1138 = vld [vmem:[%s9 + $0x490] sm:$0xff]
  %v1139 = vld [vmem:[%s9 + $0x498] sm:$0xff]
  %v1140 = vld [vmem:[%s9 + $0x4a0] sm:$0xff]
  %v1141 = vld [vmem:[%s9 + $0x4a8] sm:$0xff]
  %v1142 = vld [vmem:[%s9 + $0x4b0] sm:$0xff]
  %v1143 = vld [vmem:[%s9 + $0x4b8] sm:$0xff]
  %v1144 = vld [vmem:[%s9 + $0x4c0] sm:$0xff]
  %v1145 = vld [vmem:[%s9 + $0x4c8] sm:$0xff]
  %v1146 = vld [vmem:[%s9 + $0x4d0] sm:$0xff]
  %v1147 = vld [vmem:[%s9 + $0x4d8] sm:$0xff]
  %v1148 = vld [vmem:[%s9 + $0x4e0] sm:$0xff]
  %v1149 = vld [vmem:[%s9 + $0x4e8] sm:$0xff]
  %v1150 = vld [vmem:[%s9 + $0x4f0] sm:$0xff]
  %v1151 = vld [vmem:[%s9 + $0x4f8] sm:$0xff]
  %v1152 = vld [vmem:[%s9 + $0x500] sm:$0xff]
  %v1153 = vld [vmem:[%s9 + $0x508] sm:$0xff]
  %v1154 = vld [vmem:[%s9 + $0x510] sm:$0xff]
  %v1155 = vld [vmem:[%s9 + $0x518] sm:$0xff]
  %v1156 = vld [vmem:[%s9 + $0x520] sm:$0xff]
  %v1157 = vld [vmem:[%s9 + $0x528] sm:$0xff]
  %v1158 = vld [vmem:[%s9 + $0x530] sm:$0xff]
  %v1159 = vld [vmem:[%s9 + $0x538] sm:$0xff]
  %v1160 = vld [vmem:[%s9 + $0x540] sm:$0xff]
  %v1161 = vld [vmem:[%s9 + $0x548] sm:$0xff]
  %v1162 = vld [vmem:[%s9 + $0x550] sm:$0xff]
  %v1163 = vld [vmem:[%s9 + $0x558] sm:$0xff]
  %v1164 = vld [vmem:[%s9 + $0x560] sm:$0xff]
  %v1165 = vld [vmem:[%s9 + $0x568] sm:$0xff]
  %v1166 = vld [vmem:[%s9 + $0x570] sm:$0xff]
  %v1167 = vld [vmem:[%s9 + $0x578] sm:$0xff]
  %v1168 = vld [vmem:[%s9 + $0x580] sm:$0xff]
  %v1169 = vld [vmem:[%s9 + $0x588] sm:$0xff]
  %v1170 = vld [vmem:[%s9 + $0x590] sm:$0xff]
  %v1171 = vld [vmem:[%s9 + $0x598] sm:$0xff]
  %v1172 = vld [vmem:[%s9 + $0x5a0] sm:$0xff]
  %v1173 = vld [vmem:[%s9 + $0x5a8] sm:$0xff]
  %v1174 = vld [vmem:[%s9 + $0x5b0] sm:$0xff]
  %v1175 = vld [vmem:[%s9 + $0x5b8] sm:$0xff]
  %v1176 = vld [vmem:[%s9 + $0x5c0] sm:$0xff]
  %v1177 = vld [vmem:[%s9 + $0x5c8] sm:$0xff]
  %v1178 = vld [vmem:[%s9 + $0x5d0] sm:$0xff]
  %v1179 = vld [vmem:[%s9 + $0x5d8] sm:$0xff]
  %v1180 = vld [vmem:[%s9 + $0x5e0] sm:$0xff]
  %v1181 = vld [vmem:[%s9 + $0x5e8] sm:$0xff]
  %v1182 = vld [vmem:[%s9 + $0x5f0] sm:$0xff]
  %v1183 = vld [vmem:[%s9 + $0x5f8] sm:$0xff]
  %v1184 = vld [vmem:[%s9 + $0x600] sm:$0xff]
  %v1185 = vld [vmem:[%s9 + $0x608] sm:$0xff]
  %v1186 = vld [vmem:[%s9 + $0x610] sm:$0xff]
  %v1187 = vld [vmem:[%s9 + $0x618] sm:$0xff]
  %v1188 = vld [vmem:[%s9 + $0x620] sm:$0xff]
  %v1189 = vld [vmem:[%s9 + $0x628] sm:$0xff]
  %v1190 = vld [vmem:[%s9 + $0x630] sm:$0xff]
  %v1191 = vld [vmem:[%s9 + $0x638] sm:$0xff]
  %v1192 = vld [vmem:[%s9 + $0x640] sm:$0xff]
  %v1193 = vld [vmem:[%s9 + $0x648] sm:$0xff]
  %v1194 = vld [vmem:[%s9 + $0x650] sm:$0xff]
  %v1195 = vld [vmem:[%s9 + $0x658] sm:$0xff]
  %v1196 = vld [vmem:[%s9 + $0x660] sm:$0xff]
  %v1197 = vld [vmem:[%s9 + $0x668] sm:$0xff]
  %v1198 = vld [vmem:[%s9 + $0x670] sm:$0xff]
  %v1199 = vld [vmem:[%s9 + $0x678] sm:$0xff]
  %v1200 = vld [vmem:[%s9 + $0x680] sm:$0xff]
  %v1201 = vld [vmem:[%s9 + $0x688] sm:$0xff]
  %v1202 = vld [vmem:[%s9 + $0x690] sm:$0xff]
  %v1203 = vld [vmem:[%s9 + $0x698] sm:$0xff]
  %v1204 = vld [vmem:[%s9 + $0x6a0] sm:$0xff]
  %v1205 = vld [vmem:[%s9 + $0x6a8] sm:$0xff]
  %v1206 = vld [vmem:[%s9 + $0x6b0] sm:$0xff]
  %v1207 = vld [vmem:[%s9 + $0x6b8] sm:$0xff]
  %v1208 = vld [vmem:[%s9 + $0x6c0] sm:$0xff]
  %v1209 = vld [vmem:[%s9 + $0x6c8] sm:$0xff]
  %v1210 = vld [vmem:[%s9 + $0x6d0] sm:$0xff]
  %v1211 = vld [vmem:[%s9 + $0x6d8] sm:$0xff]
  %v1212 = vld [vmem:[%s9 + $0x6e0] sm:$0xff]
  %v1213 = vld [vmem:[%s9 + $0x6e8] sm:$0xff]
  %v1214 = vld [vmem:[%s9 + $0x6f0] sm:$0xff]
  %v1215 = vld [vmem:[%s9 + $0x6f8] sm:$0xff]
  %v1216 = vld [vmem:[%s9 + $0x700] sm:$0xff]
  %v1217 = vld [vmem:[%s9 + $0x708] sm:$0xff]
  %v1218 = vld [vmem:[%s9 + $0x710] sm:$0xff]
  %v1219 = vld [vmem:[%s9 + $0x718] sm:$0xff]
  %v1220 = vld [vmem:[%s9 + $0x720] sm:$0xff]
  %v1221 = vld [vmem:[%s9 + $0x728] sm:$0xff]
  %v1222 = vld [vmem:[%s9 + $0x730] sm:$0xff]
  %v1223 = vld [vmem:[%s9 + $0x738] sm:$0xff]
  %v1224 = vld [vmem:[%s9 + $0x740] sm:$0xff]
  %v1225 = vld [vmem:[%s9 + $0x748] sm:$0xff]
  %v1226 = vld [vmem:[%s9 + $0x750] sm:$0xff]
  %v1227 = vld [vmem:[%s9 + $0x758] sm:$0xff]
  %v1228 = vld [vmem:[%s9 + $0x760] sm:$0xff]
  %v1229 = vld [vmem:[%s9 + $0x768] sm:$0xff]
  %v1230 = vld [vmem:[%s9 + $0x770] sm:$0xff]
  %v1231 = vld [vmem:[%s9 + $0x778] sm:$0xff]
  %v1232 = vld [vmem:[%s9 + $0x780] sm:$0xff]
  %v1233 = vld [vmem:[%s9 + $0x788] sm:$0xff]
  %v1234 = vld [vmem:[%s9 + $0x790] sm:$0xff]
  %v1235 = vld [vmem:[%s9 + $0x798] sm:$0xff]
  %v1236 = vld [vmem:[%s9 + $0x7a0] sm:$0xff]
  %v1237 = vld [vmem:[%s9 + $0x7a8] sm:$0xff]
  %v1238 = vld [vmem:[%s9 + $0x7b0] sm:$0xff]
  %v1239 = vld [vmem:[%s9 + $0x7b8] sm:$0xff]
  %v1240 = vld [vmem:[%s9 + $0x7c0] sm:$0xff]
  %v1241 = vld [vmem:[%s9 + $0x7c8] sm:$0xff]
  %v1242 = vld [vmem:[%s9 + $0x7d0] sm:$0xff]
  %v1243 = vld [vmem:[%s9 + $0x7d8] sm:$0xff]
  %v1244 = vld [vmem:[%s9 + $0x7e0] sm:$0xff]
  %v1245 = vld [vmem:[%s9 + $0x7e8] sm:$0xff]
  %v1246 = vld [vmem:[%s9 + $0x7f0] sm:$0xff]
  %v1247 = vld [vmem:[%s9 + $0x7f8] sm:$0xff]
  %v1504 = vunpack.c.l.b16 %v992
  %v1505 = vunpack.c.h.b16 %v992
  %v1506 = vunpack.c.l.b16 %v993
  %v1507 = vunpack.c.h.b16 %v993
  %v1508 = vunpack.c.l.b16 %v994
  %v1509 = vunpack.c.h.b16 %v994
  %v1510 = vunpack.c.l.b16 %v995
  %v1511 = vunpack.c.h.b16 %v995
  %v1512 = vunpack.c.l.b16 %v996
  %v1513 = vunpack.c.h.b16 %v996
  %v1514 = vunpack.c.l.b16 %v997
  %v1515 = vunpack.c.h.b16 %v997
  %v1516 = vunpack.c.l.b16 %v998
  %v1517 = vunpack.c.h.b16 %v998
  %v1518 = vunpack.c.l.b16 %v999
  %v1519 = vunpack.c.h.b16 %v999
  %v1520 = vunpack.c.l.b16 %v1000
  %v1521 = vunpack.c.h.b16 %v1000
  %v1522 = vunpack.c.l.b16 %v1001
  %v1523 = vunpack.c.h.b16 %v1001
  %v1524 = vunpack.c.l.b16 %v1002
  %v1525 = vunpack.c.h.b16 %v1002
  %v1526 = vunpack.c.l.b16 %v1003
  %v1527 = vunpack.c.h.b16 %v1003
  %v1528 = vunpack.c.l.b16 %v1004
  %v1529 = vunpack.c.h.b16 %v1004
  %v1530 = vunpack.c.l.b16 %v1005
  %v1531 = vunpack.c.h.b16 %v1005
  %v1532 = vunpack.c.l.b16 %v1006
  %v1533 = vunpack.c.h.b16 %v1006
  %v1534 = vunpack.c.l.b16 %v1007
  %v1535 = vunpack.c.h.b16 %v1007
  %v1536 = vunpack.c.l.b16 %v1008
  %v1537 = vunpack.c.h.b16 %v1008
  %v1538 = vunpack.c.l.b16 %v1009
  %v1539 = vunpack.c.h.b16 %v1009
  %v1540 = vunpack.c.l.b16 %v1010
  %v1541 = vunpack.c.h.b16 %v1010
  %v1542 = vunpack.c.l.b16 %v1011
  %v1543 = vunpack.c.h.b16 %v1011
  %v1544 = vunpack.c.l.b16 %v1012
  %v1545 = vunpack.c.h.b16 %v1012
  %v1546 = vunpack.c.l.b16 %v1013
  %v1547 = vunpack.c.h.b16 %v1013
  %v1548 = vunpack.c.l.b16 %v1014
  %v1549 = vunpack.c.h.b16 %v1014
  %v1550 = vunpack.c.l.b16 %v1015
  %v1551 = vunpack.c.h.b16 %v1015
  %v1552 = vunpack.c.l.b16 %v1016
  %v1553 = vunpack.c.h.b16 %v1016
  %v1554 = vunpack.c.l.b16 %v1017
  %v1555 = vunpack.c.h.b16 %v1017
  %v1556 = vunpack.c.l.b16 %v1018
  %v1557 = vunpack.c.h.b16 %v1018
  %v1558 = vunpack.c.l.b16 %v1019
  %v1559 = vunpack.c.h.b16 %v1019
  %v1560 = vunpack.c.l.b16 %v1020
  %v1561 = vunpack.c.h.b16 %v1020
  %v1562 = vunpack.c.l.b16 %v1021
  %v1563 = vunpack.c.h.b16 %v1021
  %v1564 = vunpack.c.l.b16 %v1022
  %v1565 = vunpack.c.h.b16 %v1022
  %v1566 = vunpack.c.l.b16 %v1023
  %v1567 = vunpack.c.h.b16 %v1023
  %v1568 = vunpack.c.l.b16 %v1024
  %v1569 = vunpack.c.h.b16 %v1024
  %v1570 = vunpack.c.l.b16 %v1025
  %v1571 = vunpack.c.h.b16 %v1025
  %v1572 = vunpack.c.l.b16 %v1026
  %v1573 = vunpack.c.h.b16 %v1026
  %v1574 = vunpack.c.l.b16 %v1027
  %v1575 = vunpack.c.h.b16 %v1027
  %v1576 = vunpack.c.l.b16 %v1028
  %v1577 = vunpack.c.h.b16 %v1028
  %v1578 = vunpack.c.l.b16 %v1029
  %v1579 = vunpack.c.h.b16 %v1029
  %v1580 = vunpack.c.l.b16 %v1030
  %v1581 = vunpack.c.h.b16 %v1030
  %v1582 = vunpack.c.l.b16 %v1031
  %v1583 = vunpack.c.h.b16 %v1031
  %v1584 = vunpack.c.l.b16 %v1032
  %v1585 = vunpack.c.h.b16 %v1032
  %v1586 = vunpack.c.l.b16 %v1033
  %v1587 = vunpack.c.h.b16 %v1033
  %v1588 = vunpack.c.l.b16 %v1034
  %v1589 = vunpack.c.h.b16 %v1034
  %v1590 = vunpack.c.l.b16 %v1035
  %v1591 = vunpack.c.h.b16 %v1035
  %v1592 = vunpack.c.l.b16 %v1036
  %v1593 = vunpack.c.h.b16 %v1036
  %v1594 = vunpack.c.l.b16 %v1037
  %v1595 = vunpack.c.h.b16 %v1037
  %v1596 = vunpack.c.l.b16 %v1038
  %v1597 = vunpack.c.h.b16 %v1038
  %v1598 = vunpack.c.l.b16 %v1039
  %v1599 = vunpack.c.h.b16 %v1039
  %v1600 = vunpack.c.l.b16 %v1040
  %v1601 = vunpack.c.h.b16 %v1040
  %v1602 = vunpack.c.l.b16 %v1041
  %v1603 = vunpack.c.h.b16 %v1041
  %v1604 = vunpack.c.l.b16 %v1042
  %v1605 = vunpack.c.h.b16 %v1042
  %v1606 = vunpack.c.l.b16 %v1043
  %v1607 = vunpack.c.h.b16 %v1043
  %v1608 = vunpack.c.l.b16 %v1044
  %v1609 = vunpack.c.h.b16 %v1044
  %v1610 = vunpack.c.l.b16 %v1045
  %v1611 = vunpack.c.h.b16 %v1045
  %v1612 = vunpack.c.l.b16 %v1046
  %v1613 = vunpack.c.h.b16 %v1046
  %v1614 = vunpack.c.l.b16 %v1047
  %v1615 = vunpack.c.h.b16 %v1047
  %v1616 = vunpack.c.l.b16 %v1048
  %v1617 = vunpack.c.h.b16 %v1048
  %v1618 = vunpack.c.l.b16 %v1049
  %v1619 = vunpack.c.h.b16 %v1049
  %v1620 = vunpack.c.l.b16 %v1050
  %v1621 = vunpack.c.h.b16 %v1050
  %v1622 = vunpack.c.l.b16 %v1051
  %v1623 = vunpack.c.h.b16 %v1051
  %v1624 = vunpack.c.l.b16 %v1052
  %v1625 = vunpack.c.h.b16 %v1052
  %v1626 = vunpack.c.l.b16 %v1053
  %v1627 = vunpack.c.h.b16 %v1053
  %v1628 = vunpack.c.l.b16 %v1054
  %v1629 = vunpack.c.h.b16 %v1054
  %v1630 = vunpack.c.l.b16 %v1055
  %v1631 = vunpack.c.h.b16 %v1055
  %v1632 = vunpack.c.l.b16 %v1056
  %v1633 = vunpack.c.h.b16 %v1056
  %v1634 = vunpack.c.l.b16 %v1057
  %v1635 = vunpack.c.h.b16 %v1057
  %v1636 = vunpack.c.l.b16 %v1058
  %v1637 = vunpack.c.h.b16 %v1058
  %v1638 = vunpack.c.l.b16 %v1059
  %v1639 = vunpack.c.h.b16 %v1059
  %v1640 = vunpack.c.l.b16 %v1060
  %v1641 = vunpack.c.h.b16 %v1060
  %v1642 = vunpack.c.l.b16 %v1061
  %v1643 = vunpack.c.h.b16 %v1061
  %v1644 = vunpack.c.l.b16 %v1062
  %v1645 = vunpack.c.h.b16 %v1062
  %v1646 = vunpack.c.l.b16 %v1063
  %v1647 = vunpack.c.h.b16 %v1063
  %v1648 = vunpack.c.l.b16 %v1064
  %v1649 = vunpack.c.h.b16 %v1064
  %v1650 = vunpack.c.l.b16 %v1065
  %v1651 = vunpack.c.h.b16 %v1065
  %v1652 = vunpack.c.l.b16 %v1066
  %v1653 = vunpack.c.h.b16 %v1066
  %v1654 = vunpack.c.l.b16 %v1067
  %v1655 = vunpack.c.h.b16 %v1067
  %v1656 = vunpack.c.l.b16 %v1068
  %v1657 = vunpack.c.h.b16 %v1068
  %v1658 = vunpack.c.l.b16 %v1069
  %v1659 = vunpack.c.h.b16 %v1069
  %v1660 = vunpack.c.l.b16 %v1070
  %v1661 = vunpack.c.h.b16 %v1070
  %v1662 = vunpack.c.l.b16 %v1071
  %v1663 = vunpack.c.h.b16 %v1071
  %v1664 = vunpack.c.l.b16 %v1072
  %v1665 = vunpack.c.h.b16 %v1072
  %v1666 = vunpack.c.l.b16 %v1073
  %v1667 = vunpack.c.h.b16 %v1073
  %v1668 = vunpack.c.l.b16 %v1074
  %v1669 = vunpack.c.h.b16 %v1074
  %v1670 = vunpack.c.l.b16 %v1075
  %v1671 = vunpack.c.h.b16 %v1075
  %v1672 = vunpack.c.l.b16 %v1076
  %v1673 = vunpack.c.h.b16 %v1076
  %v1674 = vunpack.c.l.b16 %v1077
  %v1675 = vunpack.c.h.b16 %v1077
  %v1676 = vunpack.c.l.b16 %v1078
  %v1677 = vunpack.c.h.b16 %v1078
  %v1678 = vunpack.c.l.b16 %v1079
  %v1679 = vunpack.c.h.b16 %v1079
  %v1680 = vunpack.c.l.b16 %v1080
  %v1681 = vunpack.c.h.b16 %v1080
  %v1682 = vunpack.c.l.b16 %v1081
  %v1683 = vunpack.c.h.b16 %v1081
  %v1684 = vunpack.c.l.b16 %v1082
  %v1685 = vunpack.c.h.b16 %v1082
  %v1686 = vunpack.c.l.b16 %v1083
  %v1687 = vunpack.c.h.b16 %v1083
  %v1688 = vunpack.c.l.b16 %v1084
  %v1689 = vunpack.c.h.b16 %v1084
  %v1690 = vunpack.c.l.b16 %v1085
  %v1691 = vunpack.c.h.b16 %v1085
  %v1692 = vunpack.c.l.b16 %v1086
  %v1693 = vunpack.c.h.b16 %v1086
  %v1694 = vunpack.c.l.b16 %v1087
  %v1695 = vunpack.c.h.b16 %v1087
  %v1696 = vunpack.c.l.b16 %v1088
  %v1697 = vunpack.c.h.b16 %v1088
  %v1698 = vunpack.c.l.b16 %v1089
  %v1699 = vunpack.c.h.b16 %v1089
  %v1700 = vunpack.c.l.b16 %v1090
  %v1701 = vunpack.c.h.b16 %v1090
  %v1702 = vunpack.c.l.b16 %v1091
  %v1703 = vunpack.c.h.b16 %v1091
  %v1704 = vunpack.c.l.b16 %v1092
  %v1705 = vunpack.c.h.b16 %v1092
  %v1706 = vunpack.c.l.b16 %v1093
  %v1707 = vunpack.c.h.b16 %v1093
  %v1708 = vunpack.c.l.b16 %v1094
  %v1709 = vunpack.c.h.b16 %v1094
  %v1710 = vunpack.c.l.b16 %v1095
  %v1711 = vunpack.c.h.b16 %v1095
  %v1712 = vunpack.c.l.b16 %v1096
  %v1713 = vunpack.c.h.b16 %v1096
  %v1714 = vunpack.c.l.b16 %v1097
  %v1715 = vunpack.c.h.b16 %v1097
  %v1716 = vunpack.c.l.b16 %v1098
  %v1717 = vunpack.c.h.b16 %v1098
  %v1718 = vunpack.c.l.b16 %v1099
  %v1719 = vunpack.c.h.b16 %v1099
  %v1720 = vunpack.c.l.b16 %v1100
  %v1721 = vunpack.c.h.b16 %v1100
  %v1722 = vunpack.c.l.b16 %v1101
  %v1723 = vunpack.c.h.b16 %v1101
  %v1724 = vunpack.c.l.b16 %v1102
  %v1725 = vunpack.c.h.b16 %v1102
  %v1726 = vunpack.c.l.b16 %v1103
  %v1727 = vunpack.c.h.b16 %v1103
  %v1728 = vunpack.c.l.b16 %v1104
  %v1729 = vunpack.c.h.b16 %v1104
  %v1730 = vunpack.c.l.b16 %v1105
  %v1731 = vunpack.c.h.b16 %v1105
  %v1732 = vunpack.c.l.b16 %v1106
  %v1733 = vunpack.c.h.b16 %v1106
  %v1734 = vunpack.c.l.b16 %v1107
  %v1735 = vunpack.c.h.b16 %v1107
  %v1736 = vunpack.c.l.b16 %v1108
  %v1737 = vunpack.c.h.b16 %v1108
  %v1738 = vunpack.c.l.b16 %v1109
  %v1739 = vunpack.c.h.b16 %v1109
  %v1740 = vunpack.c.l.b16 %v1110
  %v1741 = vunpack.c.h.b16 %v1110
  %v1742 = vunpack.c.l.b16 %v1111
  %v1743 = vunpack.c.h.b16 %v1111
  %v1744 = vunpack.c.l.b16 %v1112
  %v1745 = vunpack.c.h.b16 %v1112
  %v1746 = vunpack.c.l.b16 %v1113
  %v1747 = vunpack.c.h.b16 %v1113
  %v1748 = vunpack.c.l.b16 %v1114
  %v1749 = vunpack.c.h.b16 %v1114
  %v1750 = vunpack.c.l.b16 %v1115
  %v1751 = vunpack.c.h.b16 %v1115
  %v1752 = vunpack.c.l.b16 %v1116
  %v1753 = vunpack.c.h.b16 %v1116
  %v1754 = vunpack.c.l.b16 %v1117
  %v1755 = vunpack.c.h.b16 %v1117
  %v1756 = vunpack.c.l.b16 %v1118
  %v1757 = vunpack.c.h.b16 %v1118
  %v1758 = vunpack.c.l.b16 %v1119
  %v1759 = vunpack.c.h.b16 %v1119
  %v1760 = vunpack.c.l.b16 %v1120
  %v1761 = vunpack.c.h.b16 %v1120
  %v1762 = vunpack.c.l.b16 %v1121
  %v1763 = vunpack.c.h.b16 %v1121
  %v1764 = vunpack.c.l.b16 %v1122
  %v1765 = vunpack.c.h.b16 %v1122
  %v1766 = vunpack.c.l.b16 %v1123
  %v1767 = vunpack.c.h.b16 %v1123
  %v1768 = vunpack.c.l.b16 %v1124
  %v1769 = vunpack.c.h.b16 %v1124
  %v1770 = vunpack.c.l.b16 %v1125
  %v1771 = vunpack.c.h.b16 %v1125
  %v1772 = vunpack.c.l.b16 %v1126
  %v1773 = vunpack.c.h.b16 %v1126
  %v1774 = vunpack.c.l.b16 %v1127
  %v1775 = vunpack.c.h.b16 %v1127
  %v1776 = vunpack.c.l.b16 %v1128
  %v1777 = vunpack.c.h.b16 %v1128
  %v1778 = vunpack.c.l.b16 %v1129
  %v1779 = vunpack.c.h.b16 %v1129
  %v1780 = vunpack.c.l.b16 %v1130
  %v1781 = vunpack.c.h.b16 %v1130
  %v1782 = vunpack.c.l.b16 %v1131
  %v1783 = vunpack.c.h.b16 %v1131
  %v1784 = vunpack.c.l.b16 %v1132
  %v1785 = vunpack.c.h.b16 %v1132
  %v1786 = vunpack.c.l.b16 %v1133
  %v1787 = vunpack.c.h.b16 %v1133
  %v1788 = vunpack.c.l.b16 %v1134
  %v1789 = vunpack.c.h.b16 %v1134
  %v1790 = vunpack.c.l.b16 %v1135
  %v1791 = vunpack.c.h.b16 %v1135
  %v1792 = vunpack.c.l.b16 %v1136
  %v1793 = vunpack.c.h.b16 %v1136
  %v1794 = vunpack.c.l.b16 %v1137
  %v1795 = vunpack.c.h.b16 %v1137
  %v1796 = vunpack.c.l.b16 %v1138
  %v1797 = vunpack.c.h.b16 %v1138
  %v1798 = vunpack.c.l.b16 %v1139
  %v1799 = vunpack.c.h.b16 %v1139
  %v1800 = vunpack.c.l.b16 %v1140
  %v1801 = vunpack.c.h.b16 %v1140
  %v1802 = vunpack.c.l.b16 %v1141
  %v1803 = vunpack.c.h.b16 %v1141
  %v1804 = vunpack.c.l.b16 %v1142
  %v1805 = vunpack.c.h.b16 %v1142
  %v1806 = vunpack.c.l.b16 %v1143
  %v1807 = vunpack.c.h.b16 %v1143
  %v1808 = vunpack.c.l.b16 %v1144
  %v1809 = vunpack.c.h.b16 %v1144
  %v1810 = vunpack.c.l.b16 %v1145
  %v1811 = vunpack.c.h.b16 %v1145
  %v1812 = vunpack.c.l.b16 %v1146
  %v1813 = vunpack.c.h.b16 %v1146
  %v1814 = vunpack.c.l.b16 %v1147
  %v1815 = vunpack.c.h.b16 %v1147
  %v1816 = vunpack.c.l.b16 %v1148
  %v1817 = vunpack.c.h.b16 %v1148
  %v1818 = vunpack.c.l.b16 %v1149
  %v1819 = vunpack.c.h.b16 %v1149
  %v1820 = vunpack.c.l.b16 %v1150
  %v1821 = vunpack.c.h.b16 %v1150
  %v1822 = vunpack.c.l.b16 %v1151
  %v1823 = vunpack.c.h.b16 %v1151
  %v1824 = vunpack.c.l.b16 %v1152
  %v1825 = vunpack.c.h.b16 %v1152
  %v1826 = vunpack.c.l.b16 %v1153
  %v1827 = vunpack.c.h.b16 %v1153
  %v1828 = vunpack.c.l.b16 %v1154
  %v1829 = vunpack.c.h.b16 %v1154
  %v1830 = vunpack.c.l.b16 %v1155
  %v1831 = vunpack.c.h.b16 %v1155
  %v1832 = vunpack.c.l.b16 %v1156
  %v1833 = vunpack.c.h.b16 %v1156
  %v1834 = vunpack.c.l.b16 %v1157
  %v1835 = vunpack.c.h.b16 %v1157
  %v1836 = vunpack.c.l.b16 %v1158
  %v1837 = vunpack.c.h.b16 %v1158
  %v1838 = vunpack.c.l.b16 %v1159
  %v1839 = vunpack.c.h.b16 %v1159
  %v1840 = vunpack.c.l.b16 %v1160
  %v1841 = vunpack.c.h.b16 %v1160
  %v1842 = vunpack.c.l.b16 %v1161
  %v1843 = vunpack.c.h.b16 %v1161
  %v1844 = vunpack.c.l.b16 %v1162
  %v1845 = vunpack.c.h.b16 %v1162
  %v1846 = vunpack.c.l.b16 %v1163
  %v1847 = vunpack.c.h.b16 %v1163
  %v1848 = vunpack.c.l.b16 %v1164
  %v1849 = vunpack.c.h.b16 %v1164
  %v1850 = vunpack.c.l.b16 %v1165
  %v1851 = vunpack.c.h.b16 %v1165
  %v1852 = vunpack.c.l.b16 %v1166
  %v1853 = vunpack.c.h.b16 %v1166
  %v1854 = vunpack.c.l.b16 %v1167
  %v1855 = vunpack.c.h.b16 %v1167
  %v1856 = vunpack.c.l.b16 %v1168
  %v1857 = vunpack.c.h.b16 %v1168
  %v1858 = vunpack.c.l.b16 %v1169
  %v1859 = vunpack.c.h.b16 %v1169
  %v1860 = vunpack.c.l.b16 %v1170
  %v1861 = vunpack.c.h.b16 %v1170
  %v1862 = vunpack.c.l.b16 %v1171
  %v1863 = vunpack.c.h.b16 %v1171
  %v1864 = vunpack.c.l.b16 %v1172
  %v1865 = vunpack.c.h.b16 %v1172
  %v1866 = vunpack.c.l.b16 %v1173
  %v1867 = vunpack.c.h.b16 %v1173
  %v1868 = vunpack.c.l.b16 %v1174
  %v1869 = vunpack.c.h.b16 %v1174
  %v1870 = vunpack.c.l.b16 %v1175
  %v1871 = vunpack.c.h.b16 %v1175
  %v1872 = vunpack.c.l.b16 %v1176
  %v1873 = vunpack.c.h.b16 %v1176
  %v1874 = vunpack.c.l.b16 %v1177
  %v1875 = vunpack.c.h.b16 %v1177
  %v1876 = vunpack.c.l.b16 %v1178
  %v1877 = vunpack.c.h.b16 %v1178
  %v1878 = vunpack.c.l.b16 %v1179
  %v1879 = vunpack.c.h.b16 %v1179
  %v1880 = vunpack.c.l.b16 %v1180
  %v1881 = vunpack.c.h.b16 %v1180
  %v1882 = vunpack.c.l.b16 %v1181
  %v1883 = vunpack.c.h.b16 %v1181
  %v1884 = vunpack.c.l.b16 %v1182
  %v1885 = vunpack.c.h.b16 %v1182
  %v1886 = vunpack.c.l.b16 %v1183
  %v1887 = vunpack.c.h.b16 %v1183
  %v1888 = vunpack.c.l.b16 %v1184
  %v1889 = vunpack.c.h.b16 %v1184
  %v1890 = vunpack.c.l.b16 %v1185
  %v1891 = vunpack.c.h.b16 %v1185
  %v1892 = vunpack.c.l.b16 %v1186
  %v1893 = vunpack.c.h.b16 %v1186
  %v1894 = vunpack.c.l.b16 %v1187
  %v1895 = vunpack.c.h.b16 %v1187
  %v1896 = vunpack.c.l.b16 %v1188
  %v1897 = vunpack.c.h.b16 %v1188
  %v1898 = vunpack.c.l.b16 %v1189
  %v1899 = vunpack.c.h.b16 %v1189
  %v1900 = vunpack.c.l.b16 %v1190
  %v1901 = vunpack.c.h.b16 %v1190
  %v1902 = vunpack.c.l.b16 %v1191
  %v1903 = vunpack.c.h.b16 %v1191
  %v1904 = vunpack.c.l.b16 %v1192
  %v1905 = vunpack.c.h.b16 %v1192
  %v1906 = vunpack.c.l.b16 %v1193
  %v1907 = vunpack.c.h.b16 %v1193
  %v1908 = vunpack.c.l.b16 %v1194
  %v1909 = vunpack.c.h.b16 %v1194
  %v1910 = vunpack.c.l.b16 %v1195
  %v1911 = vunpack.c.h.b16 %v1195
  %v1912 = vunpack.c.l.b16 %v1196
  %v1913 = vunpack.c.h.b16 %v1196
  %v1914 = vunpack.c.l.b16 %v1197
  %v1915 = vunpack.c.h.b16 %v1197
  %v1916 = vunpack.c.l.b16 %v1198
  %v1917 = vunpack.c.h.b16 %v1198
  %v1918 = vunpack.c.l.b16 %v1199
  %v1919 = vunpack.c.h.b16 %v1199
  %v1920 = vunpack.c.l.b16 %v1200
  %v1921 = vunpack.c.h.b16 %v1200
  %v1922 = vunpack.c.l.b16 %v1201
  %v1923 = vunpack.c.h.b16 %v1201
  %v1924 = vunpack.c.l.b16 %v1202
  %v1925 = vunpack.c.h.b16 %v1202
  %v1926 = vunpack.c.l.b16 %v1203
  %v1927 = vunpack.c.h.b16 %v1203
  %v1928 = vunpack.c.l.b16 %v1204
  %v1929 = vunpack.c.h.b16 %v1204
  %v1930 = vunpack.c.l.b16 %v1205
  %v1931 = vunpack.c.h.b16 %v1205
  %v1932 = vunpack.c.l.b16 %v1206
  %v1933 = vunpack.c.h.b16 %v1206
  %v1934 = vunpack.c.l.b16 %v1207
  %v1935 = vunpack.c.h.b16 %v1207
  %v1936 = vunpack.c.l.b16 %v1208
  %v1937 = vunpack.c.h.b16 %v1208
  %v1938 = vunpack.c.l.b16 %v1209
  %v1939 = vunpack.c.h.b16 %v1209
  %v1940 = vunpack.c.l.b16 %v1210
  %v1941 = vunpack.c.h.b16 %v1210
  %v1942 = vunpack.c.l.b16 %v1211
  %v1943 = vunpack.c.h.b16 %v1211
  %v1944 = vunpack.c.l.b16 %v1212
  %v1945 = vunpack.c.h.b16 %v1212
  %v1946 = vunpack.c.l.b16 %v1213
  %v1947 = vunpack.c.h.b16 %v1213
  %v1948 = vunpack.c.l.b16 %v1214
  %v1949 = vunpack.c.h.b16 %v1214
  %v1950 = vunpack.c.l.b16 %v1215
  %v1951 = vunpack.c.h.b16 %v1215
  %v1952 = vunpack.c.l.b16 %v1216
  %v1953 = vunpack.c.h.b16 %v1216
  %v1954 = vunpack.c.l.b16 %v1217
  %v1955 = vunpack.c.h.b16 %v1217
  %v1956 = vunpack.c.l.b16 %v1218
  %v1957 = vunpack.c.h.b16 %v1218
  %v1958 = vunpack.c.l.b16 %v1219
  %v1959 = vunpack.c.h.b16 %v1219
  %v1960 = vunpack.c.l.b16 %v1220
  %v1961 = vunpack.c.h.b16 %v1220
  %v1962 = vunpack.c.l.b16 %v1221
  %v1963 = vunpack.c.h.b16 %v1221
  %v1964 = vunpack.c.l.b16 %v1222
  %v1965 = vunpack.c.h.b16 %v1222
  %v1966 = vunpack.c.l.b16 %v1223
  %v1967 = vunpack.c.h.b16 %v1223
  %v1968 = vunpack.c.l.b16 %v1224
  %v1969 = vunpack.c.h.b16 %v1224
  %v1970 = vunpack.c.l.b16 %v1225
  %v1971 = vunpack.c.h.b16 %v1225
  %v1972 = vunpack.c.l.b16 %v1226
  %v1973 = vunpack.c.h.b16 %v1226
  %v1974 = vunpack.c.l.b16 %v1227
  %v1975 = vunpack.c.h.b16 %v1227
  %v1976 = vunpack.c.l.b16 %v1228
  %v1977 = vunpack.c.h.b16 %v1228
  %v1978 = vunpack.c.l.b16 %v1229
  %v1979 = vunpack.c.h.b16 %v1229
  %v1980 = vunpack.c.l.b16 %v1230
  %v1981 = vunpack.c.h.b16 %v1230
  %v1982 = vunpack.c.l.b16 %v1231
  %v1983 = vunpack.c.h.b16 %v1231
  %v1984 = vunpack.c.l.b16 %v1232
  %v1985 = vunpack.c.h.b16 %v1232
  %v1986 = vunpack.c.l.b16 %v1233
  %v1987 = vunpack.c.h.b16 %v1233
  %v1988 = vunpack.c.l.b16 %v1234
  %v1989 = vunpack.c.h.b16 %v1234
  %v1990 = vunpack.c.l.b16 %v1235
  %v1991 = vunpack.c.h.b16 %v1235
  %v1992 = vunpack.c.l.b16 %v1236
  %v1993 = vunpack.c.h.b16 %v1236
  %v1994 = vunpack.c.l.b16 %v1237
  %v1995 = vunpack.c.h.b16 %v1237
  %v1996 = vunpack.c.l.b16 %v1238
  %v1997 = vunpack.c.h.b16 %v1238
  %v1998 = vunpack.c.l.b16 %v1239
  %v1999 = vunpack.c.h.b16 %v1239
  %v2000 = vunpack.c.l.b16 %v1240
  %v2001 = vunpack.c.h.b16 %v1240
  %v2002 = vunpack.c.l.b16 %v1241
  %v2003 = vunpack.c.h.b16 %v1241
  %v2004 = vunpack.c.l.b16 %v1242
  %v2005 = vunpack.c.h.b16 %v1242
  %v2006 = vunpack.c.l.b16 %v1243
  %v2007 = vunpack.c.h.b16 %v1243
  %v2008 = vunpack.c.l.b16 %v1244
  %v2009 = vunpack.c.h.b16 %v1244
  %v2010 = vunpack.c.l.b16 %v1245
  %v2011 = vunpack.c.h.b16 %v1245
  %v2012 = vunpack.c.l.b16 %v1246
  %v2013 = vunpack.c.h.b16 %v1246
  %v2014 = vunpack.c.l.b16 %v1247
  %v2015 = vunpack.c.h.b16 %v1247
  %v2016 = vpack.c.b16 %v1512, %v1504
  %v2017 = vpack.c.b16 %v1513, %v1505
  %v2018 = vpack.c.b16 %v1514, %v1506
  %v2019 = vpack.c.b16 %v1515, %v1507
  %v2020 = vpack.c.b16 %v1516, %v1508
  %v2021 = vpack.c.b16 %v1517, %v1509
  %v2022 = vpack.c.b16 %v1518, %v1510
  %v2023 = vpack.c.b16 %v1519, %v1511
  %v2024 = vpack.c.b16 %v1528, %v1520
  %v2025 = vpack.c.b16 %v1529, %v1521
  %v2026 = vpack.c.b16 %v1530, %v1522
  %v2027 = vpack.c.b16 %v1531, %v1523
  %v2028 = vpack.c.b16 %v1532, %v1524
  %v2029 = vpack.c.b16 %v1533, %v1525
  %v2030 = vpack.c.b16 %v1534, %v1526
  %v2031 = vpack.c.b16 %v1535, %v1527
  %v2032 = vpack.c.b16 %v1544, %v1536
  %v2033 = vpack.c.b16 %v1545, %v1537
  %v2034 = vpack.c.b16 %v1546, %v1538
  %v2035 = vpack.c.b16 %v1547, %v1539
  %v2036 = vpack.c.b16 %v1548, %v1540
  %v2037 = vpack.c.b16 %v1549, %v1541
  %v2038 = vpack.c.b16 %v1550, %v1542
  %v2039 = vpack.c.b16 %v1551, %v1543
  %v2040 = vpack.c.b16 %v1560, %v1552
  %v2041 = vpack.c.b16 %v1561, %v1553
  %v2042 = vpack.c.b16 %v1562, %v1554
  %v2043 = vpack.c.b16 %v1563, %v1555
  %v2044 = vpack.c.b16 %v1564, %v1556
  %v2045 = vpack.c.b16 %v1565, %v1557
  %v2046 = vpack.c.b16 %v1566, %v1558
  %v2047 = vpack.c.b16 %v1567, %v1559
  %v2048 = vpack.c.b16 %v1576, %v1568
  %v2049 = vpack.c.b16 %v1577, %v1569
  %v2050 = vpack.c.b16 %v1578, %v1570
  %v2051 = vpack.c.b16 %v1579, %v1571
  %v2052 = vpack.c.b16 %v1580, %v1572
  %v2053 = vpack.c.b16 %v1581, %v1573
  %v2054 = vpack.c.b16 %v1582, %v1574
  %v2055 = vpack.c.b16 %v1583, %v1575
  %v2056 = vpack.c.b16 %v1592, %v1584
  %v2057 = vpack.c.b16 %v1593, %v1585
  %v2058 = vpack.c.b16 %v1594, %v1586
  %v2059 = vpack.c.b16 %v1595, %v1587
  %v2060 = vpack.c.b16 %v1596, %v1588
  %v2061 = vpack.c.b16 %v1597, %v1589
  %v2062 = vpack.c.b16 %v1598, %v1590
  %v2063 = vpack.c.b16 %v1599, %v1591
  %v2064 = vpack.c.b16 %v1608, %v1600
  %v2065 = vpack.c.b16 %v1609, %v1601
  %v2066 = vpack.c.b16 %v1610, %v1602
  %v2067 = vpack.c.b16 %v1611, %v1603
  %v2068 = vpack.c.b16 %v1612, %v1604
  %v2069 = vpack.c.b16 %v1613, %v1605
  %v2070 = vpack.c.b16 %v1614, %v1606
  %v2071 = vpack.c.b16 %v1615, %v1607
  %v2072 = vpack.c.b16 %v1624, %v1616
  %v2073 = vpack.c.b16 %v1625, %v1617
  %v2074 = vpack.c.b16 %v1626, %v1618
  %v2075 = vpack.c.b16 %v1627, %v1619
  %v2076 = vpack.c.b16 %v1628, %v1620
  %v2077 = vpack.c.b16 %v1629, %v1621
  %v2078 = vpack.c.b16 %v1630, %v1622
  %v2079 = vpack.c.b16 %v1631, %v1623
  %v2080 = vpack.c.b16 %v1640, %v1632
  %v2081 = vpack.c.b16 %v1641, %v1633
  %v2082 = vpack.c.b16 %v1642, %v1634
  %v2083 = vpack.c.b16 %v1643, %v1635
  %v2084 = vpack.c.b16 %v1644, %v1636
  %v2085 = vpack.c.b16 %v1645, %v1637
  %v2086 = vpack.c.b16 %v1646, %v1638
  %v2087 = vpack.c.b16 %v1647, %v1639
  %v2088 = vpack.c.b16 %v1656, %v1648
  %v2089 = vpack.c.b16 %v1657, %v1649
  %v2090 = vpack.c.b16 %v1658, %v1650
  %v2091 = vpack.c.b16 %v1659, %v1651
  %v2092 = vpack.c.b16 %v1660, %v1652
  %v2093 = vpack.c.b16 %v1661, %v1653
  %v2094 = vpack.c.b16 %v1662, %v1654
  %v2095 = vpack.c.b16 %v1663, %v1655
  %v2096 = vpack.c.b16 %v1672, %v1664
  %v2097 = vpack.c.b16 %v1673, %v1665
  %v2098 = vpack.c.b16 %v1674, %v1666
  %v2099 = vpack.c.b16 %v1675, %v1667
  %v2100 = vpack.c.b16 %v1676, %v1668
  %v2101 = vpack.c.b16 %v1677, %v1669
  %v2102 = vpack.c.b16 %v1678, %v1670
  %v2103 = vpack.c.b16 %v1679, %v1671
  %v2104 = vpack.c.b16 %v1688, %v1680
  %v2105 = vpack.c.b16 %v1689, %v1681
  %v2106 = vpack.c.b16 %v1690, %v1682
  %v2107 = vpack.c.b16 %v1691, %v1683
  %v2108 = vpack.c.b16 %v1692, %v1684
  %v2109 = vpack.c.b16 %v1693, %v1685
  %v2110 = vpack.c.b16 %v1694, %v1686
  %v2111 = vpack.c.b16 %v1695, %v1687
  %v2112 = vpack.c.b16 %v1704, %v1696
  %v2113 = vpack.c.b16 %v1705, %v1697
  %v2114 = vpack.c.b16 %v1706, %v1698
  %v2115 = vpack.c.b16 %v1707, %v1699
  %v2116 = vpack.c.b16 %v1708, %v1700
  %v2117 = vpack.c.b16 %v1709, %v1701
  %v2118 = vpack.c.b16 %v1710, %v1702
  %v2119 = vpack.c.b16 %v1711, %v1703
  %v2120 = vpack.c.b16 %v1720, %v1712
  %v2121 = vpack.c.b16 %v1721, %v1713
  %v2122 = vpack.c.b16 %v1722, %v1714
  %v2123 = vpack.c.b16 %v1723, %v1715
  %v2124 = vpack.c.b16 %v1724, %v1716
  %v2125 = vpack.c.b16 %v1725, %v1717
  %v2126 = vpack.c.b16 %v1726, %v1718
  %v2127 = vpack.c.b16 %v1727, %v1719
  %v2128 = vpack.c.b16 %v1736, %v1728
  %v2129 = vpack.c.b16 %v1737, %v1729
  %v2130 = vpack.c.b16 %v1738, %v1730
  %v2131 = vpack.c.b16 %v1739, %v1731
  %v2132 = vpack.c.b16 %v1740, %v1732
  %v2133 = vpack.c.b16 %v1741, %v1733
  %v2134 = vpack.c.b16 %v1742, %v1734
  %v2135 = vpack.c.b16 %v1743, %v1735
  %v2136 = vpack.c.b16 %v1752, %v1744
  %v2137 = vpack.c.b16 %v1753, %v1745
  %v2138 = vpack.c.b16 %v1754, %v1746
  %v2139 = vpack.c.b16 %v1755, %v1747
  %v2140 = vpack.c.b16 %v1756, %v1748
  %v2141 = vpack.c.b16 %v1757, %v1749
  %v2142 = vpack.c.b16 %v1758, %v1750
  %v2143 = vpack.c.b16 %v1759, %v1751
  %v2144 = vpack.c.b16 %v1768, %v1760
  %v2145 = vpack.c.b16 %v1769, %v1761
  %v2146 = vpack.c.b16 %v1770, %v1762
  %v2147 = vpack.c.b16 %v1771, %v1763
  %v2148 = vpack.c.b16 %v1772, %v1764
  %v2149 = vpack.c.b16 %v1773, %v1765
  %v2150 = vpack.c.b16 %v1774, %v1766
  %v2151 = vpack.c.b16 %v1775, %v1767
  %v2152 = vpack.c.b16 %v1784, %v1776
  %v2153 = vpack.c.b16 %v1785, %v1777
  %v2154 = vpack.c.b16 %v1786, %v1778
  %v2155 = vpack.c.b16 %v1787, %v1779
  %v2156 = vpack.c.b16 %v1788, %v1780
  %v2157 = vpack.c.b16 %v1789, %v1781
  %v2158 = vpack.c.b16 %v1790, %v1782
  %v2159 = vpack.c.b16 %v1791, %v1783
  %v2160 = vpack.c.b16 %v1800, %v1792
  %v2161 = vpack.c.b16 %v1801, %v1793
  %v2162 = vpack.c.b16 %v1802, %v1794
  %v2163 = vpack.c.b16 %v1803, %v1795
  %v2164 = vpack.c.b16 %v1804, %v1796
  %v2165 = vpack.c.b16 %v1805, %v1797
  %v2166 = vpack.c.b16 %v1806, %v1798
  %v2167 = vpack.c.b16 %v1807, %v1799
  %v2168 = vpack.c.b16 %v1816, %v1808
  %v2169 = vpack.c.b16 %v1817, %v1809
  %v2170 = vpack.c.b16 %v1818, %v1810
  %v2171 = vpack.c.b16 %v1819, %v1811
  %v2172 = vpack.c.b16 %v1820, %v1812
  %v2173 = vpack.c.b16 %v1821, %v1813
  %v2174 = vpack.c.b16 %v1822, %v1814
  %v2175 = vpack.c.b16 %v1823, %v1815
  %v2176 = vpack.c.b16 %v1832, %v1824
  %v2177 = vpack.c.b16 %v1833, %v1825
  %v2178 = vpack.c.b16 %v1834, %v1826
  %v2179 = vpack.c.b16 %v1835, %v1827
  %v2180 = vpack.c.b16 %v1836, %v1828
  %v2181 = vpack.c.b16 %v1837, %v1829
  %v2182 = vpack.c.b16 %v1838, %v1830
  %v2183 = vpack.c.b16 %v1839, %v1831
  %v2184 = vpack.c.b16 %v1848, %v1840
  %v2185 = vpack.c.b16 %v1849, %v1841
  %v2186 = vpack.c.b16 %v1850, %v1842
  %v2187 = vpack.c.b16 %v1851, %v1843
  %v2188 = vpack.c.b16 %v1852, %v1844
  %v2189 = vpack.c.b16 %v1853, %v1845
  %v2190 = vpack.c.b16 %v1854, %v1846
  %v2191 = vpack.c.b16 %v1855, %v1847
  %v2192 = vpack.c.b16 %v1864, %v1856
  %v2193 = vpack.c.b16 %v1865, %v1857
  %v2194 = vpack.c.b16 %v1866, %v1858
  %v2195 = vpack.c.b16 %v1867, %v1859
  %v2196 = vpack.c.b16 %v1868, %v1860
  %v2197 = vpack.c.b16 %v1869, %v1861
  %v2198 = vpack.c.b16 %v1870, %v1862
  %v2199 = vpack.c.b16 %v1871, %v1863
  %v2200 = vpack.c.b16 %v1880, %v1872
  %v2201 = vpack.c.b16 %v1881, %v1873
  %v2202 = vpack.c.b16 %v1882, %v1874
  %v2203 = vpack.c.b16 %v1883, %v1875
  %v2204 = vpack.c.b16 %v1884, %v1876
  %v2205 = vpack.c.b16 %v1885, %v1877
  %v2206 = vpack.c.b16 %v1886, %v1878
  %v2207 = vpack.c.b16 %v1887, %v1879
  %v2208 = vpack.c.b16 %v1896, %v1888
  %v2209 = vpack.c.b16 %v1897, %v1889
  %v2210 = vpack.c.b16 %v1898, %v1890
  %v2211 = vpack.c.b16 %v1899, %v1891
  %v2212 = vpack.c.b16 %v1900, %v1892
  %v2213 = vpack.c.b16 %v1901, %v1893
  %v2214 = vpack.c.b16 %v1902, %v1894
  %v2215 = vpack.c.b16 %v1903, %v1895
  %v2216 = vpack.c.b16 %v1912, %v1904
  %v2217 = vpack.c.b16 %v1913, %v1905
  %v2218 = vpack.c.b16 %v1914, %v1906
  %v2219 = vpack.c.b16 %v1915, %v1907
  %v2220 = vpack.c.b16 %v1916, %v1908
  %v2221 = vpack.c.b16 %v1917, %v1909
  %v2222 = vpack.c.b16 %v1918, %v1910
  %v2223 = vpack.c.b16 %v1919, %v1911
  %v2224 = vpack.c.b16 %v1928, %v1920
  %v2225 = vpack.c.b16 %v1929, %v1921
  %v2226 = vpack.c.b16 %v1930, %v1922
  %v2227 = vpack.c.b16 %v1931, %v1923
  %v2228 = vpack.c.b16 %v1932, %v1924
  %v2229 = vpack.c.b16 %v1933, %v1925
  %v2230 = vpack.c.b16 %v1934, %v1926
  %v2231 = vpack.c.b16 %v1935, %v1927
  %v2232 = vpack.c.b16 %v1944, %v1936
  %v2233 = vpack.c.b16 %v1945, %v1937
  %v2234 = vpack.c.b16 %v1946, %v1938
  %v2235 = vpack.c.b16 %v1947, %v1939
  %v2236 = vpack.c.b16 %v1948, %v1940
  %v2237 = vpack.c.b16 %v1949, %v1941
  %v2238 = vpack.c.b16 %v1950, %v1942
  %v2239 = vpack.c.b16 %v1951, %v1943
  %v2240 = vpack.c.b16 %v1960, %v1952
  %v2241 = vpack.c.b16 %v1961, %v1953
  %v2242 = vpack.c.b16 %v1962, %v1954
  %v2243 = vpack.c.b16 %v1963, %v1955
  %v2244 = vpack.c.b16 %v1964, %v1956
  %v2245 = vpack.c.b16 %v1965, %v1957
  %v2246 = vpack.c.b16 %v1966, %v1958
  %v2247 = vpack.c.b16 %v1967, %v1959
  %v2248 = vpack.c.b16 %v1976, %v1968
  %v2249 = vpack.c.b16 %v1977, %v1969
  %v2250 = vpack.c.b16 %v1978, %v1970
  %v2251 = vpack.c.b16 %v1979, %v1971
  %v2252 = vpack.c.b16 %v1980, %v1972
  %v2253 = vpack.c.b16 %v1981, %v1973
  %v2254 = vpack.c.b16 %v1982, %v1974
  %v2255 = vpack.c.b16 %v1983, %v1975
  %v2256 = vpack.c.b16 %v1992, %v1984
  %v2257 = vpack.c.b16 %v1993, %v1985
  %v2258 = vpack.c.b16 %v1994, %v1986
  %v2259 = vpack.c.b16 %v1995, %v1987
  %v2260 = vpack.c.b16 %v1996, %v1988
  %v2261 = vpack.c.b16 %v1997, %v1989
  %v2262 = vpack.c.b16 %v1998, %v1990
  %v2263 = vpack.c.b16 %v1999, %v1991
  %v2264 = vpack.c.b16 %v2008, %v2000
  %v2265 = vpack.c.b16 %v2009, %v2001
  %v2266 = vpack.c.b16 %v2010, %v2002
  %v2267 = vpack.c.b16 %v2011, %v2003
  %v2268 = vpack.c.b16 %v2012, %v2004
  %v2269 = vpack.c.b16 %v2013, %v2005
  %v2270 = vpack.c.b16 %v2014, %v2006
  %v2271 = vpack.c.b16 %v2015, %v2007
  %2528 = vmatpush.bf16.msra.mxu0 %v2072
  %2529 = vmatpush.bf16.msra.mxu0 %v2064
  %2530 = vmatpush.bf16.msra.mxu0 %v2056
  %2531 = vmatpush.bf16.msra.mxu0 %v2048
  %2532 = vmatpush.bf16.msra.mxu0 %v2040
  %2533 = vmatpush.bf16.msra.mxu0 %v2032
  %2534 = vmatpush.bf16.msra.mxu0 %v2024
  %2535 = vmatpush.bf16.msra.mxu0 %v2016
  %2536 = vmatmul.bf16.gmra.mxu0 %v988
  %v2537 = vpop.f32.mrf.mxu0
  %v2538 = vadd.f32 0.0, %v2537
  %v2539 = vpop.f32.mrf.mxu0
  %2540 = vdwg.mxu0
  %2541 = vmatpush.bf16.msra.mxu0 %v2136
  %2542 = vmatpush.bf16.msra.mxu0 %v2128
  %2543 = vmatpush.bf16.msra.mxu0 %v2120
  %2544 = vmatpush.bf16.msra.mxu0 %v2112
  %2545 = vmatpush.bf16.msra.mxu0 %v2104
  %2546 = vmatpush.bf16.msra.mxu0 %v2096
  %2547 = vmatpush.bf16.msra.mxu0 %v2088
  %2548 = vmatpush.bf16.msra.mxu0 %v2080
  %2549 = vmatmul.bf16.gmra.mxu0 %v989
  %v2550 = vpop.f32.mrf.mxu0
  %v2551 = vadd.f32 %v2538, %v2550
  %v2552 = vpop.f32.mrf.mxu0
  %2553 = vdwg.mxu0
  %2554 = vmatpush.bf16.msra.mxu0 %v2200
  %2555 = vmatpush.bf16.msra.mxu0 %v2192
  %2556 = vmatpush.bf16.msra.mxu0 %v2184
  %2557 = vmatpush.bf16.msra.mxu0 %v2176
  %2558 = vmatpush.bf16.msra.mxu0 %v2168
  %2559 = vmatpush.bf16.msra.mxu0 %v2160
  %2560 = vmatpush.bf16.msra.mxu0 %v2152
  %2561 = vmatpush.bf16.msra.mxu0 %v2144
  %2562 = vmatmul.bf16.gmra.mxu0 %v990
  %v2563 = vpop.f32.mrf.mxu0
  %v2564 = vadd.f32 %v2551, %v2563
  %v2565 = vpop.f32.mrf.mxu0
  %2566 = vdwg.mxu0
  %2567 = vmatpush.bf16.msra.mxu0 %v2264
  %2568 = vmatpush.bf16.msra.mxu0 %v2256
  %2569 = vmatpush.bf16.msra.mxu0 %v2248
  %2570 = vmatpush.bf16.msra.mxu0 %v2240
  %2571 = vmatpush.bf16.msra.mxu0 %v2232
  %2572 = vmatpush.bf16.msra.mxu0 %v2224
  %2573 = vmatpush.bf16.msra.mxu0 %v2216
  %2574 = vmatpush.bf16.msra.mxu0 %v2208
  %2575 = vmatmul.bf16.gmra.mxu0 %v991
  %v2576 = vpop.f32.mrf.mxu0
  %v2577 = vadd.f32 %v2564, %v2576
  %v2578 = vpop.f32.mrf.mxu0
  %2579 = vdwg.mxu0
  %2580 = vmatpush.bf16.msra.mxu0 %v2073
  %2581 = vmatpush.bf16.msra.mxu0 %v2065
  %2582 = vmatpush.bf16.msra.mxu0 %v2057
  %2583 = vmatpush.bf16.msra.mxu0 %v2049
  %2584 = vmatpush.bf16.msra.mxu0 %v2041
  %2585 = vmatpush.bf16.msra.mxu0 %v2033
  %2586 = vmatpush.bf16.msra.mxu0 %v2025
  %2587 = vmatpush.bf16.msra.mxu0 %v2017
  %2588 = vmatmul.bf16.gmra.mxu0 %v988
  %v2589 = vpop.f32.mrf.mxu0
  %v2590 = vadd.f32 0.0, %v2589
  %v2591 = vpop.f32.mrf.mxu0
  %2592 = vdwg.mxu0
  %2593 = vmatpush.bf16.msra.mxu0 %v2137
  %2594 = vmatpush.bf16.msra.mxu0 %v2129
  %2595 = vmatpush.bf16.msra.mxu0 %v2121
  %2596 = vmatpush.bf16.msra.mxu0 %v2113
  %2597 = vmatpush.bf16.msra.mxu0 %v2105
  %2598 = vmatpush.bf16.msra.mxu0 %v2097
  %2599 = vmatpush.bf16.msra.mxu0 %v2089
  %2600 = vmatpush.bf16.msra.mxu0 %v2081
  %2601 = vmatmul.bf16.gmra.mxu0 %v989
  %v2602 = vpop.f32.mrf.mxu0
  %v2603 = vadd.f32 %v2590, %v2602
  %v2604 = vpop.f32.mrf.mxu0
  %2605 = vdwg.mxu0
  %2606 = vmatpush.bf16.msra.mxu0 %v2201
  %2607 = vmatpush.bf16.msra.mxu0 %v2193
  %2608 = vmatpush.bf16.msra.mxu0 %v2185
  %2609 = vmatpush.bf16.msra.mxu0 %v2177
  %2610 = vmatpush.bf16.msra.mxu0 %v2169
  %2611 = vmatpush.bf16.msra.mxu0 %v2161
  %2612 = vmatpush.bf16.msra.mxu0 %v2153
  %2613 = vmatpush.bf16.msra.mxu0 %v2145
  %2614 = vmatmul.bf16.gmra.mxu0 %v990
  %v2615 = vpop.f32.mrf.mxu0
  %v2616 = vadd.f32 %v2603, %v2615
  %v2617 = vpop.f32.mrf.mxu0
  %2618 = vdwg.mxu0
  %2619 = vmatpush.bf16.msra.mxu0 %v2265
  %2620 = vmatpush.bf16.msra.mxu0 %v2257
  %2621 = vmatpush.bf16.msra.mxu0 %v2249
  %2622 = vmatpush.bf16.msra.mxu0 %v2241
  %2623 = vmatpush.bf16.msra.mxu0 %v2233
  %2624 = vmatpush.bf16.msra.mxu0 %v2225
  %2625 = vmatpush.bf16.msra.mxu0 %v2217
  %2626 = vmatpush.bf16.msra.mxu0 %v2209
  %2627 = vmatmul.bf16.gmra.mxu0 %v991
  %v2628 = vpop.f32.mrf.mxu0
  %v2629 = vadd.f32 %v2616, %v2628
  %v2630 = vpop.f32.mrf.mxu0
  %2631 = vdwg.mxu0
  %2632 = vmatpush.bf16.msra.mxu0 %v2074
  %2633 = vmatpush.bf16.msra.mxu0 %v2066
  %2634 = vmatpush.bf16.msra.mxu0 %v2058
  %2635 = vmatpush.bf16.msra.mxu0 %v2050
  %2636 = vmatpush.bf16.msra.mxu0 %v2042
  %2637 = vmatpush.bf16.msra.mxu0 %v2034
  %2638 = vmatpush.bf16.msra.mxu0 %v2026
  %2639 = vmatpush.bf16.msra.mxu0 %v2018
  %2640 = vmatmul.bf16.gmra.mxu0 %v988
  %v2641 = vpop.f32.mrf.mxu0
  %v2642 = vadd.f32 0.0, %v2641
  %v2643 = vpop.f32.mrf.mxu0
  %2644 = vdwg.mxu0
  %2645 = vmatpush.bf16.msra.mxu0 %v2138
  %2646 = vmatpush.bf16.msra.mxu0 %v2130
  %2647 = vmatpush.bf16.msra.mxu0 %v2122
  %2648 = vmatpush.bf16.msra.mxu0 %v2114
  %2649 = vmatpush.bf16.msra.mxu0 %v2106
  %2650 = vmatpush.bf16.msra.mxu0 %v2098
  %2651 = vmatpush.bf16.msra.mxu0 %v2090
  %2652 = vmatpush.bf16.msra.mxu0 %v2082
  %2653 = vmatmul.bf16.gmra.mxu0 %v989
  %v2654 = vpop.f32.mrf.mxu0
  %v2655 = vadd.f32 %v2642, %v2654
  %v2656 = vpop.f32.mrf.mxu0
  %2657 = vdwg.mxu0
  %2658 = vmatpush.bf16.msra.mxu0 %v2202
  %2659 = vmatpush.bf16.msra.mxu0 %v2194
  %2660 = vmatpush.bf16.msra.mxu0 %v2186
  %2661 = vmatpush.bf16.msra.mxu0 %v2178
  %2662 = vmatpush.bf16.msra.mxu0 %v2170
  %2663 = vmatpush.bf16.msra.mxu0 %v2162
  %2664 = vmatpush.bf16.msra.mxu0 %v2154
  %2665 = vmatpush.bf16.msra.mxu0 %v2146
  %2666 = vmatmul.bf16.gmra.mxu0 %v990
  %v2667 = vpop.f32.mrf.mxu0
  %v2668 = vadd.f32 %v2655, %v2667
  %v2669 = vpop.f32.mrf.mxu0
  %2670 = vdwg.mxu0
  %2671 = vmatpush.bf16.msra.mxu0 %v2266
  %2672 = vmatpush.bf16.msra.mxu0 %v2258
  %2673 = vmatpush.bf16.msra.mxu0 %v2250
  %2674 = vmatpush.bf16.msra.mxu0 %v2242
  %2675 = vmatpush.bf16.msra.mxu0 %v2234
  %2676 = vmatpush.bf16.msra.mxu0 %v2226
  %2677 = vmatpush.bf16.msra.mxu0 %v2218
  %2678 = vmatpush.bf16.msra.mxu0 %v2210
  %2679 = vmatmul.bf16.gmra.mxu0 %v991
  %v2680 = vpop.f32.mrf.mxu0
  %v2681 = vadd.f32 %v2668, %v2680
  %v2682 = vpop.f32.mrf.mxu0
  %2683 = vdwg.mxu0
  %2684 = vmatpush.bf16.msra.mxu0 %v2075
  %2685 = vmatpush.bf16.msra.mxu0 %v2067
  %2686 = vmatpush.bf16.msra.mxu0 %v2059
  %2687 = vmatpush.bf16.msra.mxu0 %v2051
  %2688 = vmatpush.bf16.msra.mxu0 %v2043
  %2689 = vmatpush.bf16.msra.mxu0 %v2035
  %2690 = vmatpush.bf16.msra.mxu0 %v2027
  %2691 = vmatpush.bf16.msra.mxu0 %v2019
  %2692 = vmatmul.bf16.gmra.mxu0 %v988
  %v2693 = vpop.f32.mrf.mxu0
  %v2694 = vadd.f32 0.0, %v2693
  %v2695 = vpop.f32.mrf.mxu0
  %2696 = vdwg.mxu0
  %2697 = vmatpush.bf16.msra.mxu0 %v2139
  %2698 = vmatpush.bf16.msra.mxu0 %v2131
  %2699 = vmatpush.bf16.msra.mxu0 %v2123
  %2700 = vmatpush.bf16.msra.mxu0 %v2115
  %2701 = vmatpush.bf16.msra.mxu0 %v2107
  %2702 = vmatpush.bf16.msra.mxu0 %v2099
  %2703 = vmatpush.bf16.msra.mxu0 %v2091
  %2704 = vmatpush.bf16.msra.mxu0 %v2083
  %2705 = vmatmul.bf16.gmra.mxu0 %v989
  %v2706 = vpop.f32.mrf.mxu0
  %v2707 = vadd.f32 %v2694, %v2706
  %v2708 = vpop.f32.mrf.mxu0
  %2709 = vdwg.mxu0
  %2710 = vmatpush.bf16.msra.mxu0 %v2203
  %2711 = vmatpush.bf16.msra.mxu0 %v2195
  %2712 = vmatpush.bf16.msra.mxu0 %v2187
  %2713 = vmatpush.bf16.msra.mxu0 %v2179
  %2714 = vmatpush.bf16.msra.mxu0 %v2171
  %2715 = vmatpush.bf16.msra.mxu0 %v2163
  %2716 = vmatpush.bf16.msra.mxu0 %v2155
  %2717 = vmatpush.bf16.msra.mxu0 %v2147
  %2718 = vmatmul.bf16.gmra.mxu0 %v990
  %v2719 = vpop.f32.mrf.mxu0
  %v2720 = vadd.f32 %v2707, %v2719
  %v2721 = vpop.f32.mrf.mxu0
  %2722 = vdwg.mxu0
  %2723 = vmatpush.bf16.msra.mxu0 %v2267
  %2724 = vmatpush.bf16.msra.mxu0 %v2259
  %2725 = vmatpush.bf16.msra.mxu0 %v2251
  %2726 = vmatpush.bf16.msra.mxu0 %v2243
  %2727 = vmatpush.bf16.msra.mxu0 %v2235
  %2728 = vmatpush.bf16.msra.mxu0 %v2227
  %2729 = vmatpush.bf16.msra.mxu0 %v2219
  %2730 = vmatpush.bf16.msra.mxu0 %v2211
  %2731 = vmatmul.bf16.gmra.mxu0 %v991
  %v2732 = vpop.f32.mrf.mxu0
  %v2733 = vadd.f32 %v2720, %v2732
  %v2734 = vpop.f32.mrf.mxu0
  %2735 = vdwg.mxu0
  %2736 = vmatpush.bf16.msra.mxu0 %v2076
  %2737 = vmatpush.bf16.msra.mxu0 %v2068
  %2738 = vmatpush.bf16.msra.mxu0 %v2060
  %2739 = vmatpush.bf16.msra.mxu0 %v2052
  %2740 = vmatpush.bf16.msra.mxu0 %v2044
  %2741 = vmatpush.bf16.msra.mxu0 %v2036
  %2742 = vmatpush.bf16.msra.mxu0 %v2028
  %2743 = vmatpush.bf16.msra.mxu0 %v2020
  %2744 = vmatmul.bf16.gmra.mxu0 %v988
  %v2745 = vpop.f32.mrf.mxu0
  %v2746 = vadd.f32 0.0, %v2745
  %v2747 = vpop.f32.mrf.mxu0
  %2748 = vdwg.mxu0
  %2749 = vmatpush.bf16.msra.mxu0 %v2140
  %2750 = vmatpush.bf16.msra.mxu0 %v2132
  %2751 = vmatpush.bf16.msra.mxu0 %v2124
  %2752 = vmatpush.bf16.msra.mxu0 %v2116
  %2753 = vmatpush.bf16.msra.mxu0 %v2108
  %2754 = vmatpush.bf16.msra.mxu0 %v2100
  %2755 = vmatpush.bf16.msra.mxu0 %v2092
  %2756 = vmatpush.bf16.msra.mxu0 %v2084
  %2757 = vmatmul.bf16.gmra.mxu0 %v989
  %v2758 = vpop.f32.mrf.mxu0
  %v2759 = vadd.f32 %v2746, %v2758
  %v2760 = vpop.f32.mrf.mxu0
  %2761 = vdwg.mxu0
  %2762 = vmatpush.bf16.msra.mxu0 %v2204
  %2763 = vmatpush.bf16.msra.mxu0 %v2196
  %2764 = vmatpush.bf16.msra.mxu0 %v2188
  %2765 = vmatpush.bf16.msra.mxu0 %v2180
  %2766 = vmatpush.bf16.msra.mxu0 %v2172
  %2767 = vmatpush.bf16.msra.mxu0 %v2164
  %2768 = vmatpush.bf16.msra.mxu0 %v2156
  %2769 = vmatpush.bf16.msra.mxu0 %v2148
  %2770 = vmatmul.bf16.gmra.mxu0 %v990
  %v2771 = vpop.f32.mrf.mxu0
  %v2772 = vadd.f32 %v2759, %v2771
  %v2773 = vpop.f32.mrf.mxu0
  %2774 = vdwg.mxu0
  %2775 = vmatpush.bf16.msra.mxu0 %v2268
  %2776 = vmatpush.bf16.msra.mxu0 %v2260
  %2777 = vmatpush.bf16.msra.mxu0 %v2252
  %2778 = vmatpush.bf16.msra.mxu0 %v2244
  %2779 = vmatpush.bf16.msra.mxu0 %v2236
  %2780 = vmatpush.bf16.msra.mxu0 %v2228
  %2781 = vmatpush.bf16.msra.mxu0 %v2220
  %2782 = vmatpush.bf16.msra.mxu0 %v2212
  %2783 = vmatmul.bf16.gmra.mxu0 %v991
  %v2784 = vpop.f32.mrf.mxu0
  %v2785 = vadd.f32 %v2772, %v2784
  %v2786 = vpop.f32.mrf.mxu0
  %2787 = vdwg.mxu0
  %2788 = vmatpush.bf16.msra.mxu0 %v2077
  %2789 = vmatpush.bf16.msra.mxu0 %v2069
  %2790 = vmatpush.bf16.msra.mxu0 %v2061
  %2791 = vmatpush.bf16.msra.mxu0 %v2053
  %2792 = vmatpush.bf16.msra.mxu0 %v2045
  %2793 = vmatpush.bf16.msra.mxu0 %v2037
  %2794 = vmatpush.bf16.msra.mxu0 %v2029
  %2795 = vmatpush.bf16.msra.mxu0 %v2021
  %2796 = vmatmul.bf16.gmra.mxu0 %v988
  %v2797 = vpop.f32.mrf.mxu0
  %v2798 = vadd.f32 0.0, %v2797
  %v2799 = vpop.f32.mrf.mxu0
  %2800 = vdwg.mxu0
  %2801 = vmatpush.bf16.msra.mxu0 %v2141
  %2802 = vmatpush.bf16.msra.mxu0 %v2133
  %2803 = vmatpush.bf16.msra.mxu0 %v2125
  %2804 = vmatpush.bf16.msra.mxu0 %v2117
  %2805 = vmatpush.bf16.msra.mxu0 %v2109
  %2806 = vmatpush.bf16.msra.mxu0 %v2101
  %2807 = vmatpush.bf16.msra.mxu0 %v2093
  %2808 = vmatpush.bf16.msra.mxu0 %v2085
  %2809 = vmatmul.bf16.gmra.mxu0 %v989
  %v2810 = vpop.f32.mrf.mxu0
  %v2811 = vadd.f32 %v2798, %v2810
  %v2812 = vpop.f32.mrf.mxu0
  %2813 = vdwg.mxu0
  %2814 = vmatpush.bf16.msra.mxu0 %v2205
  %2815 = vmatpush.bf16.msra.mxu0 %v2197
  %2816 = vmatpush.bf16.msra.mxu0 %v2189
  %2817 = vmatpush.bf16.msra.mxu0 %v2181
  %2818 = vmatpush.bf16.msra.mxu0 %v2173
  %2819 = vmatpush.bf16.msra.mxu0 %v2165
  %2820 = vmatpush.bf16.msra.mxu0 %v2157
  %2821 = vmatpush.bf16.msra.mxu0 %v2149
  %2822 = vmatmul.bf16.gmra.mxu0 %v990
  %v2823 = vpop.f32.mrf.mxu0
  %v2824 = vadd.f32 %v2811, %v2823
  %v2825 = vpop.f32.mrf.mxu0
  %2826 = vdwg.mxu0
  %2827 = vmatpush.bf16.msra.mxu0 %v2269
  %2828 = vmatpush.bf16.msra.mxu0 %v2261
  %2829 = vmatpush.bf16.msra.mxu0 %v2253
  %2830 = vmatpush.bf16.msra.mxu0 %v2245
  %2831 = vmatpush.bf16.msra.mxu0 %v2237
  %2832 = vmatpush.bf16.msra.mxu0 %v2229
  %2833 = vmatpush.bf16.msra.mxu0 %v2221
  %2834 = vmatpush.bf16.msra.mxu0 %v2213
  %2835 = vmatmul.bf16.gmra.mxu0 %v991
  %v2836 = vpop.f32.mrf.mxu0
  %v2837 = vadd.f32 %v2824, %v2836
  %v2838 = vpop.f32.mrf.mxu0
  %2839 = vdwg.mxu0
  %2840 = vmatpush.bf16.msra.mxu0 %v2078
  %2841 = vmatpush.bf16.msra.mxu0 %v2070
  %2842 = vmatpush.bf16.msra.mxu0 %v2062
  %2843 = vmatpush.bf16.msra.mxu0 %v2054
  %2844 = vmatpush.bf16.msra.mxu0 %v2046
  %2845 = vmatpush.bf16.msra.mxu0 %v2038
  %2846 = vmatpush.bf16.msra.mxu0 %v2030
  %2847 = vmatpush.bf16.msra.mxu0 %v2022
  %2848 = vmatmul.bf16.gmra.mxu0 %v988
  %v2849 = vpop.f32.mrf.mxu0
  %v2850 = vadd.f32 0.0, %v2849
  %v2851 = vpop.f32.mrf.mxu0
  %2852 = vdwg.mxu0
  %2853 = vmatpush.bf16.msra.mxu0 %v2142
  %2854 = vmatpush.bf16.msra.mxu0 %v2134
  %2855 = vmatpush.bf16.msra.mxu0 %v2126
  %2856 = vmatpush.bf16.msra.mxu0 %v2118
  %2857 = vmatpush.bf16.msra.mxu0 %v2110
  %2858 = vmatpush.bf16.msra.mxu0 %v2102
  %2859 = vmatpush.bf16.msra.mxu0 %v2094
  %2860 = vmatpush.bf16.msra.mxu0 %v2086
  %2861 = vmatmul.bf16.gmra.mxu0 %v989
  %v2862 = vpop.f32.mrf.mxu0
  %v2863 = vadd.f32 %v2850, %v2862
  %v2864 = vpop.f32.mrf.mxu0
  %2865 = vdwg.mxu0
  %2866 = vmatpush.bf16.msra.mxu0 %v2206
  %2867 = vmatpush.bf16.msra.mxu0 %v2198
  %2868 = vmatpush.bf16.msra.mxu0 %v2190
  %2869 = vmatpush.bf16.msra.mxu0 %v2182
  %2870 = vmatpush.bf16.msra.mxu0 %v2174
  %2871 = vmatpush.bf16.msra.mxu0 %v2166
  %2872 = vmatpush.bf16.msra.mxu0 %v2158
  %2873 = vmatpush.bf16.msra.mxu0 %v2150
  %2874 = vmatmul.bf16.gmra.mxu0 %v990
  %v2875 = vpop.f32.mrf.mxu0
  %v2876 = vadd.f32 %v2863, %v2875
  %v2877 = vpop.f32.mrf.mxu0
  %2878 = vdwg.mxu0
  %2879 = vmatpush.bf16.msra.mxu0 %v2270
  %2880 = vmatpush.bf16.msra.mxu0 %v2262
  %2881 = vmatpush.bf16.msra.mxu0 %v2254
  %2882 = vmatpush.bf16.msra.mxu0 %v2246
  %2883 = vmatpush.bf16.msra.mxu0 %v2238
  %2884 = vmatpush.bf16.msra.mxu0 %v2230
  %2885 = vmatpush.bf16.msra.mxu0 %v2222
  %2886 = vmatpush.bf16.msra.mxu0 %v2214
  %2887 = vmatmul.bf16.gmra.mxu0 %v991
  %v2888 = vpop.f32.mrf.mxu0
  %v2889 = vadd.f32 %v2876, %v2888
  %v2890 = vpop.f32.mrf.mxu0
  %2891 = vdwg.mxu0
  %2892 = vmatpush.bf16.msra.mxu0 %v2079
  %2893 = vmatpush.bf16.msra.mxu0 %v2071
  %2894 = vmatpush.bf16.msra.mxu0 %v2063
  %2895 = vmatpush.bf16.msra.mxu0 %v2055
  %2896 = vmatpush.bf16.msra.mxu0 %v2047
  %2897 = vmatpush.bf16.msra.mxu0 %v2039
  %2898 = vmatpush.bf16.msra.mxu0 %v2031
  %2899 = vmatpush.bf16.msra.mxu0 %v2023
  %2900 = vmatmul.bf16.gmra.mxu0 %v988
  %v2901 = vpop.f32.mrf.mxu0
  %v2902 = vadd.f32 0.0, %v2901
  %v2903 = vpop.f32.mrf.mxu0
  %2904 = vdwg.mxu0
  %2905 = vmatpush.bf16.msra.mxu0 %v2143
  %2906 = vmatpush.bf16.msra.mxu0 %v2135
  %2907 = vmatpush.bf16.msra.mxu0 %v2127
  %2908 = vmatpush.bf16.msra.mxu0 %v2119
  %2909 = vmatpush.bf16.msra.mxu0 %v2111
  %2910 = vmatpush.bf16.msra.mxu0 %v2103
  %2911 = vmatpush.bf16.msra.mxu0 %v2095
  %2912 = vmatpush.bf16.msra.mxu0 %v2087
  %2913 = vmatmul.bf16.gmra.mxu0 %v989
  %v2914 = vpop.f32.mrf.mxu0
  %v2915 = vadd.f32 %v2902, %v2914
  %v2916 = vpop.f32.mrf.mxu0
  %2917 = vdwg.mxu0
  %2918 = vmatpush.bf16.msra.mxu0 %v2207
  %2919 = vmatpush.bf16.msra.mxu0 %v2199
  %2920 = vmatpush.bf16.msra.mxu0 %v2191
  %2921 = vmatpush.bf16.msra.mxu0 %v2183
  %2922 = vmatpush.bf16.msra.mxu0 %v2175
  %2923 = vmatpush.bf16.msra.mxu0 %v2167
  %2924 = vmatpush.bf16.msra.mxu0 %v2159
  %2925 = vmatpush.bf16.msra.mxu0 %v2151
  %2926 = vmatmul.bf16.gmra.mxu0 %v990
  %v2927 = vpop.f32.mrf.mxu0
  %v2928 = vadd.f32 %v2915, %v2927
  %v2929 = vpop.f32.mrf.mxu0
  %2930 = vdwg.mxu0
  %2931 = vmatpush.bf16.msra.mxu0 %v2271
  %2932 = vmatpush.bf16.msra.mxu0 %v2263
  %2933 = vmatpush.bf16.msra.mxu0 %v2255
  %2934 = vmatpush.bf16.msra.mxu0 %v2247
  %2935 = vmatpush.bf16.msra.mxu0 %v2239
  %2936 = vmatpush.bf16.msra.mxu0 %v2231
  %2937 = vmatpush.bf16.msra.mxu0 %v2223
  %2938 = vmatpush.bf16.msra.mxu0 %v2215
  %2939 = vmatmul.bf16.gmra.mxu0 %v991
  %v2940 = vpop.f32.mrf.mxu0
  %v2941 = vadd.f32 %v2928, %v2940
  %v2942 = vpop.f32.mrf.mxu0
  %2943 = vdwg.mxu0
  %v2944 = vld [vmem:[%s10] sm:$0xff]
  %v2945 = vld [vmem:[%s11] sm:$0xff]
  %v2946 = vrot.slane %v2577, 4
  %v2947 = vadd.f32 %v2577, %v2946
  %v2948 = vrot.slane %v2947, 2
  %v2949 = vadd.f32 %v2947, %v2948
  %v2950 = vrot.slane %v2949, 1
  %v2951 = vadd.f32 %v2949, %v2950
  %v2952 = vrot.slane %v2629, 4
  %v2953 = vadd.f32 %v2629, %v2952
  %v2954 = vrot.slane %v2953, 2
  %v2955 = vadd.f32 %v2953, %v2954
  %v2956 = vrot.slane %v2955, 1
  %v2957 = vadd.f32 %v2955, %v2956
  %v2958 = vrot.slane %v2681, 4
  %v2959 = vadd.f32 %v2681, %v2958
  %v2960 = vrot.slane %v2959, 2
  %v2961 = vadd.f32 %v2959, %v2960
  %v2962 = vrot.slane %v2961, 1
  %v2963 = vadd.f32 %v2961, %v2962
  %v2964 = vrot.slane %v2733, 4
  %v2965 = vadd.f32 %v2733, %v2964
  %v2966 = vrot.slane %v2965, 2
  %v2967 = vadd.f32 %v2965, %v2966
  %v2968 = vrot.slane %v2967, 1
  %v2969 = vadd.f32 %v2967, %v2968
  %v2970 = vrot.slane %v2785, 4
  %v2971 = vadd.f32 %v2785, %v2970
  %v2972 = vrot.slane %v2971, 2
  %v2973 = vadd.f32 %v2971, %v2972
  %v2974 = vrot.slane %v2973, 1
  %v2975 = vadd.f32 %v2973, %v2974
  %v2976 = vrot.slane %v2837, 4
  %v2977 = vadd.f32 %v2837, %v2976
  %v2978 = vrot.slane %v2977, 2
  %v2979 = vadd.f32 %v2977, %v2978
  %v2980 = vrot.slane %v2979, 1
  %v2981 = vadd.f32 %v2979, %v2980
  %v2982 = vrot.slane %v2889, 4
  %v2983 = vadd.f32 %v2889, %v2982
  %v2984 = vrot.slane %v2983, 2
  %v2985 = vadd.f32 %v2983, %v2984
  %v2986 = vrot.slane %v2985, 1
  %v2987 = vadd.f32 %v2985, %v2986
  %v2988 = vrot.slane %v2941, 4
  %v2989 = vadd.f32 %v2941, %v2988
  %v2990 = vrot.slane %v2989, 2
  %v2991 = vadd.f32 %v2989, %v2990
  %v2992 = vrot.slane %v2991, 1
  %v2993 = vadd.f32 %v2991, %v2992
  %v2994 = vmul.f32 %v2951, %v275
  %v2995 = vmul.f32 %v2957, %v275
  %v2996 = vmul.f32 %v2963, %v275
  %v2997 = vmul.f32 %v2969, %v275
  %v2998 = vmul.f32 %v2975, %v275
  %v2999 = vmul.f32 %v2981, %v275
  %v3000 = vmul.f32 %v2987, %v275
  %v3001 = vmul.f32 %v2993, %v275
  %v3002 = vsub.f32 %v2577, %v2994
  %v3003 = vsub.f32 %v2629, %v2995
  %v3004 = vsub.f32 %v2681, %v2996
  %v3005 = vsub.f32 %v2733, %v2997
  %v3006 = vsub.f32 %v2785, %v2998
  %v3007 = vsub.f32 %v2837, %v2999
  %v3008 = vsub.f32 %v2889, %v3000
  %v3009 = vsub.f32 %v2941, %v3001
  %v3010 = vmul.f32 %v3002, %v3002
  %v3011 = vmul.f32 %v3003, %v3003
  %v3012 = vmul.f32 %v3004, %v3004
  %v3013 = vmul.f32 %v3005, %v3005
  %v3014 = vmul.f32 %v3006, %v3006
  %v3015 = vmul.f32 %v3007, %v3007
  %v3016 = vmul.f32 %v3008, %v3008
  %v3017 = vmul.f32 %v3009, %v3009
  %v3018 = vrot.slane %v3010, 4
  %v3019 = vadd.f32 %v3010, %v3018
  %v3020 = vrot.slane %v3019, 2
  %v3021 = vadd.f32 %v3019, %v3020
  %v3022 = vrot.slane %v3021, 1
  %v3023 = vadd.f32 %v3021, %v3022
  %v3024 = vrot.slane %v3011, 4
  %v3025 = vadd.f32 %v3011, %v3024
  %v3026 = vrot.slane %v3025, 2
  %v3027 = vadd.f32 %v3025, %v3026
  %v3028 = vrot.slane %v3027, 1
  %v3029 = vadd.f32 %v3027, %v3028
  %v3030 = vrot.slane %v3012, 4
  %v3031 = vadd.f32 %v3012, %v3030
  %v3032 = vrot.slane %v3031, 2
  %v3033 = vadd.f32 %v3031, %v3032
  %v3034 = vrot.slane %v3033, 1
  %v3035 = vadd.f32 %v3033, %v3034
  %v3036 = vrot.slane %v3013, 4
  %v3037 = vadd.f32 %v3013, %v3036
  %v3038 = vrot.slane %v3037, 2
  %v3039 = vadd.f32 %v3037, %v3038
  %v3040 = vrot.slane %v3039, 1
  %v3041 = vadd.f32 %v3039, %v3040
  %v3042 = vrot.slane %v3014, 4
  %v3043 = vadd.f32 %v3014, %v3042
  %v3044 = vrot.slane %v3043, 2
  %v3045 = vadd.f32 %v3043, %v3044
  %v3046 = vrot.slane %v3045, 1
  %v3047 = vadd.f32 %v3045, %v3046
  %v3048 = vrot.slane %v3015, 4
  %v3049 = vadd.f32 %v3015, %v3048
  %v3050 = vrot.slane %v3049, 2
  %v3051 = vadd.f32 %v3049, %v3050
  %v3052 = vrot.slane %v3051, 1
  %v3053 = vadd.f32 %v3051, %v3052
  %v3054 = vrot.slane %v3016, 4
  %v3055 = vadd.f32 %v3016, %v3054
  %v3056 = vrot.slane %v3055, 2
  %v3057 = vadd.f32 %v3055, %v3056
  %v3058 = vrot.slane %v3057, 1
  %v3059 = vadd.f32 %v3057, %v3058
  %v3060 = vrot.slane %v3017, 4
  %v3061 = vadd.f32 %v3017, %v3060
  %v3062 = vrot.slane %v3061, 2
  %v3063 = vadd.f32 %v3061, %v3062
  %v3064 = vrot.slane %v3063, 1
  %v3065 = vadd.f32 %v3063, %v3064
  %v3066 = vmul.f32 %v3023, %v275
  %v3067 = vmul.f32 %v3029, %v275
  %v3068 = vmul.f32 %v3035, %v275
  %v3069 = vmul.f32 %v3041, %v275
  %v3070 = vmul.f32 %v3047, %v275
  %v3071 = vmul.f32 %v3053, %v275
  %v3072 = vmul.f32 %v3059, %v275
  %v3073 = vmul.f32 %v3065, %v275
  %v3074 = vadd.f32 %v3066, 1e-05
  %v3075 = vadd.f32 %v3067, 1e-05
  %v3076 = vadd.f32 %v3068, 1e-05
  %v3077 = vadd.f32 %v3069, 1e-05
  %v3078 = vadd.f32 %v3070, 1e-05
  %v3079 = vadd.f32 %v3071, 1e-05
  %v3080 = vadd.f32 %v3072, 1e-05
  %v3081 = vadd.f32 %v3073, 1e-05
  %v3082 = vrsqrt.pop %v3074
  %v3083 = vmul.f32 %v3082, %v3074
  %v3084 = vmul.f32 %v3083, %v3082
  %v3085 = vmul.f32 0.5, %v3084
  %v3086 = vsub.f32 1.5, %v3085
  %v3087 = vmul.f32 %v3082, %v3086
  %vm3088 = vweird.f32 %v3074
  %vm3089 = vweird.f32 %v3082
  %vm3090 = vmor %vm3088, %vm3089
  %v3091 = vsel %vm3090, %v3082, %v3087
  %v3092 = vrsqrt.pop %v3075
  %v3093 = vmul.f32 %v3092, %v3075
  %v3094 = vmul.f32 %v3093, %v3092
  %v3095 = vmul.f32 0.5, %v3094
  %v3096 = vsub.f32 1.5, %v3095
  %v3097 = vmul.f32 %v3092, %v3096
  %vm3098 = vweird.f32 %v3075
  %vm3099 = vweird.f32 %v3092
  %vm3100 = vmor %vm3098, %vm3099
  %v3101 = vsel %vm3100, %v3092, %v3097
  %v3102 = vrsqrt.pop %v3076
  %v3103 = vmul.f32 %v3102, %v3076
  %v3104 = vmul.f32 %v3103, %v3102
  %v3105 = vmul.f32 0.5, %v3104
  %v3106 = vsub.f32 1.5, %v3105
  %v3107 = vmul.f32 %v3102, %v3106
  %vm3108 = vweird.f32 %v3076
  %vm3109 = vweird.f32 %v3102
  %vm3110 = vmor %vm3108, %vm3109
  %v3111 = vsel %vm3110, %v3102, %v3107
  %v3112 = vrsqrt.pop %v3077
  %v3113 = vmul.f32 %v3112, %v3077
  %v3114 = vmul.f32 %v3113, %v3112
  %v3115 = vmul.f32 0.5, %v3114
  %v3116 = vsub.f32 1.5, %v3115
  %v3117 = vmul.f32 %v3112, %v3116
  %vm3118 = vweird.f32 %v3077
  %vm3119 = vweird.f32 %v3112
  %vm3120 = vmor %vm3118, %vm3119
  %v3121 = vsel %vm3120, %v3112, %v3117
  %v3122 = vrsqrt.pop %v3078
  %v3123 = vmul.f32 %v3122, %v3078
  %v3124 = vmul.f32 %v3123, %v3122
  %v3125 = vmul.f32 0.5, %v3124
  %v3126 = vsub.f32 1.5, %v3125
  %v3127 = vmul.f32 %v3122, %v3126
  %vm3128 = vweird.f32 %v3078
  %vm3129 = vweird.f32 %v3122
  %vm3130 = vmor %vm3128, %vm3129
  %v3131 = vsel %vm3130, %v3122, %v3127
  %v3132 = vrsqrt.pop %v3079
  %v3133 = vmul.f32 %v3132, %v3079
  %v3134 = vmul.f32 %v3133, %v3132
  %v3135 = vmul.f32 0.5, %v3134
  %v3136 = vsub.f32 1.5, %v3135
  %v3137 = vmul.f32 %v3132, %v3136
  %vm3138 = vweird.f32 %v3079
  %vm3139 = vweird.f32 %v3132
  %vm3140 = vmor %vm3138, %vm3139
  %v3141 = vsel %vm3140, %v3132, %v3137
  %v3142 = vrsqrt.pop %v3080
  %v3143 = vmul.f32 %v3142, %v3080
  %v3144 = vmul.f32 %v3143, %v3142
  %v3145 = vmul.f32 0.5, %v3144
  %v3146 = vsub.f32 1.5, %v3145
  %v3147 = vmul.f32 %v3142, %v3146
  %vm3148 = vweird.f32 %v3080
  %vm3149 = vweird.f32 %v3142
  %vm3150 = vmor %vm3148, %vm3149
  %v3151 = vsel %vm3150, %v3142, %v3147
  %v3152 = vrsqrt.pop %v3081
  %v3153 = vmul.f32 %v3152, %v3081
  %v3154 = vmul.f32 %v3153, %v3152
  %v3155 = vmul.f32 0.5, %v3154
  %v3156 = vsub.f32 1.5, %v3155
  %v3157 = vmul.f32 %v3152, %v3156
  %vm3158 = vweird.f32 %v3081
  %vm3159 = vweird.f32 %v3152
  %vm3160 = vmor %vm3158, %vm3159
  %v3161 = vsel %vm3160, %v3152, %v3157
  %v3163 = vperm.slane %v2944, 0
  %v3164 = vperm.slane %v2944, 1
  %v3165 = vperm.slane %v2944, 2
  %v3166 = vperm.slane %v2944, 3
  %v3167 = vperm.slane %v2944, 4
  %v3168 = vperm.slane %v2944, 5
  %v3169 = vperm.slane %v2944, 6
  %v3170 = vperm.slane %v2944, 7
  %v3179 = vmul.f32 %v3091, %v3163
  %v3180 = vmul.f32 %v3101, %v3164
  %v3181 = vmul.f32 %v3111, %v3165
  %v3182 = vmul.f32 %v3121, %v3166
  %v3183 = vmul.f32 %v3131, %v3167
  %v3184 = vmul.f32 %v3141, %v3168
  %v3185 = vmul.f32 %v3151, %v3169
  %v3186 = vmul.f32 %v3161, %v3170
  %v3187 = vperm.slane %v3179, 0
  %v3188 = vperm.slane %v3180, 0
  %v3189 = vperm.slane %v3181, 0
  %v3190 = vperm.slane %v3182, 0
  %v3191 = vperm.slane %v3183, 0
  %v3192 = vperm.slane %v3184, 0
  %v3193 = vperm.slane %v3185, 0
  %v3194 = vperm.slane %v3186, 0
  %v3195 = vmul.f32 %v3002, %v3187
  %v3196 = vmul.f32 %v3003, %v3188
  %v3197 = vmul.f32 %v3004, %v3189
  %v3198 = vmul.f32 %v3005, %v3190
  %v3199 = vmul.f32 %v3006, %v3191
  %v3200 = vmul.f32 %v3007, %v3192
  %v3201 = vmul.f32 %v3008, %v3193
  %v3202 = vmul.f32 %v3009, %v3194
  %v3204 = vperm.slane %v2945, 0
  %v3205 = vperm.slane %v2945, 1
  %v3206 = vperm.slane %v2945, 2
  %v3207 = vperm.slane %v2945, 3
  %v3208 = vperm.slane %v2945, 4
  %v3209 = vperm.slane %v2945, 5
  %v3210 = vperm.slane %v2945, 6
  %v3211 = vperm.slane %v2945, 7
  %v3220 = vadd.f32 %v3195, %v3204
  %v3221 = vadd.f32 %v3196, %v3205
  %v3222 = vadd.f32 %v3197, %v3206
  %v3223 = vadd.f32 %v3198, %v3207
  %v3224 = vadd.f32 %v3199, %v3208
  %v3225 = vadd.f32 %v3200, %v3209
  %v3226 = vadd.f32 %v3201, %v3210
  %v3227 = vadd.f32 %v3202, %v3211
  %vm3228 = vcmp.gt.f32.partialorder %v3220, 0.0
  %vm3229 = vcmp.gt.f32.partialorder %v3221, 0.0
  %vm3230 = vcmp.gt.f32.partialorder %v3222, 0.0
  %vm3231 = vcmp.gt.f32.partialorder %v3223, 0.0
  %vm3232 = vcmp.gt.f32.partialorder %v3224, 0.0
  %vm3233 = vcmp.gt.f32.partialorder %v3225, 0.0
  %vm3234 = vcmp.gt.f32.partialorder %v3226, 0.0
  %vm3235 = vcmp.gt.f32.partialorder %v3227, 0.0
  %v3236 = vmul.f32 %v3220, 0.2
  %v3237 = vmul.f32 %v3221, 0.2
  %v3238 = vmul.f32 %v3222, 0.2
  %v3239 = vmul.f32 %v3223, 0.2
  %v3240 = vmul.f32 %v3224, 0.2
  %v3241 = vmul.f32 %v3225, 0.2
  %v3242 = vmul.f32 %v3226, 0.2
  %v3243 = vmul.f32 %v3227, 0.2
  %v3244 = vsel %vm3228, %v3220, %v3236
  %v3245 = vsel %vm3229, %v3221, %v3237
  %v3246 = vsel %vm3230, %v3222, %v3238
  %v3247 = vsel %vm3231, %v3223, %v3239
  %v3248 = vsel %vm3232, %v3224, %v3240
  %v3249 = vsel %vm3233, %v3225, %v3241
  %v3250 = vsel %vm3234, %v3226, %v3242
  %v3251 = vsel %vm3235, %v3227, %v3243
  %v3252 = vpack.c.bf16 %v3244, %v3244
  %v3253 = vpack.c.bf16 %v3245, %v3245
  %v3254 = vpack.c.bf16 %v3246, %v3246
  %v3255 = vpack.c.bf16 %v3247, %v3247
  %v3256 = vpack.c.bf16 %v3248, %v3248
  %v3257 = vpack.c.bf16 %v3249, %v3249
  %v3258 = vpack.c.bf16 %v3250, %v3250
  %v3259 = vpack.c.bf16 %v3251, %v3251
  %v3260 = vld [vmem:[%s12] sm:$0xff]
  %v3261 = vld [vmem:[%s12 + $0x8] sm:$0xff]
  %v3262 = vld [vmem:[%s12 + $0x10] sm:$0xff]
  %v3263 = vld [vmem:[%s12 + $0x18] sm:$0xf]
  %v3264 = vld [vmem:[%s12 + $0x1c] sm:$0xff]
  %v3265 = vld [vmem:[%s12 + $0x24] sm:$0xff]
  %v3266 = vld [vmem:[%s12 + $0x2c] sm:$0xff]
  %v3267 = vld [vmem:[%s12 + $0x34] sm:$0xf]
  %v3268 = vld [vmem:[%s12 + $0x38] sm:$0xff]
  %v3269 = vld [vmem:[%s12 + $0x40] sm:$0xff]
  %v3270 = vld [vmem:[%s12 + $0x48] sm:$0xff]
  %v3271 = vld [vmem:[%s12 + $0x50] sm:$0xf]
  %v3272 = vld [vmem:[%s12 + $0x54] sm:$0xff]
  %v3273 = vld [vmem:[%s12 + $0x5c] sm:$0xff]
  %v3274 = vld [vmem:[%s12 + $0x64] sm:$0xff]
  %v3275 = vld [vmem:[%s12 + $0x6c] sm:$0xf]
  %v3276 = vld [vmem:[%s12 + $0x70] sm:$0xff]
  %v3277 = vld [vmem:[%s12 + $0x78] sm:$0xff]
  %v3278 = vld [vmem:[%s12 + $0x80] sm:$0xff]
  %v3279 = vld [vmem:[%s12 + $0x88] sm:$0xf]
  %v3280 = vld [vmem:[%s12 + $0x8c] sm:$0xff]
  %v3281 = vld [vmem:[%s12 + $0x94] sm:$0xff]
  %v3282 = vld [vmem:[%s12 + $0x9c] sm:$0xff]
  %v3283 = vld [vmem:[%s12 + $0xa4] sm:$0xf]
  %v3284 = vld [vmem:[%s12 + $0xa8] sm:$0xff]
  %v3285 = vld [vmem:[%s12 + $0xb0] sm:$0xff]
  %v3286 = vld [vmem:[%s12 + $0xb8] sm:$0xff]
  %v3287 = vld [vmem:[%s12 + $0xc0] sm:$0xf]
  %v3288 = vld [vmem:[%s12 + $0xc4] sm:$0xff]
  %v3289 = vld [vmem:[%s12 + $0xcc] sm:$0xff]
  %v3290 = vld [vmem:[%s12 + $0xd4] sm:$0xff]
  %v3291 = vld [vmem:[%s12 + $0xdc] sm:$0xf]
  %v3292 = vld [vmem:[%s12 + $0xe0] sm:$0xff]
  %v3293 = vld [vmem:[%s12 + $0xe8] sm:$0xff]
  %v3294 = vld [vmem:[%s12 + $0xf0] sm:$0xff]
  %v3295 = vld [vmem:[%s12 + $0xf8] sm:$0xf]
  %v3296 = vld [vmem:[%s12 + $0xfc] sm:$0xff]
  %v3297 = vld [vmem:[%s12 + $0x104] sm:$0xff]
  %v3298 = vld [vmem:[%s12 + $0x10c] sm:$0xff]
  %v3299 = vld [vmem:[%s12 + $0x114] sm:$0xf]
  %v3300 = vld [vmem:[%s12 + $0x118] sm:$0xff]
  %v3301 = vld [vmem:[%s12 + $0x120] sm:$0xff]
  %v3302 = vld [vmem:[%s12 + $0x128] sm:$0xff]
  %v3303 = vld [vmem:[%s12 + $0x130] sm:$0xf]
  %v3304 = vld [vmem:[%s12 + $0x134] sm:$0xff]
  %v3305 = vld [vmem:[%s12 + $0x13c] sm:$0xff]
  %v3306 = vld [vmem:[%s12 + $0x144] sm:$0xff]
  %v3307 = vld [vmem:[%s12 + $0x14c] sm:$0xf]
  %v3308 = vld [vmem:[%s12 + $0x150] sm:$0xff]
  %v3309 = vld [vmem:[%s12 + $0x158] sm:$0xff]
  %v3310 = vld [vmem:[%s12 + $0x160] sm:$0xff]
  %v3311 = vld [vmem:[%s12 + $0x168] sm:$0xf]
  %v3312 = vld [vmem:[%s12 + $0x16c] sm:$0xff]
  %v3313 = vld [vmem:[%s12 + $0x174] sm:$0xff]
  %v3314 = vld [vmem:[%s12 + $0x17c] sm:$0xff]
  %v3315 = vld [vmem:[%s12 + $0x184] sm:$0xf]
  %v3316 = vld [vmem:[%s12 + $0x188] sm:$0xff]
  %v3317 = vld [vmem:[%s12 + $0x190] sm:$0xff]
  %v3318 = vld [vmem:[%s12 + $0x198] sm:$0xff]
  %v3319 = vld [vmem:[%s12 + $0x1a0] sm:$0xf]
  %v3320 = vld [vmem:[%s12 + $0x1a4] sm:$0xff]
  %v3321 = vld [vmem:[%s12 + $0x1ac] sm:$0xff]
  %v3322 = vld [vmem:[%s12 + $0x1b4] sm:$0xff]
  %v3323 = vld [vmem:[%s12 + $0x1bc] sm:$0xf]
  %v3324 = vld [vmem:[%s12 + $0x1c0] sm:$0xff]
  %v3325 = vld [vmem:[%s12 + $0x1c8] sm:$0xff]
  %v3326 = vld [vmem:[%s12 + $0x1d0] sm:$0xff]
  %v3327 = vld [vmem:[%s12 + $0x1d8] sm:$0xf]
  %v3328 = vld [vmem:[%s12 + $0x1dc] sm:$0xff]
  %v3329 = vld [vmem:[%s12 + $0x1e4] sm:$0xff]
  %v3330 = vld [vmem:[%s12 + $0x1ec] sm:$0xff]
  %v3331 = vld [vmem:[%s12 + $0x1f4] sm:$0xf]
  %v3332 = vld [vmem:[%s12 + $0x1f8] sm:$0xff]
  %v3333 = vld [vmem:[%s12 + $0x200] sm:$0xff]
  %v3334 = vld [vmem:[%s12 + $0x208] sm:$0xff]
  %v3335 = vld [vmem:[%s12 + $0x210] sm:$0xf]
  %v3336 = vld [vmem:[%s12 + $0x214] sm:$0xff]
  %v3337 = vld [vmem:[%s12 + $0x21c] sm:$0xff]
  %v3338 = vld [vmem:[%s12 + $0x224] sm:$0xff]
  %v3339 = vld [vmem:[%s12 + $0x22c] sm:$0xf]
  %v3340 = vld [vmem:[%s12 + $0x230] sm:$0xff]
  %v3341 = vld [vmem:[%s12 + $0x238] sm:$0xff]
  %v3342 = vld [vmem:[%s12 + $0x240] sm:$0xff]
  %v3343 = vld [vmem:[%s12 + $0x248] sm:$0xf]
  %v3344 = vld [vmem:[%s12 + $0x24c] sm:$0xff]
  %v3345 = vld [vmem:[%s12 + $0x254] sm:$0xff]
  %v3346 = vld [vmem:[%s12 + $0x25c] sm:$0xff]
  %v3347 = vld [vmem:[%s12 + $0x264] sm:$0xf]
  %v3348 = vld [vmem:[%s12 + $0x268] sm:$0xff]
  %v3349 = vld [vmem:[%s12 + $0x270] sm:$0xff]
  %v3350 = vld [vmem:[%s12 + $0x278] sm:$0xff]
  %v3351 = vld [vmem:[%s12 + $0x280] sm:$0xf]
  %v3352 = vld [vmem:[%s12 + $0x284] sm:$0xff]
  %v3353 = vld [vmem:[%s12 + $0x28c] sm:$0xff]
  %v3354 = vld [vmem:[%s12 + $0x294] sm:$0xff]
  %v3355 = vld [vmem:[%s12 + $0x29c] sm:$0xf]
  %v3356 = vld [vmem:[%s12 + $0x2a0] sm:$0xff]
  %v3357 = vld [vmem:[%s12 + $0x2a8] sm:$0xff]
  %v3358 = vld [vmem:[%s12 + $0x2b0] sm:$0xff]
  %v3359 = vld [vmem:[%s12 + $0x2b8] sm:$0xf]
  %v3360 = vld [vmem:[%s12 + $0x2bc] sm:$0xff]
  %v3361 = vld [vmem:[%s12 + $0x2c4] sm:$0xff]
  %v3362 = vld [vmem:[%s12 + $0x2cc] sm:$0xff]
  %v3363 = vld [vmem:[%s12 + $0x2d4] sm:$0xf]
  %v3364 = vld [vmem:[%s12 + $0x2d8] sm:$0xff]
  %v3365 = vld [vmem:[%s12 + $0x2e0] sm:$0xff]
  %v3366 = vld [vmem:[%s12 + $0x2e8] sm:$0xff]
  %v3367 = vld [vmem:[%s12 + $0x2f0] sm:$0xf]
  %v3368 = vld [vmem:[%s12 + $0x2f4] sm:$0xff]
  %v3369 = vld [vmem:[%s12 + $0x2fc] sm:$0xff]
  %v3370 = vld [vmem:[%s12 + $0x304] sm:$0xff]
  %v3371 = vld [vmem:[%s12 + $0x30c] sm:$0xf]
  %v3372 = vld [vmem:[%s12 + $0x310] sm:$0xff]
  %v3373 = vld [vmem:[%s12 + $0x318] sm:$0xff]
  %v3374 = vld [vmem:[%s12 + $0x320] sm:$0xff]
  %v3375 = vld [vmem:[%s12 + $0x328] sm:$0xf]
  %v3376 = vld [vmem:[%s12 + $0x32c] sm:$0xff]
  %v3377 = vld [vmem:[%s12 + $0x334] sm:$0xff]
  %v3378 = vld [vmem:[%s12 + $0x33c] sm:$0xff]
  %v3379 = vld [vmem:[%s12 + $0x344] sm:$0xf]
  %v3380 = vld [vmem:[%s12 + $0x348] sm:$0xff]
  %v3381 = vld [vmem:[%s12 + $0x350] sm:$0xff]
  %v3382 = vld [vmem:[%s12 + $0x358] sm:$0xff]
  %v3383 = vld [vmem:[%s12 + $0x360] sm:$0xf]
  %v3384 = vld [vmem:[%s12 + $0x364] sm:$0xff]
  %v3385 = vld [vmem:[%s12 + $0x36c] sm:$0xff]
  %v3386 = vld [vmem:[%s12 + $0x374] sm:$0xff]
  %v3387 = vld [vmem:[%s12 + $0x37c] sm:$0xf]
  %v3388 = vld [vmem:[%s12 + $0x380] sm:$0xff]
  %v3389 = vld [vmem:[%s12 + $0x388] sm:$0xff]
  %v3390 = vld [vmem:[%s12 + $0x390] sm:$0xff]
  %v3391 = vld [vmem:[%s12 + $0x398] sm:$0xf]
  %v3392 = vld [vmem:[%s12 + $0x39c] sm:$0xff]
  %v3393 = vld [vmem:[%s12 + $0x3a4] sm:$0xff]
  %v3394 = vld [vmem:[%s12 + $0x3ac] sm:$0xff]
  %v3395 = vld [vmem:[%s12 + $0x3b4] sm:$0xf]
  %v3396 = vld [vmem:[%s12 + $0x3b8] sm:$0xff]
  %v3397 = vld [vmem:[%s12 + $0x3c0] sm:$0xff]
  %v3398 = vld [vmem:[%s12 + $0x3c8] sm:$0xff]
  %v3399 = vld [vmem:[%s12 + $0x3d0] sm:$0xf]
  %v3400 = vld [vmem:[%s12 + $0x3d4] sm:$0xff]
  %v3401 = vld [vmem:[%s12 + $0x3dc] sm:$0xff]
  %v3402 = vld [vmem:[%s12 + $0x3e4] sm:$0xff]
  %v3403 = vld [vmem:[%s12 + $0x3ec] sm:$0xf]
  %v3404 = vld [vmem:[%s12 + $0x3f0] sm:$0xff]
  %v3405 = vld [vmem:[%s12 + $0x3f8] sm:$0xff]
  %v3406 = vld [vmem:[%s12 + $0x400] sm:$0xff]
  %v3407 = vld [vmem:[%s12 + $0x408] sm:$0xf]
  %v3408 = vld [vmem:[%s12 + $0x40c] sm:$0xff]
  %v3409 = vld [vmem:[%s12 + $0x414] sm:$0xff]
  %v3410 = vld [vmem:[%s12 + $0x41c] sm:$0xff]
  %v3411 = vld [vmem:[%s12 + $0x424] sm:$0xf]
  %v3412 = vld [vmem:[%s12 + $0x428] sm:$0xff]
  %v3413 = vld [vmem:[%s12 + $0x430] sm:$0xff]
  %v3414 = vld [vmem:[%s12 + $0x438] sm:$0xff]
  %v3415 = vld [vmem:[%s12 + $0x440] sm:$0xf]
  %v3416 = vld [vmem:[%s12 + $0x444] sm:$0xff]
  %v3417 = vld [vmem:[%s12 + $0x44c] sm:$0xff]
  %v3418 = vld [vmem:[%s12 + $0x454] sm:$0xff]
  %v3419 = vld [vmem:[%s12 + $0x45c] sm:$0xf]
  %v3420 = vld [vmem:[%s12 + $0x460] sm:$0xff]
  %v3421 = vld [vmem:[%s12 + $0x468] sm:$0xff]
  %v3422 = vld [vmem:[%s12 + $0x470] sm:$0xff]
  %v3423 = vld [vmem:[%s12 + $0x478] sm:$0xf]
  %v3424 = vld [vmem:[%s12 + $0x47c] sm:$0xff]
  %v3425 = vld [vmem:[%s12 + $0x484] sm:$0xff]
  %v3426 = vld [vmem:[%s12 + $0x48c] sm:$0xff]
  %v3427 = vld [vmem:[%s12 + $0x494] sm:$0xf]
  %v3428 = vld [vmem:[%s12 + $0x498] sm:$0xff]
  %v3429 = vld [vmem:[%s12 + $0x4a0] sm:$0xff]
  %v3430 = vld [vmem:[%s12 + $0x4a8] sm:$0xff]
  %v3431 = vld [vmem:[%s12 + $0x4b0] sm:$0xf]
  %v3432 = vld [vmem:[%s12 + $0x4b4] sm:$0xff]
  %v3433 = vld [vmem:[%s12 + $0x4bc] sm:$0xff]
  %v3434 = vld [vmem:[%s12 + $0x4c4] sm:$0xff]
  %v3435 = vld [vmem:[%s12 + $0x4cc] sm:$0xf]
  %v3436 = vld [vmem:[%s12 + $0x4d0] sm:$0xff]
  %v3437 = vld [vmem:[%s12 + $0x4d8] sm:$0xff]
  %v3438 = vld [vmem:[%s12 + $0x4e0] sm:$0xff]
  %v3439 = vld [vmem:[%s12 + $0x4e8] sm:$0xf]
  %v3440 = vld [vmem:[%s12 + $0x4ec] sm:$0xff]
  %v3441 = vld [vmem:[%s12 + $0x4f4] sm:$0xff]
  %v3442 = vld [vmem:[%s12 + $0x4fc] sm:$0xff]
  %v3443 = vld [vmem:[%s12 + $0x504] sm:$0xf]
  %v3444 = vld [vmem:[%s12 + $0x508] sm:$0xff]
  %v3445 = vld [vmem:[%s12 + $0x510] sm:$0xff]
  %v3446 = vld [vmem:[%s12 + $0x518] sm:$0xff]
  %v3447 = vld [vmem:[%s12 + $0x520] sm:$0xf]
  %v3448 = vld [vmem:[%s12 + $0x524] sm:$0xff]
  %v3449 = vld [vmem:[%s12 + $0x52c] sm:$0xff]
  %v3450 = vld [vmem:[%s12 + $0x534] sm:$0xff]
  %v3451 = vld [vmem:[%s12 + $0x53c] sm:$0xf]
  %v3452 = vld [vmem:[%s12 + $0x540] sm:$0xff]
  %v3453 = vld [vmem:[%s12 + $0x548] sm:$0xff]
  %v3454 = vld [vmem:[%s12 + $0x550] sm:$0xff]
  %v3455 = vld [vmem:[%s12 + $0x558] sm:$0xf]
  %v3456 = vld [vmem:[%s12 + $0x55c] sm:$0xff]
  %v3457 = vld [vmem:[%s12 + $0x564] sm:$0xff]
  %v3458 = vld [vmem:[%s12 + $0x56c] sm:$0xff]
  %v3459 = vld [vmem:[%s12 + $0x574] sm:$0xf]
  %v3460 = vld [vmem:[%s12 + $0x578] sm:$0xff]
  %v3461 = vld [vmem:[%s12 + $0x580] sm:$0xff]
  %v3462 = vld [vmem:[%s12 + $0x588] sm:$0xff]
  %v3463 = vld [vmem:[%s12 + $0x590] sm:$0xf]
  %v3464 = vld [vmem:[%s12 + $0x594] sm:$0xff]
  %v3465 = vld [vmem:[%s12 + $0x59c] sm:$0xff]
  %v3466 = vld [vmem:[%s12 + $0x5a4] sm:$0xff]
  %v3467 = vld [vmem:[%s12 + $0x5ac] sm:$0xf]
  %v3468 = vld [vmem:[%s12 + $0x5b0] sm:$0xff]
  %v3469 = vld [vmem:[%s12 + $0x5b8] sm:$0xff]
  %v3470 = vld [vmem:[%s12 + $0x5c0] sm:$0xff]
  %v3471 = vld [vmem:[%s12 + $0x5c8] sm:$0xf]
  %v3472 = vld [vmem:[%s12 + $0x5cc] sm:$0xff]
  %v3473 = vld [vmem:[%s12 + $0x5d4] sm:$0xff]
  %v3474 = vld [vmem:[%s12 + $0x5dc] sm:$0xff]
  %v3475 = vld [vmem:[%s12 + $0x5e4] sm:$0xf]
  %v3476 = vld [vmem:[%s12 + $0x5e8] sm:$0xff]
  %v3477 = vld [vmem:[%s12 + $0x5f0] sm:$0xff]
  %v3478 = vld [vmem:[%s12 + $0x5f8] sm:$0xff]
  %v3479 = vld [vmem:[%s12 + $0x600] sm:$0xf]
  %v3480 = vld [vmem:[%s12 + $0x604] sm:$0xff]
  %v3481 = vld [vmem:[%s12 + $0x60c] sm:$0xff]
  %v3482 = vld [vmem:[%s12 + $0x614] sm:$0xff]
  %v3483 = vld [vmem:[%s12 + $0x61c] sm:$0xf]
  %v3484 = vld [vmem:[%s12 + $0x620] sm:$0xff]
  %v3485 = vld [vmem:[%s12 + $0x628] sm:$0xff]
  %v3486 = vld [vmem:[%s12 + $0x630] sm:$0xff]
  %v3487 = vld [vmem:[%s12 + $0x638] sm:$0xf]
  %v3488 = vld [vmem:[%s12 + $0x63c] sm:$0xff]
  %v3489 = vld [vmem:[%s12 + $0x644] sm:$0xff]
  %v3490 = vld [vmem:[%s12 + $0x64c] sm:$0xff]
  %v3491 = vld [vmem:[%s12 + $0x654] sm:$0xf]
  %v3492 = vld [vmem:[%s12 + $0x658] sm:$0xff]
  %v3493 = vld [vmem:[%s12 + $0x660] sm:$0xff]
  %v3494 = vld [vmem:[%s12 + $0x668] sm:$0xff]
  %v3495 = vld [vmem:[%s12 + $0x670] sm:$0xf]
  %v3496 = vld [vmem:[%s12 + $0x674] sm:$0xff]
  %v3497 = vld [vmem:[%s12 + $0x67c] sm:$0xff]
  %v3498 = vld [vmem:[%s12 + $0x684] sm:$0xff]
  %v3499 = vld [vmem:[%s12 + $0x68c] sm:$0xf]
  %v3500 = vld [vmem:[%s12 + $0x690] sm:$0xff]
  %v3501 = vld [vmem:[%s12 + $0x698] sm:$0xff]
  %v3502 = vld [vmem:[%s12 + $0x6a0] sm:$0xff]
  %v3503 = vld [vmem:[%s12 + $0x6a8] sm:$0xf]
  %v3504 = vld [vmem:[%s12 + $0x6ac] sm:$0xff]
  %v3505 = vld [vmem:[%s12 + $0x6b4] sm:$0xff]
  %v3506 = vld [vmem:[%s12 + $0x6bc] sm:$0xff]
  %v3507 = vld [vmem:[%s12 + $0x6c4] sm:$0xf]
  %v3508 = vld [vmem:[%s12 + $0x6c8] sm:$0xff]
  %v3509 = vld [vmem:[%s12 + $0x6d0] sm:$0xff]
  %v3510 = vld [vmem:[%s12 + $0x6d8] sm:$0xff]
  %v3511 = vld [vmem:[%s12 + $0x6e0] sm:$0xf]
  %v3512 = vld [vmem:[%s12 + $0x6e4] sm:$0xff]
  %v3513 = vld [vmem:[%s12 + $0x6ec] sm:$0xff]
  %v3514 = vld [vmem:[%s12 + $0x6f4] sm:$0xff]
  %v3515 = vld [vmem:[%s12 + $0x6fc] sm:$0xf]
  %v3516 = vld [vmem:[%s12 + $0x700] sm:$0xff]
  %v3517 = vld [vmem:[%s12 + $0x708] sm:$0xff]
  %v3518 = vld [vmem:[%s12 + $0x710] sm:$0xff]
  %v3519 = vld [vmem:[%s12 + $0x718] sm:$0xf]
  %v3520 = vld [vmem:[%s12 + $0x71c] sm:$0xff]
  %v3521 = vld [vmem:[%s12 + $0x724] sm:$0xff]
  %v3522 = vld [vmem:[%s12 + $0x72c] sm:$0xff]
  %v3523 = vld [vmem:[%s12 + $0x734] sm:$0xf]
  %v3524 = vld [vmem:[%s12 + $0x738] sm:$0xff]
  %v3525 = vld [vmem:[%s12 + $0x740] sm:$0xff]
  %v3526 = vld [vmem:[%s12 + $0x748] sm:$0xff]
  %v3527 = vld [vmem:[%s12 + $0x750] sm:$0xf]
  %v3528 = vld [vmem:[%s12 + $0x754] sm:$0xff]
  %v3529 = vld [vmem:[%s12 + $0x75c] sm:$0xff]
  %v3530 = vld [vmem:[%s12 + $0x764] sm:$0xff]
  %v3531 = vld [vmem:[%s12 + $0x76c] sm:$0xf]
  %v3532 = vld [vmem:[%s12 + $0x770] sm:$0xff]
  %v3533 = vld [vmem:[%s12 + $0x778] sm:$0xff]
  %v3534 = vld [vmem:[%s12 + $0x780] sm:$0xff]
  %v3535 = vld [vmem:[%s12 + $0x788] sm:$0xf]
  %v3536 = vld [vmem:[%s12 + $0x78c] sm:$0xff]
  %v3537 = vld [vmem:[%s12 + $0x794] sm:$0xff]
  %v3538 = vld [vmem:[%s12 + $0x79c] sm:$0xff]
  %v3539 = vld [vmem:[%s12 + $0x7a4] sm:$0xf]
  %v3540 = vld [vmem:[%s12 + $0x7a8] sm:$0xff]
  %v3541 = vld [vmem:[%s12 + $0x7b0] sm:$0xff]
  %v3542 = vld [vmem:[%s12 + $0x7b8] sm:$0xff]
  %v3543 = vld [vmem:[%s12 + $0x7c0] sm:$0xf]
  %v3544 = vld [vmem:[%s12 + $0x7c4] sm:$0xff]
  %v3545 = vld [vmem:[%s12 + $0x7cc] sm:$0xff]
  %v3546 = vld [vmem:[%s12 + $0x7d4] sm:$0xff]
  %v3547 = vld [vmem:[%s12 + $0x7dc] sm:$0xf]
  %v3548 = vld [vmem:[%s12 + $0x7e0] sm:$0xff]
  %v3549 = vld [vmem:[%s12 + $0x7e8] sm:$0xff]
  %v3550 = vld [vmem:[%s12 + $0x7f0] sm:$0xff]
  %v3551 = vld [vmem:[%s12 + $0x7f8] sm:$0xf]
  %v3552 = vld [vmem:[%s12 + $0x7fc] sm:$0xff]
  %v3553 = vld [vmem:[%s12 + $0x804] sm:$0xff]
  %v3554 = vld [vmem:[%s12 + $0x80c] sm:$0xff]
  %v3555 = vld [vmem:[%s12 + $0x814] sm:$0xf]
  %v3556 = vld [vmem:[%s12 + $0x818] sm:$0xff]
  %v3557 = vld [vmem:[%s12 + $0x820] sm:$0xff]
  %v3558 = vld [vmem:[%s12 + $0x828] sm:$0xff]
  %v3559 = vld [vmem:[%s12 + $0x830] sm:$0xf]
  %v3560 = vld [vmem:[%s12 + $0x834] sm:$0xff]
  %v3561 = vld [vmem:[%s12 + $0x83c] sm:$0xff]
  %v3562 = vld [vmem:[%s12 + $0x844] sm:$0xff]
  %v3563 = vld [vmem:[%s12 + $0x84c] sm:$0xf]
  %v3564 = vld [vmem:[%s12 + $0x850] sm:$0xff]
  %v3565 = vld [vmem:[%s12 + $0x858] sm:$0xff]
  %v3566 = vld [vmem:[%s12 + $0x860] sm:$0xff]
  %v3567 = vld [vmem:[%s12 + $0x868] sm:$0xf]
  %v3568 = vld [vmem:[%s12 + $0x86c] sm:$0xff]
  %v3569 = vld [vmem:[%s12 + $0x874] sm:$0xff]
  %v3570 = vld [vmem:[%s12 + $0x87c] sm:$0xff]
  %v3571 = vld [vmem:[%s12 + $0x884] sm:$0xf]
  %v3572 = vld [vmem:[%s12 + $0x888] sm:$0xff]
  %v3573 = vld [vmem:[%s12 + $0x890] sm:$0xff]
  %v3574 = vld [vmem:[%s12 + $0x898] sm:$0xff]
  %v3575 = vld [vmem:[%s12 + $0x8a0] sm:$0xf]
  %v3576 = vld [vmem:[%s12 + $0x8a4] sm:$0xff]
  %v3577 = vld [vmem:[%s12 + $0x8ac] sm:$0xff]
  %v3578 = vld [vmem:[%s12 + $0x8b4] sm:$0xff]
  %v3579 = vld [vmem:[%s12 + $0x8bc] sm:$0xf]
  %v3580 = vld [vmem:[%s12 + $0x8c0] sm:$0xff]
  %v3581 = vld [vmem:[%s12 + $0x8c8] sm:$0xff]
  %v3582 = vld [vmem:[%s12 + $0x8d0] sm:$0xff]
  %v3583 = vld [vmem:[%s12 + $0x8d8] sm:$0xf]
  %v3584 = vld [vmem:[%s12 + $0x8dc] sm:$0xff]
  %v3585 = vld [vmem:[%s12 + $0x8e4] sm:$0xff]
  %v3586 = vld [vmem:[%s12 + $0x8ec] sm:$0xff]
  %v3587 = vld [vmem:[%s12 + $0x8f4] sm:$0xf]
  %v3588 = vld [vmem:[%s12 + $0x8f8] sm:$0xff]
  %v3589 = vld [vmem:[%s12 + $0x900] sm:$0xff]
  %v3590 = vld [vmem:[%s12 + $0x908] sm:$0xff]
  %v3591 = vld [vmem:[%s12 + $0x910] sm:$0xf]
  %v3592 = vld [vmem:[%s12 + $0x914] sm:$0xff]
  %v3593 = vld [vmem:[%s12 + $0x91c] sm:$0xff]
  %v3594 = vld [vmem:[%s12 + $0x924] sm:$0xff]
  %v3595 = vld [vmem:[%s12 + $0x92c] sm:$0xf]
  %v3596 = vld [vmem:[%s12 + $0x930] sm:$0xff]
  %v3597 = vld [vmem:[%s12 + $0x938] sm:$0xff]
  %v3598 = vld [vmem:[%s12 + $0x940] sm:$0xff]
  %v3599 = vld [vmem:[%s12 + $0x948] sm:$0xf]
  %v3600 = vld [vmem:[%s12 + $0x94c] sm:$0xff]
  %v3601 = vld [vmem:[%s12 + $0x954] sm:$0xff]
  %v3602 = vld [vmem:[%s12 + $0x95c] sm:$0xff]
  %v3603 = vld [vmem:[%s12 + $0x964] sm:$0xf]
  %v3604 = vld [vmem:[%s12 + $0x968] sm:$0xff]
  %v3605 = vld [vmem:[%s12 + $0x970] sm:$0xff]
  %v3606 = vld [vmem:[%s12 + $0x978] sm:$0xff]
  %v3607 = vld [vmem:[%s12 + $0x980] sm:$0xf]
  %v3608 = vld [vmem:[%s12 + $0x984] sm:$0xff]
  %v3609 = vld [vmem:[%s12 + $0x98c] sm:$0xff]
  %v3610 = vld [vmem:[%s12 + $0x994] sm:$0xff]
  %v3611 = vld [vmem:[%s12 + $0x99c] sm:$0xf]
  %v3612 = vld [vmem:[%s12 + $0x9a0] sm:$0xff]
  %v3613 = vld [vmem:[%s12 + $0x9a8] sm:$0xff]
  %v3614 = vld [vmem:[%s12 + $0x9b0] sm:$0xff]
  %v3615 = vld [vmem:[%s12 + $0x9b8] sm:$0xf]
  %v3616 = vld [vmem:[%s12 + $0x9bc] sm:$0xff]
  %v3617 = vld [vmem:[%s12 + $0x9c4] sm:$0xff]
  %v3618 = vld [vmem:[%s12 + $0x9cc] sm:$0xff]
  %v3619 = vld [vmem:[%s12 + $0x9d4] sm:$0xf]
  %v3620 = vld [vmem:[%s12 + $0x9d8] sm:$0xff]
  %v3621 = vld [vmem:[%s12 + $0x9e0] sm:$0xff]
  %v3622 = vld [vmem:[%s12 + $0x9e8] sm:$0xff]
  %v3623 = vld [vmem:[%s12 + $0x9f0] sm:$0xf]
  %v3624 = vld [vmem:[%s12 + $0x9f4] sm:$0xff]
  %v3625 = vld [vmem:[%s12 + $0x9fc] sm:$0xff]
  %v3626 = vld [vmem:[%s12 + $0xa04] sm:$0xff]
  %v3627 = vld [vmem:[%s12 + $0xa0c] sm:$0xf]
  %v3628 = vld [vmem:[%s12 + $0xa10] sm:$0xff]
  %v3629 = vld [vmem:[%s12 + $0xa18] sm:$0xff]
  %v3630 = vld [vmem:[%s12 + $0xa20] sm:$0xff]
  %v3631 = vld [vmem:[%s12 + $0xa28] sm:$0xf]
  %v3632 = vld [vmem:[%s12 + $0xa2c] sm:$0xff]
  %v3633 = vld [vmem:[%s12 + $0xa34] sm:$0xff]
  %v3634 = vld [vmem:[%s12 + $0xa3c] sm:$0xff]
  %v3635 = vld [vmem:[%s12 + $0xa44] sm:$0xf]
  %v3636 = vld [vmem:[%s12 + $0xa48] sm:$0xff]
  %v3637 = vld [vmem:[%s12 + $0xa50] sm:$0xff]
  %v3638 = vld [vmem:[%s12 + $0xa58] sm:$0xff]
  %v3639 = vld [vmem:[%s12 + $0xa60] sm:$0xf]
  %v3640 = vld [vmem:[%s12 + $0xa64] sm:$0xff]
  %v3641 = vld [vmem:[%s12 + $0xa6c] sm:$0xff]
  %v3642 = vld [vmem:[%s12 + $0xa74] sm:$0xff]
  %v3643 = vld [vmem:[%s12 + $0xa7c] sm:$0xf]
  %v3644 = vld [vmem:[%s12 + $0xa80] sm:$0xff]
  %v3645 = vld [vmem:[%s12 + $0xa88] sm:$0xff]
  %v3646 = vld [vmem:[%s12 + $0xa90] sm:$0xff]
  %v3647 = vld [vmem:[%s12 + $0xa98] sm:$0xf]
  %v3648 = vld [vmem:[%s12 + $0xa9c] sm:$0xff]
  %v3649 = vld [vmem:[%s12 + $0xaa4] sm:$0xff]
  %v3650 = vld [vmem:[%s12 + $0xaac] sm:$0xff]
  %v3651 = vld [vmem:[%s12 + $0xab4] sm:$0xf]
  %v3652 = vld [vmem:[%s12 + $0xab8] sm:$0xff]
  %v3653 = vld [vmem:[%s12 + $0xac0] sm:$0xff]
  %v3654 = vld [vmem:[%s12 + $0xac8] sm:$0xff]
  %v3655 = vld [vmem:[%s12 + $0xad0] sm:$0xf]
  %v3656 = vld [vmem:[%s12 + $0xad4] sm:$0xff]
  %v3657 = vld [vmem:[%s12 + $0xadc] sm:$0xff]
  %v3658 = vld [vmem:[%s12 + $0xae4] sm:$0xff]
  %v3659 = vld [vmem:[%s12 + $0xaec] sm:$0xf]
  %v3660 = vld [vmem:[%s12 + $0xaf0] sm:$0xff]
  %v3661 = vld [vmem:[%s12 + $0xaf8] sm:$0xff]
  %v3662 = vld [vmem:[%s12 + $0xb00] sm:$0xff]
  %v3663 = vld [vmem:[%s12 + $0xb08] sm:$0xf]
  %v3664 = vld [vmem:[%s12 + $0xb0c] sm:$0xff]
  %v3665 = vld [vmem:[%s12 + $0xb14] sm:$0xff]
  %v3666 = vld [vmem:[%s12 + $0xb1c] sm:$0xff]
  %v3667 = vld [vmem:[%s12 + $0xb24] sm:$0xf]
  %v3668 = vld [vmem:[%s12 + $0xb28] sm:$0xff]
  %v3669 = vld [vmem:[%s12 + $0xb30] sm:$0xff]
  %v3670 = vld [vmem:[%s12 + $0xb38] sm:$0xff]
  %v3671 = vld [vmem:[%s12 + $0xb40] sm:$0xf]
  %v3672 = vld [vmem:[%s12 + $0xb44] sm:$0xff]
  %v3673 = vld [vmem:[%s12 + $0xb4c] sm:$0xff]
  %v3674 = vld [vmem:[%s12 + $0xb54] sm:$0xff]
  %v3675 = vld [vmem:[%s12 + $0xb5c] sm:$0xf]
  %v3676 = vld [vmem:[%s12 + $0xb60] sm:$0xff]
  %v3677 = vld [vmem:[%s12 + $0xb68] sm:$0xff]
  %v3678 = vld [vmem:[%s12 + $0xb70] sm:$0xff]
  %v3679 = vld [vmem:[%s12 + $0xb78] sm:$0xf]
  %v3680 = vld [vmem:[%s12 + $0xb7c] sm:$0xff]
  %v3681 = vld [vmem:[%s12 + $0xb84] sm:$0xff]
  %v3682 = vld [vmem:[%s12 + $0xb8c] sm:$0xff]
  %v3683 = vld [vmem:[%s12 + $0xb94] sm:$0xf]
  %v3684 = vld [vmem:[%s12 + $0xb98] sm:$0xff]
  %v3685 = vld [vmem:[%s12 + $0xba0] sm:$0xff]
  %v3686 = vld [vmem:[%s12 + $0xba8] sm:$0xff]
  %v3687 = vld [vmem:[%s12 + $0xbb0] sm:$0xf]
  %v3688 = vld [vmem:[%s12 + $0xbb4] sm:$0xff]
  %v3689 = vld [vmem:[%s12 + $0xbbc] sm:$0xff]
  %v3690 = vld [vmem:[%s12 + $0xbc4] sm:$0xff]
  %v3691 = vld [vmem:[%s12 + $0xbcc] sm:$0xf]
  %v3692 = vld [vmem:[%s12 + $0xbd0] sm:$0xff]
  %v3693 = vld [vmem:[%s12 + $0xbd8] sm:$0xff]
  %v3694 = vld [vmem:[%s12 + $0xbe0] sm:$0xff]
  %v3695 = vld [vmem:[%s12 + $0xbe8] sm:$0xf]
  %v3696 = vld [vmem:[%s12 + $0xbec] sm:$0xff]
  %v3697 = vld [vmem:[%s12 + $0xbf4] sm:$0xff]
  %v3698 = vld [vmem:[%s12 + $0xbfc] sm:$0xff]
  %v3699 = vld [vmem:[%s12 + $0xc04] sm:$0xf]
  %v3700 = vld [vmem:[%s12 + $0xc08] sm:$0xff]
  %v3701 = vld [vmem:[%s12 + $0xc10] sm:$0xff]
  %v3702 = vld [vmem:[%s12 + $0xc18] sm:$0xff]
  %v3703 = vld [vmem:[%s12 + $0xc20] sm:$0xf]
  %v3704 = vld [vmem:[%s12 + $0xc24] sm:$0xff]
  %v3705 = vld [vmem:[%s12 + $0xc2c] sm:$0xff]
  %v3706 = vld [vmem:[%s12 + $0xc34] sm:$0xff]
  %v3707 = vld [vmem:[%s12 + $0xc3c] sm:$0xf]
  %v3708 = vld [vmem:[%s12 + $0xc40] sm:$0xff]
  %v3709 = vld [vmem:[%s12 + $0xc48] sm:$0xff]
  %v3710 = vld [vmem:[%s12 + $0xc50] sm:$0xff]
  %v3711 = vld [vmem:[%s12 + $0xc58] sm:$0xf]
  %v3712 = vld [vmem:[%s12 + $0xc5c] sm:$0xff]
  %v3713 = vld [vmem:[%s12 + $0xc64] sm:$0xff]
  %v3714 = vld [vmem:[%s12 + $0xc6c] sm:$0xff]
  %v3715 = vld [vmem:[%s12 + $0xc74] sm:$0xf]
  %v3716 = vld [vmem:[%s12 + $0xc78] sm:$0xff]
  %v3717 = vld [vmem:[%s12 + $0xc80] sm:$0xff]
  %v3718 = vld [vmem:[%s12 + $0xc88] sm:$0xff]
  %v3719 = vld [vmem:[%s12 + $0xc90] sm:$0xf]
  %v3720 = vld [vmem:[%s12 + $0xc94] sm:$0xff]
  %v3721 = vld [vmem:[%s12 + $0xc9c] sm:$0xff]
  %v3722 = vld [vmem:[%s12 + $0xca4] sm:$0xff]
  %v3723 = vld [vmem:[%s12 + $0xcac] sm:$0xf]
  %v3724 = vld [vmem:[%s12 + $0xcb0] sm:$0xff]
  %v3725 = vld [vmem:[%s12 + $0xcb8] sm:$0xff]
  %v3726 = vld [vmem:[%s12 + $0xcc0] sm:$0xff]
  %v3727 = vld [vmem:[%s12 + $0xcc8] sm:$0xf]
  %v3728 = vld [vmem:[%s12 + $0xccc] sm:$0xff]
  %v3729 = vld [vmem:[%s12 + $0xcd4] sm:$0xff]
  %v3730 = vld [vmem:[%s12 + $0xcdc] sm:$0xff]
  %v3731 = vld [vmem:[%s12 + $0xce4] sm:$0xf]
  %v3732 = vld [vmem:[%s12 + $0xce8] sm:$0xff]
  %v3733 = vld [vmem:[%s12 + $0xcf0] sm:$0xff]
  %v3734 = vld [vmem:[%s12 + $0xcf8] sm:$0xff]
  %v3735 = vld [vmem:[%s12 + $0xd00] sm:$0xf]
  %v3736 = vld [vmem:[%s12 + $0xd04] sm:$0xff]
  %v3737 = vld [vmem:[%s12 + $0xd0c] sm:$0xff]
  %v3738 = vld [vmem:[%s12 + $0xd14] sm:$0xff]
  %v3739 = vld [vmem:[%s12 + $0xd1c] sm:$0xf]
  %v3740 = vld [vmem:[%s12 + $0xd20] sm:$0xff]
  %v3741 = vld [vmem:[%s12 + $0xd28] sm:$0xff]
  %v3742 = vld [vmem:[%s12 + $0xd30] sm:$0xff]
  %v3743 = vld [vmem:[%s12 + $0xd38] sm:$0xf]
  %v3744 = vld [vmem:[%s12 + $0xd3c] sm:$0xff]
  %v3745 = vld [vmem:[%s12 + $0xd44] sm:$0xff]
  %v3746 = vld [vmem:[%s12 + $0xd4c] sm:$0xff]
  %v3747 = vld [vmem:[%s12 + $0xd54] sm:$0xf]
  %v3748 = vld [vmem:[%s12 + $0xd58] sm:$0xff]
  %v3749 = vld [vmem:[%s12 + $0xd60] sm:$0xff]
  %v3750 = vld [vmem:[%s12 + $0xd68] sm:$0xff]
  %v3751 = vld [vmem:[%s12 + $0xd70] sm:$0xf]
  %v3752 = vld [vmem:[%s12 + $0xd74] sm:$0xff]
  %v3753 = vld [vmem:[%s12 + $0xd7c] sm:$0xff]
  %v3754 = vld [vmem:[%s12 + $0xd84] sm:$0xff]
  %v3755 = vld [vmem:[%s12 + $0xd8c] sm:$0xf]
  %v3756 = vld [vmem:[%s12 + $0xd90] sm:$0xff]
  %v3757 = vld [vmem:[%s12 + $0xd98] sm:$0xff]
  %v3758 = vld [vmem:[%s12 + $0xda0] sm:$0xff]
  %v3759 = vld [vmem:[%s12 + $0xda8] sm:$0xf]
  %v3760 = vld [vmem:[%s12 + $0xdac] sm:$0xff]
  %v3761 = vld [vmem:[%s12 + $0xdb4] sm:$0xff]
  %v3762 = vld [vmem:[%s12 + $0xdbc] sm:$0xff]
  %v3763 = vld [vmem:[%s12 + $0xdc4] sm:$0xf]
  %v3764 = vld [vmem:[%s12 + $0xdc8] sm:$0xff]
  %v3765 = vld [vmem:[%s12 + $0xdd0] sm:$0xff]
  %v3766 = vld [vmem:[%s12 + $0xdd8] sm:$0xff]
  %v3767 = vld [vmem:[%s12 + $0xde0] sm:$0xf]
  %v3768 = vld [vmem:[%s12 + $0xde4] sm:$0xff]
  %v3769 = vld [vmem:[%s12 + $0xdec] sm:$0xff]
  %v3770 = vld [vmem:[%s12 + $0xdf4] sm:$0xff]
  %v3771 = vld [vmem:[%s12 + $0xdfc] sm:$0xf]
  %v3772 = vld [vmem:[%s13] sm:$0x7f]
  %v3774 = vperm.slane %v3772, 0
  %v3775 = vperm.slane %v3772, 1
  %v3776 = vperm.slane %v3772, 2
  %v3777 = vperm.slane %v3772, 3
  %v3778 = vperm.slane %v3772, 4
  %v3779 = vperm.slane %v3772, 5
  %v3780 = vperm.slane %v3772, 6
  %v4300 = vunpack.c.l.b16 %v3260
  %v4301 = vunpack.c.h.b16 %v3260
  %v4302 = vunpack.c.l.b16 %v3261
  %v4303 = vunpack.c.h.b16 %v3261
  %v4304 = vunpack.c.l.b16 %v3262
  %v4305 = vunpack.c.h.b16 %v3262
  %v4306 = vunpack.c.l.b16 %v3263
  %v4307 = vunpack.c.l.b16 %v3264
  %v4308 = vunpack.c.h.b16 %v3264
  %v4309 = vunpack.c.l.b16 %v3265
  %v4310 = vunpack.c.h.b16 %v3265
  %v4311 = vunpack.c.l.b16 %v3266
  %v4312 = vunpack.c.h.b16 %v3266
  %v4313 = vunpack.c.l.b16 %v3267
  %v4314 = vunpack.c.l.b16 %v3268
  %v4315 = vunpack.c.h.b16 %v3268
  %v4316 = vunpack.c.l.b16 %v3269
  %v4317 = vunpack.c.h.b16 %v3269
  %v4318 = vunpack.c.l.b16 %v3270
  %v4319 = vunpack.c.h.b16 %v3270
  %v4320 = vunpack.c.l.b16 %v3271
  %v4321 = vunpack.c.l.b16 %v3272
  %v4322 = vunpack.c.h.b16 %v3272
  %v4323 = vunpack.c.l.b16 %v3273
  %v4324 = vunpack.c.h.b16 %v3273
  %v4325 = vunpack.c.l.b16 %v3274
  %v4326 = vunpack.c.h.b16 %v3274
  %v4327 = vunpack.c.l.b16 %v3275
  %v4328 = vunpack.c.l.b16 %v3276
  %v4329 = vunpack.c.h.b16 %v3276
  %v4330 = vunpack.c.l.b16 %v3277
  %v4331 = vunpack.c.h.b16 %v3277
  %v4332 = vunpack.c.l.b16 %v3278
  %v4333 = vunpack.c.h.b16 %v3278
  %v4334 = vunpack.c.l.b16 %v3279
  %v4335 = vunpack.c.l.b16 %v3280
  %v4336 = vunpack.c.h.b16 %v3280
  %v4337 = vunpack.c.l.b16 %v3281
  %v4338 = vunpack.c.h.b16 %v3281
  %v4339 = vunpack.c.l.b16 %v3282
  %v4340 = vunpack.c.h.b16 %v3282
  %v4341 = vunpack.c.l.b16 %v3283
  %v4342 = vunpack.c.l.b16 %v3284
  %v4343 = vunpack.c.h.b16 %v3284
  %v4344 = vunpack.c.l.b16 %v3285
  %v4345 = vunpack.c.h.b16 %v3285
  %v4346 = vunpack.c.l.b16 %v3286
  %v4347 = vunpack.c.h.b16 %v3286
  %v4348 = vunpack.c.l.b16 %v3287
  %v4349 = vunpack.c.l.b16 %v3288
  %v4350 = vunpack.c.h.b16 %v3288
  %v4351 = vunpack.c.l.b16 %v3289
  %v4352 = vunpack.c.h.b16 %v3289
  %v4353 = vunpack.c.l.b16 %v3290
  %v4354 = vunpack.c.h.b16 %v3290
  %v4355 = vunpack.c.l.b16 %v3291
  %v4356 = vunpack.c.l.b16 %v3292
  %v4357 = vunpack.c.h.b16 %v3292
  %v4358 = vunpack.c.l.b16 %v3293
  %v4359 = vunpack.c.h.b16 %v3293
  %v4360 = vunpack.c.l.b16 %v3294
  %v4361 = vunpack.c.h.b16 %v3294
  %v4362 = vunpack.c.l.b16 %v3295
  %v4363 = vunpack.c.l.b16 %v3296
  %v4364 = vunpack.c.h.b16 %v3296
  %v4365 = vunpack.c.l.b16 %v3297
  %v4366 = vunpack.c.h.b16 %v3297
  %v4367 = vunpack.c.l.b16 %v3298
  %v4368 = vunpack.c.h.b16 %v3298
  %v4369 = vunpack.c.l.b16 %v3299
  %v4370 = vunpack.c.l.b16 %v3300
  %v4371 = vunpack.c.h.b16 %v3300
  %v4372 = vunpack.c.l.b16 %v3301
  %v4373 = vunpack.c.h.b16 %v3301
  %v4374 = vunpack.c.l.b16 %v3302
  %v4375 = vunpack.c.h.b16 %v3302
  %v4376 = vunpack.c.l.b16 %v3303
  %v4377 = vunpack.c.l.b16 %v3304
  %v4378 = vunpack.c.h.b16 %v3304
  %v4379 = vunpack.c.l.b16 %v3305
  %v4380 = vunpack.c.h.b16 %v3305
  %v4381 = vunpack.c.l.b16 %v3306
  %v4382 = vunpack.c.h.b16 %v3306
  %v4383 = vunpack.c.l.b16 %v3307
  %v4384 = vunpack.c.l.b16 %v3308
  %v4385 = vunpack.c.h.b16 %v3308
  %v4386 = vunpack.c.l.b16 %v3309
  %v4387 = vunpack.c.h.b16 %v3309
  %v4388 = vunpack.c.l.b16 %v3310
  %v4389 = vunpack.c.h.b16 %v3310
  %v4390 = vunpack.c.l.b16 %v3311
  %v4391 = vunpack.c.l.b16 %v3312
  %v4392 = vunpack.c.h.b16 %v3312
  %v4393 = vunpack.c.l.b16 %v3313
  %v4394 = vunpack.c.h.b16 %v3313
  %v4395 = vunpack.c.l.b16 %v3314
  %v4396 = vunpack.c.h.b16 %v3314
  %v4397 = vunpack.c.l.b16 %v3315
  %v4398 = vunpack.c.l.b16 %v3316
  %v4399 = vunpack.c.h.b16 %v3316
  %v4400 = vunpack.c.l.b16 %v3317
  %v4401 = vunpack.c.h.b16 %v3317
  %v4402 = vunpack.c.l.b16 %v3318
  %v4403 = vunpack.c.h.b16 %v3318
  %v4404 = vunpack.c.l.b16 %v3319
  %v4405 = vunpack.c.l.b16 %v3320
  %v4406 = vunpack.c.h.b16 %v3320
  %v4407 = vunpack.c.l.b16 %v3321
  %v4408 = vunpack.c.h.b16 %v3321
  %v4409 = vunpack.c.l.b16 %v3322
  %v4410 = vunpack.c.h.b16 %v3322
  %v4411 = vunpack.c.l.b16 %v3323
  %v4412 = vunpack.c.l.b16 %v3324
  %v4413 = vunpack.c.h.b16 %v3324
  %v4414 = vunpack.c.l.b16 %v3325
  %v4415 = vunpack.c.h.b16 %v3325
  %v4416 = vunpack.c.l.b16 %v3326
  %v4417 = vunpack.c.h.b16 %v3326
  %v4418 = vunpack.c.l.b16 %v3327
  %v4419 = vunpack.c.l.b16 %v3328
  %v4420 = vunpack.c.h.b16 %v3328
  %v4421 = vunpack.c.l.b16 %v3329
  %v4422 = vunpack.c.h.b16 %v3329
  %v4423 = vunpack.c.l.b16 %v3330
  %v4424 = vunpack.c.h.b16 %v3330
  %v4425 = vunpack.c.l.b16 %v3331
  %v4426 = vunpack.c.l.b16 %v3332
  %v4427 = vunpack.c.h.b16 %v3332
  %v4428 = vunpack.c.l.b16 %v3333
  %v4429 = vunpack.c.h.b16 %v3333
  %v4430 = vunpack.c.l.b16 %v3334
  %v4431 = vunpack.c.h.b16 %v3334
  %v4432 = vunpack.c.l.b16 %v3335
  %v4433 = vunpack.c.l.b16 %v3336
  %v4434 = vunpack.c.h.b16 %v3336
  %v4435 = vunpack.c.l.b16 %v3337
  %v4436 = vunpack.c.h.b16 %v3337
  %v4437 = vunpack.c.l.b16 %v3338
  %v4438 = vunpack.c.h.b16 %v3338
  %v4439 = vunpack.c.l.b16 %v3339
  %v4440 = vunpack.c.l.b16 %v3340
  %v4441 = vunpack.c.h.b16 %v3340
  %v4442 = vunpack.c.l.b16 %v3341
  %v4443 = vunpack.c.h.b16 %v3341
  %v4444 = vunpack.c.l.b16 %v3342
  %v4445 = vunpack.c.h.b16 %v3342
  %v4446 = vunpack.c.l.b16 %v3343
  %v4447 = vunpack.c.l.b16 %v3344
  %v4448 = vunpack.c.h.b16 %v3344
  %v4449 = vunpack.c.l.b16 %v3345
  %v4450 = vunpack.c.h.b16 %v3345
  %v4451 = vunpack.c.l.b16 %v3346
  %v4452 = vunpack.c.h.b16 %v3346
  %v4453 = vunpack.c.l.b16 %v3347
  %v4454 = vunpack.c.l.b16 %v3348
  %v4455 = vunpack.c.h.b16 %v3348
  %v4456 = vunpack.c.l.b16 %v3349
  %v4457 = vunpack.c.h.b16 %v3349
  %v4458 = vunpack.c.l.b16 %v3350
  %v4459 = vunpack.c.h.b16 %v3350
  %v4460 = vunpack.c.l.b16 %v3351
  %v4461 = vunpack.c.l.b16 %v3352
  %v4462 = vunpack.c.h.b16 %v3352
  %v4463 = vunpack.c.l.b16 %v3353
  %v4464 = vunpack.c.h.b16 %v3353
  %v4465 = vunpack.c.l.b16 %v3354
  %v4466 = vunpack.c.h.b16 %v3354
  %v4467 = vunpack.c.l.b16 %v3355
  %v4468 = vunpack.c.l.b16 %v3356
  %v4469 = vunpack.c.h.b16 %v3356
  %v4470 = vunpack.c.l.b16 %v3357
  %v4471 = vunpack.c.h.b16 %v3357
  %v4472 = vunpack.c.l.b16 %v3358
  %v4473 = vunpack.c.h.b16 %v3358
  %v4474 = vunpack.c.l.b16 %v3359
  %v4475 = vunpack.c.l.b16 %v3360
  %v4476 = vunpack.c.h.b16 %v3360
  %v4477 = vunpack.c.l.b16 %v3361
  %v4478 = vunpack.c.h.b16 %v3361
  %v4479 = vunpack.c.l.b16 %v3362
  %v4480 = vunpack.c.h.b16 %v3362
  %v4481 = vunpack.c.l.b16 %v3363
  %v4482 = vunpack.c.l.b16 %v3364
  %v4483 = vunpack.c.h.b16 %v3364
  %v4484 = vunpack.c.l.b16 %v3365
  %v4485 = vunpack.c.h.b16 %v3365
  %v4486 = vunpack.c.l.b16 %v3366
  %v4487 = vunpack.c.h.b16 %v3366
  %v4488 = vunpack.c.l.b16 %v3367
  %v4489 = vunpack.c.l.b16 %v3368
  %v4490 = vunpack.c.h.b16 %v3368
  %v4491 = vunpack.c.l.b16 %v3369
  %v4492 = vunpack.c.h.b16 %v3369
  %v4493 = vunpack.c.l.b16 %v3370
  %v4494 = vunpack.c.h.b16 %v3370
  %v4495 = vunpack.c.l.b16 %v3371
  %v4496 = vunpack.c.l.b16 %v3372
  %v4497 = vunpack.c.h.b16 %v3372
  %v4498 = vunpack.c.l.b16 %v3373
  %v4499 = vunpack.c.h.b16 %v3373
  %v4500 = vunpack.c.l.b16 %v3374
  %v4501 = vunpack.c.h.b16 %v3374
  %v4502 = vunpack.c.l.b16 %v3375
  %v4503 = vunpack.c.l.b16 %v3376
  %v4504 = vunpack.c.h.b16 %v3376
  %v4505 = vunpack.c.l.b16 %v3377
  %v4506 = vunpack.c.h.b16 %v3377
  %v4507 = vunpack.c.l.b16 %v3378
  %v4508 = vunpack.c.h.b16 %v3378
  %v4509 = vunpack.c.l.b16 %v3379
  %v4510 = vunpack.c.l.b16 %v3380
  %v4511 = vunpack.c.h.b16 %v3380
  %v4512 = vunpack.c.l.b16 %v3381
  %v4513 = vunpack.c.h.b16 %v3381
  %v4514 = vunpack.c.l.b16 %v3382
  %v4515 = vunpack.c.h.b16 %v3382
  %v4516 = vunpack.c.l.b16 %v3383
  %v4517 = vunpack.c.l.b16 %v3384
  %v4518 = vunpack.c.h.b16 %v3384
  %v4519 = vunpack.c.l.b16 %v3385
  %v4520 = vunpack.c.h.b16 %v3385
  %v4521 = vunpack.c.l.b16 %v3386
  %v4522 = vunpack.c.h.b16 %v3386
  %v4523 = vunpack.c.l.b16 %v3387
  %v4524 = vunpack.c.l.b16 %v3388
  %v4525 = vunpack.c.h.b16 %v3388
  %v4526 = vunpack.c.l.b16 %v3389
  %v4527 = vunpack.c.h.b16 %v3389
  %v4528 = vunpack.c.l.b16 %v3390
  %v4529 = vunpack.c.h.b16 %v3390
  %v4530 = vunpack.c.l.b16 %v3391
  %v4531 = vunpack.c.l.b16 %v3392
  %v4532 = vunpack.c.h.b16 %v3392
  %v4533 = vunpack.c.l.b16 %v3393
  %v4534 = vunpack.c.h.b16 %v3393
  %v4535 = vunpack.c.l.b16 %v3394
  %v4536 = vunpack.c.h.b16 %v3394
  %v4537 = vunpack.c.l.b16 %v3395
  %v4538 = vunpack.c.l.b16 %v3396
  %v4539 = vunpack.c.h.b16 %v3396
  %v4540 = vunpack.c.l.b16 %v3397
  %v4541 = vunpack.c.h.b16 %v3397
  %v4542 = vunpack.c.l.b16 %v3398
  %v4543 = vunpack.c.h.b16 %v3398
  %v4544 = vunpack.c.l.b16 %v3399
  %v4545 = vunpack.c.l.b16 %v3400
  %v4546 = vunpack.c.h.b16 %v3400
  %v4547 = vunpack.c.l.b16 %v3401
  %v4548 = vunpack.c.h.b16 %v3401
  %v4549 = vunpack.c.l.b16 %v3402
  %v4550 = vunpack.c.h.b16 %v3402
  %v4551 = vunpack.c.l.b16 %v3403
  %v4552 = vunpack.c.l.b16 %v3404
  %v4553 = vunpack.c.h.b16 %v3404
  %v4554 = vunpack.c.l.b16 %v3405
  %v4555 = vunpack.c.h.b16 %v3405
  %v4556 = vunpack.c.l.b16 %v3406
  %v4557 = vunpack.c.h.b16 %v3406
  %v4558 = vunpack.c.l.b16 %v3407
  %v4559 = vunpack.c.l.b16 %v3408
  %v4560 = vunpack.c.h.b16 %v3408
  %v4561 = vunpack.c.l.b16 %v3409
  %v4562 = vunpack.c.h.b16 %v3409
  %v4563 = vunpack.c.l.b16 %v3410
  %v4564 = vunpack.c.h.b16 %v3410
  %v4565 = vunpack.c.l.b16 %v3411
  %v4566 = vunpack.c.l.b16 %v3412
  %v4567 = vunpack.c.h.b16 %v3412
  %v4568 = vunpack.c.l.b16 %v3413
  %v4569 = vunpack.c.h.b16 %v3413
  %v4570 = vunpack.c.l.b16 %v3414
  %v4571 = vunpack.c.h.b16 %v3414
  %v4572 = vunpack.c.l.b16 %v3415
  %v4573 = vunpack.c.l.b16 %v3416
  %v4574 = vunpack.c.h.b16 %v3416
  %v4575 = vunpack.c.l.b16 %v3417
  %v4576 = vunpack.c.h.b16 %v3417
  %v4577 = vunpack.c.l.b16 %v3418
  %v4578 = vunpack.c.h.b16 %v3418
  %v4579 = vunpack.c.l.b16 %v3419
  %v4580 = vunpack.c.l.b16 %v3420
  %v4581 = vunpack.c.h.b16 %v3420
  %v4582 = vunpack.c.l.b16 %v3421
  %v4583 = vunpack.c.h.b16 %v3421
  %v4584 = vunpack.c.l.b16 %v3422
  %v4585 = vunpack.c.h.b16 %v3422
  %v4586 = vunpack.c.l.b16 %v3423
  %v4587 = vunpack.c.l.b16 %v3424
  %v4588 = vunpack.c.h.b16 %v3424
  %v4589 = vunpack.c.l.b16 %v3425
  %v4590 = vunpack.c.h.b16 %v3425
  %v4591 = vunpack.c.l.b16 %v3426
  %v4592 = vunpack.c.h.b16 %v3426
  %v4593 = vunpack.c.l.b16 %v3427
  %v4594 = vunpack.c.l.b16 %v3428
  %v4595 = vunpack.c.h.b16 %v3428
  %v4596 = vunpack.c.l.b16 %v3429
  %v4597 = vunpack.c.h.b16 %v3429
  %v4598 = vunpack.c.l.b16 %v3430
  %v4599 = vunpack.c.h.b16 %v3430
  %v4600 = vunpack.c.l.b16 %v3431
  %v4601 = vunpack.c.l.b16 %v3432
  %v4602 = vunpack.c.h.b16 %v3432
  %v4603 = vunpack.c.l.b16 %v3433
  %v4604 = vunpack.c.h.b16 %v3433
  %v4605 = vunpack.c.l.b16 %v3434
  %v4606 = vunpack.c.h.b16 %v3434
  %v4607 = vunpack.c.l.b16 %v3435
  %v4608 = vunpack.c.l.b16 %v3436
  %v4609 = vunpack.c.h.b16 %v3436
  %v4610 = vunpack.c.l.b16 %v3437
  %v4611 = vunpack.c.h.b16 %v3437
  %v4612 = vunpack.c.l.b16 %v3438
  %v4613 = vunpack.c.h.b16 %v3438
  %v4614 = vunpack.c.l.b16 %v3439
  %v4615 = vunpack.c.l.b16 %v3440
  %v4616 = vunpack.c.h.b16 %v3440
  %v4617 = vunpack.c.l.b16 %v3441
  %v4618 = vunpack.c.h.b16 %v3441
  %v4619 = vunpack.c.l.b16 %v3442
  %v4620 = vunpack.c.h.b16 %v3442
  %v4621 = vunpack.c.l.b16 %v3443
  %v4622 = vunpack.c.l.b16 %v3444
  %v4623 = vunpack.c.h.b16 %v3444
  %v4624 = vunpack.c.l.b16 %v3445
  %v4625 = vunpack.c.h.b16 %v3445
  %v4626 = vunpack.c.l.b16 %v3446
  %v4627 = vunpack.c.h.b16 %v3446
  %v4628 = vunpack.c.l.b16 %v3447
  %v4629 = vunpack.c.l.b16 %v3448
  %v4630 = vunpack.c.h.b16 %v3448
  %v4631 = vunpack.c.l.b16 %v3449
  %v4632 = vunpack.c.h.b16 %v3449
  %v4633 = vunpack.c.l.b16 %v3450
  %v4634 = vunpack.c.h.b16 %v3450
  %v4635 = vunpack.c.l.b16 %v3451
  %v4636 = vunpack.c.l.b16 %v3452
  %v4637 = vunpack.c.h.b16 %v3452
  %v4638 = vunpack.c.l.b16 %v3453
  %v4639 = vunpack.c.h.b16 %v3453
  %v4640 = vunpack.c.l.b16 %v3454
  %v4641 = vunpack.c.h.b16 %v3454
  %v4642 = vunpack.c.l.b16 %v3455
  %v4643 = vunpack.c.l.b16 %v3456
  %v4644 = vunpack.c.h.b16 %v3456
  %v4645 = vunpack.c.l.b16 %v3457
  %v4646 = vunpack.c.h.b16 %v3457
  %v4647 = vunpack.c.l.b16 %v3458
  %v4648 = vunpack.c.h.b16 %v3458
  %v4649 = vunpack.c.l.b16 %v3459
  %v4650 = vunpack.c.l.b16 %v3460
  %v4651 = vunpack.c.h.b16 %v3460
  %v4652 = vunpack.c.l.b16 %v3461
  %v4653 = vunpack.c.h.b16 %v3461
  %v4654 = vunpack.c.l.b16 %v3462
  %v4655 = vunpack.c.h.b16 %v3462
  %v4656 = vunpack.c.l.b16 %v3463
  %v4657 = vunpack.c.l.b16 %v3464
  %v4658 = vunpack.c.h.b16 %v3464
  %v4659 = vunpack.c.l.b16 %v3465
  %v4660 = vunpack.c.h.b16 %v3465
  %v4661 = vunpack.c.l.b16 %v3466
  %v4662 = vunpack.c.h.b16 %v3466
  %v4663 = vunpack.c.l.b16 %v3467
  %v4664 = vunpack.c.l.b16 %v3468
  %v4665 = vunpack.c.h.b16 %v3468
  %v4666 = vunpack.c.l.b16 %v3469
  %v4667 = vunpack.c.h.b16 %v3469
  %v4668 = vunpack.c.l.b16 %v3470
  %v4669 = vunpack.c.h.b16 %v3470
  %v4670 = vunpack.c.l.b16 %v3471
  %v4671 = vunpack.c.l.b16 %v3472
  %v4672 = vunpack.c.h.b16 %v3472
  %v4673 = vunpack.c.l.b16 %v3473
  %v4674 = vunpack.c.h.b16 %v3473
  %v4675 = vunpack.c.l.b16 %v3474
  %v4676 = vunpack.c.h.b16 %v3474
  %v4677 = vunpack.c.l.b16 %v3475
  %v4678 = vunpack.c.l.b16 %v3476
  %v4679 = vunpack.c.h.b16 %v3476
  %v4680 = vunpack.c.l.b16 %v3477
  %v4681 = vunpack.c.h.b16 %v3477
  %v4682 = vunpack.c.l.b16 %v3478
  %v4683 = vunpack.c.h.b16 %v3478
  %v4684 = vunpack.c.l.b16 %v3479
  %v4685 = vunpack.c.l.b16 %v3480
  %v4686 = vunpack.c.h.b16 %v3480
  %v4687 = vunpack.c.l.b16 %v3481
  %v4688 = vunpack.c.h.b16 %v3481
  %v4689 = vunpack.c.l.b16 %v3482
  %v4690 = vunpack.c.h.b16 %v3482
  %v4691 = vunpack.c.l.b16 %v3483
  %v4692 = vunpack.c.l.b16 %v3484
  %v4693 = vunpack.c.h.b16 %v3484
  %v4694 = vunpack.c.l.b16 %v3485
  %v4695 = vunpack.c.h.b16 %v3485
  %v4696 = vunpack.c.l.b16 %v3486
  %v4697 = vunpack.c.h.b16 %v3486
  %v4698 = vunpack.c.l.b16 %v3487
  %v4699 = vunpack.c.l.b16 %v3488
  %v4700 = vunpack.c.h.b16 %v3488
  %v4701 = vunpack.c.l.b16 %v3489
  %v4702 = vunpack.c.h.b16 %v3489
  %v4703 = vunpack.c.l.b16 %v3490
  %v4704 = vunpack.c.h.b16 %v3490
  %v4705 = vunpack.c.l.b16 %v3491
  %v4706 = vunpack.c.l.b16 %v3492
  %v4707 = vunpack.c.h.b16 %v3492
  %v4708 = vunpack.c.l.b16 %v3493
  %v4709 = vunpack.c.h.b16 %v3493
  %v4710 = vunpack.c.l.b16 %v3494
  %v4711 = vunpack.c.h.b16 %v3494
  %v4712 = vunpack.c.l.b16 %v3495
  %v4713 = vunpack.c.l.b16 %v3496
  %v4714 = vunpack.c.h.b16 %v3496
  %v4715 = vunpack.c.l.b16 %v3497
  %v4716 = vunpack.c.h.b16 %v3497
  %v4717 = vunpack.c.l.b16 %v3498
  %v4718 = vunpack.c.h.b16 %v3498
  %v4719 = vunpack.c.l.b16 %v3499
  %v4720 = vunpack.c.l.b16 %v3500
  %v4721 = vunpack.c.h.b16 %v3500
  %v4722 = vunpack.c.l.b16 %v3501
  %v4723 = vunpack.c.h.b16 %v3501
  %v4724 = vunpack.c.l.b16 %v3502
  %v4725 = vunpack.c.h.b16 %v3502
  %v4726 = vunpack.c.l.b16 %v3503
  %v4727 = vunpack.c.l.b16 %v3504
  %v4728 = vunpack.c.h.b16 %v3504
  %v4729 = vunpack.c.l.b16 %v3505
  %v4730 = vunpack.c.h.b16 %v3505
  %v4731 = vunpack.c.l.b16 %v3506
  %v4732 = vunpack.c.h.b16 %v3506
  %v4733 = vunpack.c.l.b16 %v3507
  %v4734 = vunpack.c.l.b16 %v3508
  %v4735 = vunpack.c.h.b16 %v3508
  %v4736 = vunpack.c.l.b16 %v3509
  %v4737 = vunpack.c.h.b16 %v3509
  %v4738 = vunpack.c.l.b16 %v3510
  %v4739 = vunpack.c.h.b16 %v3510
  %v4740 = vunpack.c.l.b16 %v3511
  %v4741 = vunpack.c.l.b16 %v3512
  %v4742 = vunpack.c.h.b16 %v3512
  %v4743 = vunpack.c.l.b16 %v3513
  %v4744 = vunpack.c.h.b16 %v3513
  %v4745 = vunpack.c.l.b16 %v3514
  %v4746 = vunpack.c.h.b16 %v3514
  %v4747 = vunpack.c.l.b16 %v3515
  %v4748 = vunpack.c.l.b16 %v3516
  %v4749 = vunpack.c.h.b16 %v3516
  %v4750 = vunpack.c.l.b16 %v3517
  %v4751 = vunpack.c.h.b16 %v3517
  %v4752 = vunpack.c.l.b16 %v3518
  %v4753 = vunpack.c.h.b16 %v3518
  %v4754 = vunpack.c.l.b16 %v3519
  %v4755 = vunpack.c.l.b16 %v3520
  %v4756 = vunpack.c.h.b16 %v3520
  %v4757 = vunpack.c.l.b16 %v3521
  %v4758 = vunpack.c.h.b16 %v3521
  %v4759 = vunpack.c.l.b16 %v3522
  %v4760 = vunpack.c.h.b16 %v3522
  %v4761 = vunpack.c.l.b16 %v3523
  %v4762 = vunpack.c.l.b16 %v3524
  %v4763 = vunpack.c.h.b16 %v3524
  %v4764 = vunpack.c.l.b16 %v3525
  %v4765 = vunpack.c.h.b16 %v3525
  %v4766 = vunpack.c.l.b16 %v3526
  %v4767 = vunpack.c.h.b16 %v3526
  %v4768 = vunpack.c.l.b16 %v3527
  %v4769 = vunpack.c.l.b16 %v3528
  %v4770 = vunpack.c.h.b16 %v3528
  %v4771 = vunpack.c.l.b16 %v3529
  %v4772 = vunpack.c.h.b16 %v3529
  %v4773 = vunpack.c.l.b16 %v3530
  %v4774 = vunpack.c.h.b16 %v3530
  %v4775 = vunpack.c.l.b16 %v3531
  %v4776 = vunpack.c.l.b16 %v3532
  %v4777 = vunpack.c.h.b16 %v3532
  %v4778 = vunpack.c.l.b16 %v3533
  %v4779 = vunpack.c.h.b16 %v3533
  %v4780 = vunpack.c.l.b16 %v3534
  %v4781 = vunpack.c.h.b16 %v3534
  %v4782 = vunpack.c.l.b16 %v3535
  %v4783 = vunpack.c.l.b16 %v3536
  %v4784 = vunpack.c.h.b16 %v3536
  %v4785 = vunpack.c.l.b16 %v3537
  %v4786 = vunpack.c.h.b16 %v3537
  %v4787 = vunpack.c.l.b16 %v3538
  %v4788 = vunpack.c.h.b16 %v3538
  %v4789 = vunpack.c.l.b16 %v3539
  %v4790 = vunpack.c.l.b16 %v3540
  %v4791 = vunpack.c.h.b16 %v3540
  %v4792 = vunpack.c.l.b16 %v3541
  %v4793 = vunpack.c.h.b16 %v3541
  %v4794 = vunpack.c.l.b16 %v3542
  %v4795 = vunpack.c.h.b16 %v3542
  %v4796 = vunpack.c.l.b16 %v3543
  %v4797 = vunpack.c.l.b16 %v3544
  %v4798 = vunpack.c.h.b16 %v3544
  %v4799 = vunpack.c.l.b16 %v3545
  %v4800 = vunpack.c.h.b16 %v3545
  %v4801 = vunpack.c.l.b16 %v3546
  %v4802 = vunpack.c.h.b16 %v3546
  %v4803 = vunpack.c.l.b16 %v3547
  %v4804 = vunpack.c.l.b16 %v3548
  %v4805 = vunpack.c.h.b16 %v3548
  %v4806 = vunpack.c.l.b16 %v3549
  %v4807 = vunpack.c.h.b16 %v3549
  %v4808 = vunpack.c.l.b16 %v3550
  %v4809 = vunpack.c.h.b16 %v3550
  %v4810 = vunpack.c.l.b16 %v3551
  %v4811 = vunpack.c.l.b16 %v3552
  %v4812 = vunpack.c.h.b16 %v3552
  %v4813 = vunpack.c.l.b16 %v3553
  %v4814 = vunpack.c.h.b16 %v3553
  %v4815 = vunpack.c.l.b16 %v3554
  %v4816 = vunpack.c.h.b16 %v3554
  %v4817 = vunpack.c.l.b16 %v3555
  %v4818 = vunpack.c.l.b16 %v3556
  %v4819 = vunpack.c.h.b16 %v3556
  %v4820 = vunpack.c.l.b16 %v3557
  %v4821 = vunpack.c.h.b16 %v3557
  %v4822 = vunpack.c.l.b16 %v3558
  %v4823 = vunpack.c.h.b16 %v3558
  %v4824 = vunpack.c.l.b16 %v3559
  %v4825 = vunpack.c.l.b16 %v3560
  %v4826 = vunpack.c.h.b16 %v3560
  %v4827 = vunpack.c.l.b16 %v3561
  %v4828 = vunpack.c.h.b16 %v3561
  %v4829 = vunpack.c.l.b16 %v3562
  %v4830 = vunpack.c.h.b16 %v3562
  %v4831 = vunpack.c.l.b16 %v3563
  %v4832 = vunpack.c.l.b16 %v3564
  %v4833 = vunpack.c.h.b16 %v3564
  %v4834 = vunpack.c.l.b16 %v3565
  %v4835 = vunpack.c.h.b16 %v3565
  %v4836 = vunpack.c.l.b16 %v3566
  %v4837 = vunpack.c.h.b16 %v3566
  %v4838 = vunpack.c.l.b16 %v3567
  %v4839 = vunpack.c.l.b16 %v3568
  %v4840 = vunpack.c.h.b16 %v3568
  %v4841 = vunpack.c.l.b16 %v3569
  %v4842 = vunpack.c.h.b16 %v3569
  %v4843 = vunpack.c.l.b16 %v3570
  %v4844 = vunpack.c.h.b16 %v3570
  %v4845 = vunpack.c.l.b16 %v3571
  %v4846 = vunpack.c.l.b16 %v3572
  %v4847 = vunpack.c.h.b16 %v3572
  %v4848 = vunpack.c.l.b16 %v3573
  %v4849 = vunpack.c.h.b16 %v3573
  %v4850 = vunpack.c.l.b16 %v3574
  %v4851 = vunpack.c.h.b16 %v3574
  %v4852 = vunpack.c.l.b16 %v3575
  %v4853 = vunpack.c.l.b16 %v3576
  %v4854 = vunpack.c.h.b16 %v3576
  %v4855 = vunpack.c.l.b16 %v3577
  %v4856 = vunpack.c.h.b16 %v3577
  %v4857 = vunpack.c.l.b16 %v3578
  %v4858 = vunpack.c.h.b16 %v3578
  %v4859 = vunpack.c.l.b16 %v3579
  %v4860 = vunpack.c.l.b16 %v3580
  %v4861 = vunpack.c.h.b16 %v3580
  %v4862 = vunpack.c.l.b16 %v3581
  %v4863 = vunpack.c.h.b16 %v3581
  %v4864 = vunpack.c.l.b16 %v3582
  %v4865 = vunpack.c.h.b16 %v3582
  %v4866 = vunpack.c.l.b16 %v3583
  %v4867 = vunpack.c.l.b16 %v3584
  %v4868 = vunpack.c.h.b16 %v3584
  %v4869 = vunpack.c.l.b16 %v3585
  %v4870 = vunpack.c.h.b16 %v3585
  %v4871 = vunpack.c.l.b16 %v3586
  %v4872 = vunpack.c.h.b16 %v3586
  %v4873 = vunpack.c.l.b16 %v3587
  %v4874 = vunpack.c.l.b16 %v3588
  %v4875 = vunpack.c.h.b16 %v3588
  %v4876 = vunpack.c.l.b16 %v3589
  %v4877 = vunpack.c.h.b16 %v3589
  %v4878 = vunpack.c.l.b16 %v3590
  %v4879 = vunpack.c.h.b16 %v3590
  %v4880 = vunpack.c.l.b16 %v3591
  %v4881 = vunpack.c.l.b16 %v3592
  %v4882 = vunpack.c.h.b16 %v3592
  %v4883 = vunpack.c.l.b16 %v3593
  %v4884 = vunpack.c.h.b16 %v3593
  %v4885 = vunpack.c.l.b16 %v3594
  %v4886 = vunpack.c.h.b16 %v3594
  %v4887 = vunpack.c.l.b16 %v3595
  %v4888 = vunpack.c.l.b16 %v3596
  %v4889 = vunpack.c.h.b16 %v3596
  %v4890 = vunpack.c.l.b16 %v3597
  %v4891 = vunpack.c.h.b16 %v3597
  %v4892 = vunpack.c.l.b16 %v3598
  %v4893 = vunpack.c.h.b16 %v3598
  %v4894 = vunpack.c.l.b16 %v3599
  %v4895 = vunpack.c.l.b16 %v3600
  %v4896 = vunpack.c.h.b16 %v3600
  %v4897 = vunpack.c.l.b16 %v3601
  %v4898 = vunpack.c.h.b16 %v3601
  %v4899 = vunpack.c.l.b16 %v3602
  %v4900 = vunpack.c.h.b16 %v3602
  %v4901 = vunpack.c.l.b16 %v3603
  %v4902 = vunpack.c.l.b16 %v3604
  %v4903 = vunpack.c.h.b16 %v3604
  %v4904 = vunpack.c.l.b16 %v3605
  %v4905 = vunpack.c.h.b16 %v3605
  %v4906 = vunpack.c.l.b16 %v3606
  %v4907 = vunpack.c.h.b16 %v3606
  %v4908 = vunpack.c.l.b16 %v3607
  %v4909 = vunpack.c.l.b16 %v3608
  %v4910 = vunpack.c.h.b16 %v3608
  %v4911 = vunpack.c.l.b16 %v3609
  %v4912 = vunpack.c.h.b16 %v3609
  %v4913 = vunpack.c.l.b16 %v3610
  %v4914 = vunpack.c.h.b16 %v3610
  %v4915 = vunpack.c.l.b16 %v3611
  %v4916 = vunpack.c.l.b16 %v3612
  %v4917 = vunpack.c.h.b16 %v3612
  %v4918 = vunpack.c.l.b16 %v3613
  %v4919 = vunpack.c.h.b16 %v3613
  %v4920 = vunpack.c.l.b16 %v3614
  %v4921 = vunpack.c.h.b16 %v3614
  %v4922 = vunpack.c.l.b16 %v3615
  %v4923 = vunpack.c.l.b16 %v3616
  %v4924 = vunpack.c.h.b16 %v3616
  %v4925 = vunpack.c.l.b16 %v3617
  %v4926 = vunpack.c.h.b16 %v3617
  %v4927 = vunpack.c.l.b16 %v3618
  %v4928 = vunpack.c.h.b16 %v3618
  %v4929 = vunpack.c.l.b16 %v3619
  %v4930 = vunpack.c.l.b16 %v3620
  %v4931 = vunpack.c.h.b16 %v3620
  %v4932 = vunpack.c.l.b16 %v3621
  %v4933 = vunpack.c.h.b16 %v3621
  %v4934 = vunpack.c.l.b16 %v3622
  %v4935 = vunpack.c.h.b16 %v3622
  %v4936 = vunpack.c.l.b16 %v3623
  %v4937 = vunpack.c.l.b16 %v3624
  %v4938 = vunpack.c.h.b16 %v3624
  %v4939 = vunpack.c.l.b16 %v3625
  %v4940 = vunpack.c.h.b16 %v3625
  %v4941 = vunpack.c.l.b16 %v3626
  %v4942 = vunpack.c.h.b16 %v3626
  %v4943 = vunpack.c.l.b16 %v3627
  %v4944 = vunpack.c.l.b16 %v3628
  %v4945 = vunpack.c.h.b16 %v3628
  %v4946 = vunpack.c.l.b16 %v3629
  %v4947 = vunpack.c.h.b16 %v3629
  %v4948 = vunpack.c.l.b16 %v3630
  %v4949 = vunpack.c.h.b16 %v3630
  %v4950 = vunpack.c.l.b16 %v3631
  %v4951 = vunpack.c.l.b16 %v3632
  %v4952 = vunpack.c.h.b16 %v3632
  %v4953 = vunpack.c.l.b16 %v3633
  %v4954 = vunpack.c.h.b16 %v3633
  %v4955 = vunpack.c.l.b16 %v3634
  %v4956 = vunpack.c.h.b16 %v3634
  %v4957 = vunpack.c.l.b16 %v3635
  %v4958 = vunpack.c.l.b16 %v3636
  %v4959 = vunpack.c.h.b16 %v3636
  %v4960 = vunpack.c.l.b16 %v3637
  %v4961 = vunpack.c.h.b16 %v3637
  %v4962 = vunpack.c.l.b16 %v3638
  %v4963 = vunpack.c.h.b16 %v3638
  %v4964 = vunpack.c.l.b16 %v3639
  %v4965 = vunpack.c.l.b16 %v3640
  %v4966 = vunpack.c.h.b16 %v3640
  %v4967 = vunpack.c.l.b16 %v3641
  %v4968 = vunpack.c.h.b16 %v3641
  %v4969 = vunpack.c.l.b16 %v3642
  %v4970 = vunpack.c.h.b16 %v3642
  %v4971 = vunpack.c.l.b16 %v3643
  %v4972 = vunpack.c.l.b16 %v3644
  %v4973 = vunpack.c.h.b16 %v3644
  %v4974 = vunpack.c.l.b16 %v3645
  %v4975 = vunpack.c.h.b16 %v3645
  %v4976 = vunpack.c.l.b16 %v3646
  %v4977 = vunpack.c.h.b16 %v3646
  %v4978 = vunpack.c.l.b16 %v3647
  %v4979 = vunpack.c.l.b16 %v3648
  %v4980 = vunpack.c.h.b16 %v3648
  %v4981 = vunpack.c.l.b16 %v3649
  %v4982 = vunpack.c.h.b16 %v3649
  %v4983 = vunpack.c.l.b16 %v3650
  %v4984 = vunpack.c.h.b16 %v3650
  %v4985 = vunpack.c.l.b16 %v3651
  %v4986 = vunpack.c.l.b16 %v3652
  %v4987 = vunpack.c.h.b16 %v3652
  %v4988 = vunpack.c.l.b16 %v3653
  %v4989 = vunpack.c.h.b16 %v3653
  %v4990 = vunpack.c.l.b16 %v3654
  %v4991 = vunpack.c.h.b16 %v3654
  %v4992 = vunpack.c.l.b16 %v3655
  %v4993 = vunpack.c.l.b16 %v3656
  %v4994 = vunpack.c.h.b16 %v3656
  %v4995 = vunpack.c.l.b16 %v3657
  %v4996 = vunpack.c.h.b16 %v3657
  %v4997 = vunpack.c.l.b16 %v3658
  %v4998 = vunpack.c.h.b16 %v3658
  %v4999 = vunpack.c.l.b16 %v3659
  %v5000 = vunpack.c.l.b16 %v3660
  %v5001 = vunpack.c.h.b16 %v3660
  %v5002 = vunpack.c.l.b16 %v3661
  %v5003 = vunpack.c.h.b16 %v3661
  %v5004 = vunpack.c.l.b16 %v3662
  %v5005 = vunpack.c.h.b16 %v3662
  %v5006 = vunpack.c.l.b16 %v3663
  %v5007 = vunpack.c.l.b16 %v3664
  %v5008 = vunpack.c.h.b16 %v3664
  %v5009 = vunpack.c.l.b16 %v3665
  %v5010 = vunpack.c.h.b16 %v3665
  %v5011 = vunpack.c.l.b16 %v3666
  %v5012 = vunpack.c.h.b16 %v3666
  %v5013 = vunpack.c.l.b16 %v3667
  %v5014 = vunpack.c.l.b16 %v3668
  %v5015 = vunpack.c.h.b16 %v3668
  %v5016 = vunpack.c.l.b16 %v3669
  %v5017 = vunpack.c.h.b16 %v3669
  %v5018 = vunpack.c.l.b16 %v3670
  %v5019 = vunpack.c.h.b16 %v3670
  %v5020 = vunpack.c.l.b16 %v3671
  %v5021 = vunpack.c.l.b16 %v3672
  %v5022 = vunpack.c.h.b16 %v3672
  %v5023 = vunpack.c.l.b16 %v3673
  %v5024 = vunpack.c.h.b16 %v3673
  %v5025 = vunpack.c.l.b16 %v3674
  %v5026 = vunpack.c.h.b16 %v3674
  %v5027 = vunpack.c.l.b16 %v3675
  %v5028 = vunpack.c.l.b16 %v3676
  %v5029 = vunpack.c.h.b16 %v3676
  %v5030 = vunpack.c.l.b16 %v3677
  %v5031 = vunpack.c.h.b16 %v3677
  %v5032 = vunpack.c.l.b16 %v3678
  %v5033 = vunpack.c.h.b16 %v3678
  %v5034 = vunpack.c.l.b16 %v3679
  %v5035 = vunpack.c.l.b16 %v3680
  %v5036 = vunpack.c.h.b16 %v3680
  %v5037 = vunpack.c.l.b16 %v3681
  %v5038 = vunpack.c.h.b16 %v3681
  %v5039 = vunpack.c.l.b16 %v3682
  %v5040 = vunpack.c.h.b16 %v3682
  %v5041 = vunpack.c.l.b16 %v3683
  %v5042 = vunpack.c.l.b16 %v3684
  %v5043 = vunpack.c.h.b16 %v3684
  %v5044 = vunpack.c.l.b16 %v3685
  %v5045 = vunpack.c.h.b16 %v3685
  %v5046 = vunpack.c.l.b16 %v3686
  %v5047 = vunpack.c.h.b16 %v3686
  %v5048 = vunpack.c.l.b16 %v3687
  %v5049 = vunpack.c.l.b16 %v3688
  %v5050 = vunpack.c.h.b16 %v3688
  %v5051 = vunpack.c.l.b16 %v3689
  %v5052 = vunpack.c.h.b16 %v3689
  %v5053 = vunpack.c.l.b16 %v3690
  %v5054 = vunpack.c.h.b16 %v3690
  %v5055 = vunpack.c.l.b16 %v3691
  %v5056 = vunpack.c.l.b16 %v3692
  %v5057 = vunpack.c.h.b16 %v3692
  %v5058 = vunpack.c.l.b16 %v3693
  %v5059 = vunpack.c.h.b16 %v3693
  %v5060 = vunpack.c.l.b16 %v3694
  %v5061 = vunpack.c.h.b16 %v3694
  %v5062 = vunpack.c.l.b16 %v3695
  %v5063 = vunpack.c.l.b16 %v3696
  %v5064 = vunpack.c.h.b16 %v3696
  %v5065 = vunpack.c.l.b16 %v3697
  %v5066 = vunpack.c.h.b16 %v3697
  %v5067 = vunpack.c.l.b16 %v3698
  %v5068 = vunpack.c.h.b16 %v3698
  %v5069 = vunpack.c.l.b16 %v3699
  %v5070 = vunpack.c.l.b16 %v3700
  %v5071 = vunpack.c.h.b16 %v3700
  %v5072 = vunpack.c.l.b16 %v3701
  %v5073 = vunpack.c.h.b16 %v3701
  %v5074 = vunpack.c.l.b16 %v3702
  %v5075 = vunpack.c.h.b16 %v3702
  %v5076 = vunpack.c.l.b16 %v3703
  %v5077 = vunpack.c.l.b16 %v3704
  %v5078 = vunpack.c.h.b16 %v3704
  %v5079 = vunpack.c.l.b16 %v3705
  %v5080 = vunpack.c.h.b16 %v3705
  %v5081 = vunpack.c.l.b16 %v3706
  %v5082 = vunpack.c.h.b16 %v3706
  %v5083 = vunpack.c.l.b16 %v3707
  %v5084 = vunpack.c.l.b16 %v3708
  %v5085 = vunpack.c.h.b16 %v3708
  %v5086 = vunpack.c.l.b16 %v3709
  %v5087 = vunpack.c.h.b16 %v3709
  %v5088 = vunpack.c.l.b16 %v3710
  %v5089 = vunpack.c.h.b16 %v3710
  %v5090 = vunpack.c.l.b16 %v3711
  %v5091 = vunpack.c.l.b16 %v3712
  %v5092 = vunpack.c.h.b16 %v3712
  %v5093 = vunpack.c.l.b16 %v3713
  %v5094 = vunpack.c.h.b16 %v3713
  %v5095 = vunpack.c.l.b16 %v3714
  %v5096 = vunpack.c.h.b16 %v3714
  %v5097 = vunpack.c.l.b16 %v3715
  %v5098 = vunpack.c.l.b16 %v3716
  %v5099 = vunpack.c.h.b16 %v3716
  %v5100 = vunpack.c.l.b16 %v3717
  %v5101 = vunpack.c.h.b16 %v3717
  %v5102 = vunpack.c.l.b16 %v3718
  %v5103 = vunpack.c.h.b16 %v3718
  %v5104 = vunpack.c.l.b16 %v3719
  %v5105 = vunpack.c.l.b16 %v3720
  %v5106 = vunpack.c.h.b16 %v3720
  %v5107 = vunpack.c.l.b16 %v3721
  %v5108 = vunpack.c.h.b16 %v3721
  %v5109 = vunpack.c.l.b16 %v3722
  %v5110 = vunpack.c.h.b16 %v3722
  %v5111 = vunpack.c.l.b16 %v3723
  %v5112 = vunpack.c.l.b16 %v3724
  %v5113 = vunpack.c.h.b16 %v3724
  %v5114 = vunpack.c.l.b16 %v3725
  %v5115 = vunpack.c.h.b16 %v3725
  %v5116 = vunpack.c.l.b16 %v3726
  %v5117 = vunpack.c.h.b16 %v3726
  %v5118 = vunpack.c.l.b16 %v3727
  %v5119 = vunpack.c.l.b16 %v3728
  %v5120 = vunpack.c.h.b16 %v3728
  %v5121 = vunpack.c.l.b16 %v3729
  %v5122 = vunpack.c.h.b16 %v3729
  %v5123 = vunpack.c.l.b16 %v3730
  %v5124 = vunpack.c.h.b16 %v3730
  %v5125 = vunpack.c.l.b16 %v3731
  %v5126 = vunpack.c.l.b16 %v3732
  %v5127 = vunpack.c.h.b16 %v3732
  %v5128 = vunpack.c.l.b16 %v3733
  %v5129 = vunpack.c.h.b16 %v3733
  %v5130 = vunpack.c.l.b16 %v3734
  %v5131 = vunpack.c.h.b16 %v3734
  %v5132 = vunpack.c.l.b16 %v3735
  %v5133 = vunpack.c.l.b16 %v3736
  %v5134 = vunpack.c.h.b16 %v3736
  %v5135 = vunpack.c.l.b16 %v3737
  %v5136 = vunpack.c.h.b16 %v3737
  %v5137 = vunpack.c.l.b16 %v3738
  %v5138 = vunpack.c.h.b16 %v3738
  %v5139 = vunpack.c.l.b16 %v3739
  %v5140 = vunpack.c.l.b16 %v3740
  %v5141 = vunpack.c.h.b16 %v3740
  %v5142 = vunpack.c.l.b16 %v3741
  %v5143 = vunpack.c.h.b16 %v3741
  %v5144 = vunpack.c.l.b16 %v3742
  %v5145 = vunpack.c.h.b16 %v3742
  %v5146 = vunpack.c.l.b16 %v3743
  %v5147 = vunpack.c.l.b16 %v3744
  %v5148 = vunpack.c.h.b16 %v3744
  %v5149 = vunpack.c.l.b16 %v3745
  %v5150 = vunpack.c.h.b16 %v3745
  %v5151 = vunpack.c.l.b16 %v3746
  %v5152 = vunpack.c.h.b16 %v3746
  %v5153 = vunpack.c.l.b16 %v3747
  %v5154 = vunpack.c.l.b16 %v3748
  %v5155 = vunpack.c.h.b16 %v3748
  %v5156 = vunpack.c.l.b16 %v3749
  %v5157 = vunpack.c.h.b16 %v3749
  %v5158 = vunpack.c.l.b16 %v3750
  %v5159 = vunpack.c.h.b16 %v3750
  %v5160 = vunpack.c.l.b16 %v3751
  %v5161 = vunpack.c.l.b16 %v3752
  %v5162 = vunpack.c.h.b16 %v3752
  %v5163 = vunpack.c.l.b16 %v3753
  %v5164 = vunpack.c.h.b16 %v3753
  %v5165 = vunpack.c.l.b16 %v3754
  %v5166 = vunpack.c.h.b16 %v3754
  %v5167 = vunpack.c.l.b16 %v3755
  %v5168 = vunpack.c.l.b16 %v3756
  %v5169 = vunpack.c.h.b16 %v3756
  %v5170 = vunpack.c.l.b16 %v3757
  %v5171 = vunpack.c.h.b16 %v3757
  %v5172 = vunpack.c.l.b16 %v3758
  %v5173 = vunpack.c.h.b16 %v3758
  %v5174 = vunpack.c.l.b16 %v3759
  %v5175 = vunpack.c.l.b16 %v3760
  %v5176 = vunpack.c.h.b16 %v3760
  %v5177 = vunpack.c.l.b16 %v3761
  %v5178 = vunpack.c.h.b16 %v3761
  %v5179 = vunpack.c.l.b16 %v3762
  %v5180 = vunpack.c.h.b16 %v3762
  %v5181 = vunpack.c.l.b16 %v3763
  %v5182 = vunpack.c.l.b16 %v3764
  %v5183 = vunpack.c.h.b16 %v3764
  %v5184 = vunpack.c.l.b16 %v3765
  %v5185 = vunpack.c.h.b16 %v3765
  %v5186 = vunpack.c.l.b16 %v3766
  %v5187 = vunpack.c.h.b16 %v3766
  %v5188 = vunpack.c.l.b16 %v3767
  %v5189 = vunpack.c.l.b16 %v3768
  %v5190 = vunpack.c.h.b16 %v3768
  %v5191 = vunpack.c.l.b16 %v3769
  %v5192 = vunpack.c.h.b16 %v3769
  %v5193 = vunpack.c.l.b16 %v3770
  %v5194 = vunpack.c.h.b16 %v3770
  %v5195 = vunpack.c.l.b16 %v3771
  %v5196 = vpack.c.b16 %v4307, %v4300
  %v5197 = vpack.c.b16 %v4308, %v4301
  %v5198 = vpack.c.b16 %v4309, %v4302
  %v5199 = vpack.c.b16 %v4310, %v4303
  %v5200 = vpack.c.b16 %v4311, %v4304
  %v5201 = vpack.c.b16 %v4312, %v4305
  %v5202 = vpack.c.b16 %v4313, %v4306
  %v5203 = vpack.c.b16 %v4321, %v4314
  %v5204 = vpack.c.b16 %v4322, %v4315
  %v5205 = vpack.c.b16 %v4323, %v4316
  %v5206 = vpack.c.b16 %v4324, %v4317
  %v5207 = vpack.c.b16 %v4325, %v4318
  %v5208 = vpack.c.b16 %v4326, %v4319
  %v5209 = vpack.c.b16 %v4327, %v4320
  %v5210 = vpack.c.b16 %v4335, %v4328
  %v5211 = vpack.c.b16 %v4336, %v4329
  %v5212 = vpack.c.b16 %v4337, %v4330
  %v5213 = vpack.c.b16 %v4338, %v4331
  %v5214 = vpack.c.b16 %v4339, %v4332
  %v5215 = vpack.c.b16 %v4340, %v4333
  %v5216 = vpack.c.b16 %v4341, %v4334
  %v5217 = vpack.c.b16 %v4349, %v4342
  %v5218 = vpack.c.b16 %v4350, %v4343
  %v5219 = vpack.c.b16 %v4351, %v4344
  %v5220 = vpack.c.b16 %v4352, %v4345
  %v5221 = vpack.c.b16 %v4353, %v4346
  %v5222 = vpack.c.b16 %v4354, %v4347
  %v5223 = vpack.c.b16 %v4355, %v4348
  %v5224 = vpack.c.b16 %v4363, %v4356
  %v5225 = vpack.c.b16 %v4364, %v4357
  %v5226 = vpack.c.b16 %v4365, %v4358
  %v5227 = vpack.c.b16 %v4366, %v4359
  %v5228 = vpack.c.b16 %v4367, %v4360
  %v5229 = vpack.c.b16 %v4368, %v4361
  %v5230 = vpack.c.b16 %v4369, %v4362
  %v5231 = vpack.c.b16 %v4377, %v4370
  %v5232 = vpack.c.b16 %v4378, %v4371
  %v5233 = vpack.c.b16 %v4379, %v4372
  %v5234 = vpack.c.b16 %v4380, %v4373
  %v5235 = vpack.c.b16 %v4381, %v4374
  %v5236 = vpack.c.b16 %v4382, %v4375
  %v5237 = vpack.c.b16 %v4383, %v4376
  %v5238 = vpack.c.b16 %v4391, %v4384
  %v5239 = vpack.c.b16 %v4392, %v4385
  %v5240 = vpack.c.b16 %v4393, %v4386
  %v5241 = vpack.c.b16 %v4394, %v4387
  %v5242 = vpack.c.b16 %v4395, %v4388
  %v5243 = vpack.c.b16 %v4396, %v4389
  %v5244 = vpack.c.b16 %v4397, %v4390
  %v5245 = vpack.c.b16 %v4405, %v4398
  %v5246 = vpack.c.b16 %v4406, %v4399
  %v5247 = vpack.c.b16 %v4407, %v4400
  %v5248 = vpack.c.b16 %v4408, %v4401
  %v5249 = vpack.c.b16 %v4409, %v4402
  %v5250 = vpack.c.b16 %v4410, %v4403
  %v5251 = vpack.c.b16 %v4411, %v4404
  %v5252 = vpack.c.b16 %v4419, %v4412
  %v5253 = vpack.c.b16 %v4420, %v4413
  %v5254 = vpack.c.b16 %v4421, %v4414
  %v5255 = vpack.c.b16 %v4422, %v4415
  %v5256 = vpack.c.b16 %v4423, %v4416
  %v5257 = vpack.c.b16 %v4424, %v4417
  %v5258 = vpack.c.b16 %v4425, %v4418
  %v5259 = vpack.c.b16 %v4433, %v4426
  %v5260 = vpack.c.b16 %v4434, %v4427
  %v5261 = vpack.c.b16 %v4435, %v4428
  %v5262 = vpack.c.b16 %v4436, %v4429
  %v5263 = vpack.c.b16 %v4437, %v4430
  %v5264 = vpack.c.b16 %v4438, %v4431
  %v5265 = vpack.c.b16 %v4439, %v4432
  %v5266 = vpack.c.b16 %v4447, %v4440
  %v5267 = vpack.c.b16 %v4448, %v4441
  %v5268 = vpack.c.b16 %v4449, %v4442
  %v5269 = vpack.c.b16 %v4450, %v4443
  %v5270 = vpack.c.b16 %v4451, %v4444
  %v5271 = vpack.c.b16 %v4452, %v4445
  %v5272 = vpack.c.b16 %v4453, %v4446
  %v5273 = vpack.c.b16 %v4461, %v4454
  %v5274 = vpack.c.b16 %v4462, %v4455
  %v5275 = vpack.c.b16 %v4463, %v4456
  %v5276 = vpack.c.b16 %v4464, %v4457
  %v5277 = vpack.c.b16 %v4465, %v4458
  %v5278 = vpack.c.b16 %v4466, %v4459
  %v5279 = vpack.c.b16 %v4467, %v4460
  %v5280 = vpack.c.b16 %v4475, %v4468
  %v5281 = vpack.c.b16 %v4476, %v4469
  %v5282 = vpack.c.b16 %v4477, %v4470
  %v5283 = vpack.c.b16 %v4478, %v4471
  %v5284 = vpack.c.b16 %v4479, %v4472
  %v5285 = vpack.c.b16 %v4480, %v4473
  %v5286 = vpack.c.b16 %v4481, %v4474
  %v5287 = vpack.c.b16 %v4489, %v4482
  %v5288 = vpack.c.b16 %v4490, %v4483
  %v5289 = vpack.c.b16 %v4491, %v4484
  %v5290 = vpack.c.b16 %v4492, %v4485
  %v5291 = vpack.c.b16 %v4493, %v4486
  %v5292 = vpack.c.b16 %v4494, %v4487
  %v5293 = vpack.c.b16 %v4495, %v4488
  %v5294 = vpack.c.b16 %v4503, %v4496
  %v5295 = vpack.c.b16 %v4504, %v4497
  %v5296 = vpack.c.b16 %v4505, %v4498
  %v5297 = vpack.c.b16 %v4506, %v4499
  %v5298 = vpack.c.b16 %v4507, %v4500
  %v5299 = vpack.c.b16 %v4508, %v4501
  %v5300 = vpack.c.b16 %v4509, %v4502
  %v5301 = vpack.c.b16 %v4517, %v4510
  %v5302 = vpack.c.b16 %v4518, %v4511
  %v5303 = vpack.c.b16 %v4519, %v4512
  %v5304 = vpack.c.b16 %v4520, %v4513
  %v5305 = vpack.c.b16 %v4521, %v4514
  %v5306 = vpack.c.b16 %v4522, %v4515
  %v5307 = vpack.c.b16 %v4523, %v4516
  %v5308 = vpack.c.b16 %v4531, %v4524
  %v5309 = vpack.c.b16 %v4532, %v4525
  %v5310 = vpack.c.b16 %v4533, %v4526
  %v5311 = vpack.c.b16 %v4534, %v4527
  %v5312 = vpack.c.b16 %v4535, %v4528
  %v5313 = vpack.c.b16 %v4536, %v4529
  %v5314 = vpack.c.b16 %v4537, %v4530
  %v5315 = vpack.c.b16 %v4545, %v4538
  %v5316 = vpack.c.b16 %v4546, %v4539
  %v5317 = vpack.c.b16 %v4547, %v4540
  %v5318 = vpack.c.b16 %v4548, %v4541
  %v5319 = vpack.c.b16 %v4549, %v4542
  %v5320 = vpack.c.b16 %v4550, %v4543
  %v5321 = vpack.c.b16 %v4551, %v4544
  %v5322 = vpack.c.b16 %v4559, %v4552
  %v5323 = vpack.c.b16 %v4560, %v4553
  %v5324 = vpack.c.b16 %v4561, %v4554
  %v5325 = vpack.c.b16 %v4562, %v4555
  %v5326 = vpack.c.b16 %v4563, %v4556
  %v5327 = vpack.c.b16 %v4564, %v4557
  %v5328 = vpack.c.b16 %v4565, %v4558
  %v5329 = vpack.c.b16 %v4573, %v4566
  %v5330 = vpack.c.b16 %v4574, %v4567
  %v5331 = vpack.c.b16 %v4575, %v4568
  %v5332 = vpack.c.b16 %v4576, %v4569
  %v5333 = vpack.c.b16 %v4577, %v4570
  %v5334 = vpack.c.b16 %v4578, %v4571
  %v5335 = vpack.c.b16 %v4579, %v4572
  %v5336 = vpack.c.b16 %v4587, %v4580
  %v5337 = vpack.c.b16 %v4588, %v4581
  %v5338 = vpack.c.b16 %v4589, %v4582
  %v5339 = vpack.c.b16 %v4590, %v4583
  %v5340 = vpack.c.b16 %v4591, %v4584
  %v5341 = vpack.c.b16 %v4592, %v4585
  %v5342 = vpack.c.b16 %v4593, %v4586
  %v5343 = vpack.c.b16 %v4601, %v4594
  %v5344 = vpack.c.b16 %v4602, %v4595
  %v5345 = vpack.c.b16 %v4603, %v4596
  %v5346 = vpack.c.b16 %v4604, %v4597
  %v5347 = vpack.c.b16 %v4605, %v4598
  %v5348 = vpack.c.b16 %v4606, %v4599
  %v5349 = vpack.c.b16 %v4607, %v4600
  %v5350 = vpack.c.b16 %v4615, %v4608
  %v5351 = vpack.c.b16 %v4616, %v4609
  %v5352 = vpack.c.b16 %v4617, %v4610
  %v5353 = vpack.c.b16 %v4618, %v4611
  %v5354 = vpack.c.b16 %v4619, %v4612
  %v5355 = vpack.c.b16 %v4620, %v4613
  %v5356 = vpack.c.b16 %v4621, %v4614
  %v5357 = vpack.c.b16 %v4629, %v4622
  %v5358 = vpack.c.b16 %v4630, %v4623
  %v5359 = vpack.c.b16 %v4631, %v4624
  %v5360 = vpack.c.b16 %v4632, %v4625
  %v5361 = vpack.c.b16 %v4633, %v4626
  %v5362 = vpack.c.b16 %v4634, %v4627
  %v5363 = vpack.c.b16 %v4635, %v4628
  %v5364 = vpack.c.b16 %v4643, %v4636
  %v5365 = vpack.c.b16 %v4644, %v4637
  %v5366 = vpack.c.b16 %v4645, %v4638
  %v5367 = vpack.c.b16 %v4646, %v4639
  %v5368 = vpack.c.b16 %v4647, %v4640
  %v5369 = vpack.c.b16 %v4648, %v4641
  %v5370 = vpack.c.b16 %v4649, %v4642
  %v5371 = vpack.c.b16 %v4657, %v4650
  %v5372 = vpack.c.b16 %v4658, %v4651
  %v5373 = vpack.c.b16 %v4659, %v4652
  %v5374 = vpack.c.b16 %v4660, %v4653
  %v5375 = vpack.c.b16 %v4661, %v4654
  %v5376 = vpack.c.b16 %v4662, %v4655
  %v5377 = vpack.c.b16 %v4663, %v4656
  %v5378 = vpack.c.b16 %v4671, %v4664
  %v5379 = vpack.c.b16 %v4672, %v4665
  %v5380 = vpack.c.b16 %v4673, %v4666
  %v5381 = vpack.c.b16 %v4674, %v4667
  %v5382 = vpack.c.b16 %v4675, %v4668
  %v5383 = vpack.c.b16 %v4676, %v4669
  %v5384 = vpack.c.b16 %v4677, %v4670
  %v5385 = vpack.c.b16 %v4685, %v4678
  %v5386 = vpack.c.b16 %v4686, %v4679
  %v5387 = vpack.c.b16 %v4687, %v4680
  %v5388 = vpack.c.b16 %v4688, %v4681
  %v5389 = vpack.c.b16 %v4689, %v4682
  %v5390 = vpack.c.b16 %v4690, %v4683
  %v5391 = vpack.c.b16 %v4691, %v4684
  %v5392 = vpack.c.b16 %v4699, %v4692
  %v5393 = vpack.c.b16 %v4700, %v4693
  %v5394 = vpack.c.b16 %v4701, %v4694
  %v5395 = vpack.c.b16 %v4702, %v4695
  %v5396 = vpack.c.b16 %v4703, %v4696
  %v5397 = vpack.c.b16 %v4704, %v4697
  %v5398 = vpack.c.b16 %v4705, %v4698
  %v5399 = vpack.c.b16 %v4713, %v4706
  %v5400 = vpack.c.b16 %v4714, %v4707
  %v5401 = vpack.c.b16 %v4715, %v4708
  %v5402 = vpack.c.b16 %v4716, %v4709
  %v5403 = vpack.c.b16 %v4717, %v4710
  %v5404 = vpack.c.b16 %v4718, %v4711
  %v5405 = vpack.c.b16 %v4719, %v4712
  %v5406 = vpack.c.b16 %v4727, %v4720
  %v5407 = vpack.c.b16 %v4728, %v4721
  %v5408 = vpack.c.b16 %v4729, %v4722
  %v5409 = vpack.c.b16 %v4730, %v4723
  %v5410 = vpack.c.b16 %v4731, %v4724
  %v5411 = vpack.c.b16 %v4732, %v4725
  %v5412 = vpack.c.b16 %v4733, %v4726
  %v5413 = vpack.c.b16 %v4741, %v4734
  %v5414 = vpack.c.b16 %v4742, %v4735
  %v5415 = vpack.c.b16 %v4743, %v4736
  %v5416 = vpack.c.b16 %v4744, %v4737
  %v5417 = vpack.c.b16 %v4745, %v4738
  %v5418 = vpack.c.b16 %v4746, %v4739
  %v5419 = vpack.c.b16 %v4747, %v4740
  %v5420 = vpack.c.b16 %v4755, %v4748
  %v5421 = vpack.c.b16 %v4756, %v4749
  %v5422 = vpack.c.b16 %v4757, %v4750
  %v5423 = vpack.c.b16 %v4758, %v4751
  %v5424 = vpack.c.b16 %v4759, %v4752
  %v5425 = vpack.c.b16 %v4760, %v4753
  %v5426 = vpack.c.b16 %v4761, %v4754
  %v5427 = vpack.c.b16 %v4769, %v4762
  %v5428 = vpack.c.b16 %v4770, %v4763
  %v5429 = vpack.c.b16 %v4771, %v4764
  %v5430 = vpack.c.b16 %v4772, %v4765
  %v5431 = vpack.c.b16 %v4773, %v4766
  %v5432 = vpack.c.b16 %v4774, %v4767
  %v5433 = vpack.c.b16 %v4775, %v4768
  %v5434 = vpack.c.b16 %v4783, %v4776
  %v5435 = vpack.c.b16 %v4784, %v4777
  %v5436 = vpack.c.b16 %v4785, %v4778
  %v5437 = vpack.c.b16 %v4786, %v4779
  %v5438 = vpack.c.b16 %v4787, %v4780
  %v5439 = vpack.c.b16 %v4788, %v4781
  %v5440 = vpack.c.b16 %v4789, %v4782
  %v5441 = vpack.c.b16 %v4797, %v4790
  %v5442 = vpack.c.b16 %v4798, %v4791
  %v5443 = vpack.c.b16 %v4799, %v4792
  %v5444 = vpack.c.b16 %v4800, %v4793
  %v5445 = vpack.c.b16 %v4801, %v4794
  %v5446 = vpack.c.b16 %v4802, %v4795
  %v5447 = vpack.c.b16 %v4803, %v4796
  %v5448 = vpack.c.b16 %v4811, %v4804
  %v5449 = vpack.c.b16 %v4812, %v4805
  %v5450 = vpack.c.b16 %v4813, %v4806
  %v5451 = vpack.c.b16 %v4814, %v4807
  %v5452 = vpack.c.b16 %v4815, %v4808
  %v5453 = vpack.c.b16 %v4816, %v4809
  %v5454 = vpack.c.b16 %v4817, %v4810
  %v5455 = vpack.c.b16 %v4825, %v4818
  %v5456 = vpack.c.b16 %v4826, %v4819
  %v5457 = vpack.c.b16 %v4827, %v4820
  %v5458 = vpack.c.b16 %v4828, %v4821
  %v5459 = vpack.c.b16 %v4829, %v4822
  %v5460 = vpack.c.b16 %v4830, %v4823
  %v5461 = vpack.c.b16 %v4831, %v4824
  %v5462 = vpack.c.b16 %v4839, %v4832
  %v5463 = vpack.c.b16 %v4840, %v4833
  %v5464 = vpack.c.b16 %v4841, %v4834
  %v5465 = vpack.c.b16 %v4842, %v4835
  %v5466 = vpack.c.b16 %v4843, %v4836
  %v5467 = vpack.c.b16 %v4844, %v4837
  %v5468 = vpack.c.b16 %v4845, %v4838
  %v5469 = vpack.c.b16 %v4853, %v4846
  %v5470 = vpack.c.b16 %v4854, %v4847
  %v5471 = vpack.c.b16 %v4855, %v4848
  %v5472 = vpack.c.b16 %v4856, %v4849
  %v5473 = vpack.c.b16 %v4857, %v4850
  %v5474 = vpack.c.b16 %v4858, %v4851
  %v5475 = vpack.c.b16 %v4859, %v4852
  %v5476 = vpack.c.b16 %v4867, %v4860
  %v5477 = vpack.c.b16 %v4868, %v4861
  %v5478 = vpack.c.b16 %v4869, %v4862
  %v5479 = vpack.c.b16 %v4870, %v4863
  %v5480 = vpack.c.b16 %v4871, %v4864
  %v5481 = vpack.c.b16 %v4872, %v4865
  %v5482 = vpack.c.b16 %v4873, %v4866
  %v5483 = vpack.c.b16 %v4881, %v4874
  %v5484 = vpack.c.b16 %v4882, %v4875
  %v5485 = vpack.c.b16 %v4883, %v4876
  %v5486 = vpack.c.b16 %v4884, %v4877
  %v5487 = vpack.c.b16 %v4885, %v4878
  %v5488 = vpack.c.b16 %v4886, %v4879
  %v5489 = vpack.c.b16 %v4887, %v4880
  %v5490 = vpack.c.b16 %v4895, %v4888
  %v5491 = vpack.c.b16 %v4896, %v4889
  %v5492 = vpack.c.b16 %v4897, %v4890
  %v5493 = vpack.c.b16 %v4898, %v4891
  %v5494 = vpack.c.b16 %v4899, %v4892
  %v5495 = vpack.c.b16 %v4900, %v4893
  %v5496 = vpack.c.b16 %v4901, %v4894
  %v5497 = vpack.c.b16 %v4909, %v4902
  %v5498 = vpack.c.b16 %v4910, %v4903
  %v5499 = vpack.c.b16 %v4911, %v4904
  %v5500 = vpack.c.b16 %v4912, %v4905
  %v5501 = vpack.c.b16 %v4913, %v4906
  %v5502 = vpack.c.b16 %v4914, %v4907
  %v5503 = vpack.c.b16 %v4915, %v4908
  %v5504 = vpack.c.b16 %v4923, %v4916
  %v5505 = vpack.c.b16 %v4924, %v4917
  %v5506 = vpack.c.b16 %v4925, %v4918
  %v5507 = vpack.c.b16 %v4926, %v4919
  %v5508 = vpack.c.b16 %v4927, %v4920
  %v5509 = vpack.c.b16 %v4928, %v4921
  %v5510 = vpack.c.b16 %v4929, %v4922
  %v5511 = vpack.c.b16 %v4937, %v4930
  %v5512 = vpack.c.b16 %v4938, %v4931
  %v5513 = vpack.c.b16 %v4939, %v4932
  %v5514 = vpack.c.b16 %v4940, %v4933
  %v5515 = vpack.c.b16 %v4941, %v4934
  %v5516 = vpack.c.b16 %v4942, %v4935
  %v5517 = vpack.c.b16 %v4943, %v4936
  %v5518 = vpack.c.b16 %v4951, %v4944
  %v5519 = vpack.c.b16 %v4952, %v4945
  %v5520 = vpack.c.b16 %v4953, %v4946
  %v5521 = vpack.c.b16 %v4954, %v4947
  %v5522 = vpack.c.b16 %v4955, %v4948
  %v5523 = vpack.c.b16 %v4956, %v4949
  %v5524 = vpack.c.b16 %v4957, %v4950
  %v5525 = vpack.c.b16 %v4965, %v4958
  %v5526 = vpack.c.b16 %v4966, %v4959
  %v5527 = vpack.c.b16 %v4967, %v4960
  %v5528 = vpack.c.b16 %v4968, %v4961
  %v5529 = vpack.c.b16 %v4969, %v4962
  %v5530 = vpack.c.b16 %v4970, %v4963
  %v5531 = vpack.c.b16 %v4971, %v4964
  %v5532 = vpack.c.b16 %v4979, %v4972
  %v5533 = vpack.c.b16 %v4980, %v4973
  %v5534 = vpack.c.b16 %v4981, %v4974
  %v5535 = vpack.c.b16 %v4982, %v4975
  %v5536 = vpack.c.b16 %v4983, %v4976
  %v5537 = vpack.c.b16 %v4984, %v4977
  %v5538 = vpack.c.b16 %v4985, %v4978
  %v5539 = vpack.c.b16 %v4993, %v4986
  %v5540 = vpack.c.b16 %v4994, %v4987
  %v5541 = vpack.c.b16 %v4995, %v4988
  %v5542 = vpack.c.b16 %v4996, %v4989
  %v5543 = vpack.c.b16 %v4997, %v4990
  %v5544 = vpack.c.b16 %v4998, %v4991
  %v5545 = vpack.c.b16 %v4999, %v4992
  %v5546 = vpack.c.b16 %v5007, %v5000
  %v5547 = vpack.c.b16 %v5008, %v5001
  %v5548 = vpack.c.b16 %v5009, %v5002
  %v5549 = vpack.c.b16 %v5010, %v5003
  %v5550 = vpack.c.b16 %v5011, %v5004
  %v5551 = vpack.c.b16 %v5012, %v5005
  %v5552 = vpack.c.b16 %v5013, %v5006
  %v5553 = vpack.c.b16 %v5021, %v5014
  %v5554 = vpack.c.b16 %v5022, %v5015
  %v5555 = vpack.c.b16 %v5023, %v5016
  %v5556 = vpack.c.b16 %v5024, %v5017
  %v5557 = vpack.c.b16 %v5025, %v5018
  %v5558 = vpack.c.b16 %v5026, %v5019
  %v5559 = vpack.c.b16 %v5027, %v5020
  %v5560 = vpack.c.b16 %v5035, %v5028
  %v5561 = vpack.c.b16 %v5036, %v5029
  %v5562 = vpack.c.b16 %v5037, %v5030
  %v5563 = vpack.c.b16 %v5038, %v5031
  %v5564 = vpack.c.b16 %v5039, %v5032
  %v5565 = vpack.c.b16 %v5040, %v5033
  %v5566 = vpack.c.b16 %v5041, %v5034
  %v5567 = vpack.c.b16 %v5049, %v5042
  %v5568 = vpack.c.b16 %v5050, %v5043
  %v5569 = vpack.c.b16 %v5051, %v5044
  %v5570 = vpack.c.b16 %v5052, %v5045
  %v5571 = vpack.c.b16 %v5053, %v5046
  %v5572 = vpack.c.b16 %v5054, %v5047
  %v5573 = vpack.c.b16 %v5055, %v5048
  %v5574 = vpack.c.b16 %v5063, %v5056
  %v5575 = vpack.c.b16 %v5064, %v5057
  %v5576 = vpack.c.b16 %v5065, %v5058
  %v5577 = vpack.c.b16 %v5066, %v5059
  %v5578 = vpack.c.b16 %v5067, %v5060
  %v5579 = vpack.c.b16 %v5068, %v5061
  %v5580 = vpack.c.b16 %v5069, %v5062
  %v5581 = vpack.c.b16 %v5077, %v5070
  %v5582 = vpack.c.b16 %v5078, %v5071
  %v5583 = vpack.c.b16 %v5079, %v5072
  %v5584 = vpack.c.b16 %v5080, %v5073
  %v5585 = vpack.c.b16 %v5081, %v5074
  %v5586 = vpack.c.b16 %v5082, %v5075
  %v5587 = vpack.c.b16 %v5083, %v5076
  %v5588 = vpack.c.b16 %v5091, %v5084
  %v5589 = vpack.c.b16 %v5092, %v5085
  %v5590 = vpack.c.b16 %v5093, %v5086
  %v5591 = vpack.c.b16 %v5094, %v5087
  %v5592 = vpack.c.b16 %v5095, %v5088
  %v5593 = vpack.c.b16 %v5096, %v5089
  %v5594 = vpack.c.b16 %v5097, %v5090
  %v5595 = vpack.c.b16 %v5105, %v5098
  %v5596 = vpack.c.b16 %v5106, %v5099
  %v5597 = vpack.c.b16 %v5107, %v5100
  %v5598 = vpack.c.b16 %v5108, %v5101
  %v5599 = vpack.c.b16 %v5109, %v5102
  %v5600 = vpack.c.b16 %v5110, %v5103
  %v5601 = vpack.c.b16 %v5111, %v5104
  %v5602 = vpack.c.b16 %v5119, %v5112
  %v5603 = vpack.c.b16 %v5120, %v5113
  %v5604 = vpack.c.b16 %v5121, %v5114
  %v5605 = vpack.c.b16 %v5122, %v5115
  %v5606 = vpack.c.b16 %v5123, %v5116
  %v5607 = vpack.c.b16 %v5124, %v5117
  %v5608 = vpack.c.b16 %v5125, %v5118
  %v5609 = vpack.c.b16 %v5133, %v5126
  %v5610 = vpack.c.b16 %v5134, %v5127
  %v5611 = vpack.c.b16 %v5135, %v5128
  %v5612 = vpack.c.b16 %v5136, %v5129
  %v5613 = vpack.c.b16 %v5137, %v5130
  %v5614 = vpack.c.b16 %v5138, %v5131
  %v5615 = vpack.c.b16 %v5139, %v5132
  %v5616 = vpack.c.b16 %v5147, %v5140
  %v5617 = vpack.c.b16 %v5148, %v5141
  %v5618 = vpack.c.b16 %v5149, %v5142
  %v5619 = vpack.c.b16 %v5150, %v5143
  %v5620 = vpack.c.b16 %v5151, %v5144
  %v5621 = vpack.c.b16 %v5152, %v5145
  %v5622 = vpack.c.b16 %v5153, %v5146
  %v5623 = vpack.c.b16 %v5161, %v5154
  %v5624 = vpack.c.b16 %v5162, %v5155
  %v5625 = vpack.c.b16 %v5163, %v5156
  %v5626 = vpack.c.b16 %v5164, %v5157
  %v5627 = vpack.c.b16 %v5165, %v5158
  %v5628 = vpack.c.b16 %v5166, %v5159
  %v5629 = vpack.c.b16 %v5167, %v5160
  %v5630 = vpack.c.b16 %v5175, %v5168
  %v5631 = vpack.c.b16 %v5176, %v5169
  %v5632 = vpack.c.b16 %v5177, %v5170
  %v5633 = vpack.c.b16 %v5178, %v5171
  %v5634 = vpack.c.b16 %v5179, %v5172
  %v5635 = vpack.c.b16 %v5180, %v5173
  %v5636 = vpack.c.b16 %v5181, %v5174
  %v5637 = vpack.c.b16 %v5189, %v5182
  %v5638 = vpack.c.b16 %v5190, %v5183
  %v5639 = vpack.c.b16 %v5191, %v5184
  %v5640 = vpack.c.b16 %v5192, %v5185
  %v5641 = vpack.c.b16 %v5193, %v5186
  %v5642 = vpack.c.b16 %v5194, %v5187
  %v5643 = vpack.c.b16 %v5195, %v5188
  %6092 = vmatpush.bf16.msra.mxu0 %v5245
  %6093 = vmatpush.bf16.msra.mxu0 %v5238
  %6094 = vmatpush.bf16.msra.mxu0 %v5231
  %6095 = vmatpush.bf16.msra.mxu0 %v5224
  %6096 = vmatpush.bf16.msra.mxu0 %v5217
  %6097 = vmatpush.bf16.msra.mxu0 %v5210
  %6098 = vmatpush.bf16.msra.mxu0 %v5203
  %6099 = vmatpush.bf16.msra.mxu0 %v5196
  %6100 = vmatmul.bf16.gmra.mxu0 %v3252
  %v6101 = vpop.f32.mrf.mxu0
  %v6102 = vadd.f32 %v3774, %v6101
  %v6103 = vpop.f32.mrf.mxu0
  %6104 = vdwg.mxu0
  %6105 = vmatpush.bf16.msra.mxu0 %v5301
  %6106 = vmatpush.bf16.msra.mxu0 %v5294
  %6107 = vmatpush.bf16.msra.mxu0 %v5287
  %6108 = vmatpush.bf16.msra.mxu0 %v5280
  %6109 = vmatpush.bf16.msra.mxu0 %v5273
  %6110 = vmatpush.bf16.msra.mxu0 %v5266
  %6111 = vmatpush.bf16.msra.mxu0 %v5259
  %6112 = vmatpush.bf16.msra.mxu0 %v5252
  %6113 = vmatmul.bf16.gmra.mxu0 %v3253
  %v6114 = vpop.f32.mrf.mxu0
  %v6115 = vadd.f32 %v6102, %v6114
  %v6116 = vpop.f32.mrf.mxu0
  %6117 = vdwg.mxu0
  %6118 = vmatpush.bf16.msra.mxu0 %v5357
  %6119 = vmatpush.bf16.msra.mxu0 %v5350
  %6120 = vmatpush.bf16.msra.mxu0 %v5343
  %6121 = vmatpush.bf16.msra.mxu0 %v5336
  %6122 = vmatpush.bf16.msra.mxu0 %v5329
  %6123 = vmatpush.bf16.msra.mxu0 %v5322
  %6124 = vmatpush.bf16.msra.mxu0 %v5315
  %6125 = vmatpush.bf16.msra.mxu0 %v5308
  %6126 = vmatmul.bf16.gmra.mxu0 %v3254
  %v6127 = vpop.f32.mrf.mxu0
  %v6128 = vadd.f32 %v6115, %v6127
  %v6129 = vpop.f32.mrf.mxu0
  %6130 = vdwg.mxu0
  %6131 = vmatpush.bf16.msra.mxu0 %v5413
  %6132 = vmatpush.bf16.msra.mxu0 %v5406
  %6133 = vmatpush.bf16.msra.mxu0 %v5399
  %6134 = vmatpush.bf16.msra.mxu0 %v5392
  %6135 = vmatpush.bf16.msra.mxu0 %v5385
  %6136 = vmatpush.bf16.msra.mxu0 %v5378
  %6137 = vmatpush.bf16.msra.mxu0 %v5371
  %6138 = vmatpush.bf16.msra.mxu0 %v5364
  %6139 = vmatmul.bf16.gmra.mxu0 %v3255
  %v6140 = vpop.f32.mrf.mxu0
  %v6141 = vadd.f32 %v6128, %v6140
  %v6142 = vpop.f32.mrf.mxu0
  %6143 = vdwg.mxu0
  %6144 = vmatpush.bf16.msra.mxu0 %v5469
  %6145 = vmatpush.bf16.msra.mxu0 %v5462
  %6146 = vmatpush.bf16.msra.mxu0 %v5455
  %6147 = vmatpush.bf16.msra.mxu0 %v5448
  %6148 = vmatpush.bf16.msra.mxu0 %v5441
  %6149 = vmatpush.bf16.msra.mxu0 %v5434
  %6150 = vmatpush.bf16.msra.mxu0 %v5427
  %6151 = vmatpush.bf16.msra.mxu0 %v5420
  %6152 = vmatmul.bf16.gmra.mxu0 %v3256
  %v6153 = vpop.f32.mrf.mxu0
  %v6154 = vadd.f32 %v6141, %v6153
  %v6155 = vpop.f32.mrf.mxu0
  %6156 = vdwg.mxu0
  %6157 = vmatpush.bf16.msra.mxu0 %v5525
  %6158 = vmatpush.bf16.msra.mxu0 %v5518
  %6159 = vmatpush.bf16.msra.mxu0 %v5511
  %6160 = vmatpush.bf16.msra.mxu0 %v5504
  %6161 = vmatpush.bf16.msra.mxu0 %v5497
  %6162 = vmatpush.bf16.msra.mxu0 %v5490
  %6163 = vmatpush.bf16.msra.mxu0 %v5483
  %6164 = vmatpush.bf16.msra.mxu0 %v5476
  %6165 = vmatmul.bf16.gmra.mxu0 %v3257
  %v6166 = vpop.f32.mrf.mxu0
  %v6167 = vadd.f32 %v6154, %v6166
  %v6168 = vpop.f32.mrf.mxu0
  %6169 = vdwg.mxu0
  %6170 = vmatpush.bf16.msra.mxu0 %v5581
  %6171 = vmatpush.bf16.msra.mxu0 %v5574
  %6172 = vmatpush.bf16.msra.mxu0 %v5567
  %6173 = vmatpush.bf16.msra.mxu0 %v5560
  %6174 = vmatpush.bf16.msra.mxu0 %v5553
  %6175 = vmatpush.bf16.msra.mxu0 %v5546
  %6176 = vmatpush.bf16.msra.mxu0 %v5539
  %6177 = vmatpush.bf16.msra.mxu0 %v5532
  %6178 = vmatmul.bf16.gmra.mxu0 %v3258
  %v6179 = vpop.f32.mrf.mxu0
  %v6180 = vadd.f32 %v6167, %v6179
  %v6181 = vpop.f32.mrf.mxu0
  %6182 = vdwg.mxu0
  %6183 = vmatpush.bf16.msra.mxu0 %v5637
  %6184 = vmatpush.bf16.msra.mxu0 %v5630
  %6185 = vmatpush.bf16.msra.mxu0 %v5623
  %6186 = vmatpush.bf16.msra.mxu0 %v5616
  %6187 = vmatpush.bf16.msra.mxu0 %v5609
  %6188 = vmatpush.bf16.msra.mxu0 %v5602
  %6189 = vmatpush.bf16.msra.mxu0 %v5595
  %6190 = vmatpush.bf16.msra.mxu0 %v5588
  %6191 = vmatmul.bf16.gmra.mxu0 %v3259
  %v6192 = vpop.f32.mrf.mxu0
  %v6193 = vadd.f32 %v6180, %v6192
  %v6194 = vpop.f32.mrf.mxu0
  %6195 = vdwg.mxu0
  %6196 = vmatpush.bf16.msra.mxu0 %v5246
  %6197 = vmatpush.bf16.msra.mxu0 %v5239
  %6198 = vmatpush.bf16.msra.mxu0 %v5232
  %6199 = vmatpush.bf16.msra.mxu0 %v5225
  %6200 = vmatpush.bf16.msra.mxu0 %v5218
  %6201 = vmatpush.bf16.msra.mxu0 %v5211
  %6202 = vmatpush.bf16.msra.mxu0 %v5204
  %6203 = vmatpush.bf16.msra.mxu0 %v5197
  %6204 = vmatmul.bf16.gmra.mxu0 %v3252
  %v6205 = vpop.f32.mrf.mxu0
  %v6206 = vadd.f32 %v3775, %v6205
  %v6207 = vpop.f32.mrf.mxu0
  %6208 = vdwg.mxu0
  %6209 = vmatpush.bf16.msra.mxu0 %v5302
  %6210 = vmatpush.bf16.msra.mxu0 %v5295
  %6211 = vmatpush.bf16.msra.mxu0 %v5288
  %6212 = vmatpush.bf16.msra.mxu0 %v5281
  %6213 = vmatpush.bf16.msra.mxu0 %v5274
  %6214 = vmatpush.bf16.msra.mxu0 %v5267
  %6215 = vmatpush.bf16.msra.mxu0 %v5260
  %6216 = vmatpush.bf16.msra.mxu0 %v5253
  %6217 = vmatmul.bf16.gmra.mxu0 %v3253
  %v6218 = vpop.f32.mrf.mxu0
  %v6219 = vadd.f32 %v6206, %v6218
  %v6220 = vpop.f32.mrf.mxu0
  %6221 = vdwg.mxu0
  %6222 = vmatpush.bf16.msra.mxu0 %v5358
  %6223 = vmatpush.bf16.msra.mxu0 %v5351
  %6224 = vmatpush.bf16.msra.mxu0 %v5344
  %6225 = vmatpush.bf16.msra.mxu0 %v5337
  %6226 = vmatpush.bf16.msra.mxu0 %v5330
  %6227 = vmatpush.bf16.msra.mxu0 %v5323
  %6228 = vmatpush.bf16.msra.mxu0 %v5316
  %6229 = vmatpush.bf16.msra.mxu0 %v5309
  %6230 = vmatmul.bf16.gmra.mxu0 %v3254
  %v6231 = vpop.f32.mrf.mxu0
  %v6232 = vadd.f32 %v6219, %v6231
  %v6233 = vpop.f32.mrf.mxu0
  %6234 = vdwg.mxu0
  %6235 = vmatpush.bf16.msra.mxu0 %v5414
  %6236 = vmatpush.bf16.msra.mxu0 %v5407
  %6237 = vmatpush.bf16.msra.mxu0 %v5400
  %6238 = vmatpush.bf16.msra.mxu0 %v5393
  %6239 = vmatpush.bf16.msra.mxu0 %v5386
  %6240 = vmatpush.bf16.msra.mxu0 %v5379
  %6241 = vmatpush.bf16.msra.mxu0 %v5372
  %6242 = vmatpush.bf16.msra.mxu0 %v5365
  %6243 = vmatmul.bf16.gmra.mxu0 %v3255
  %v6244 = vpop.f32.mrf.mxu0
  %v6245 = vadd.f32 %v6232, %v6244
  %v6246 = vpop.f32.mrf.mxu0
  %6247 = vdwg.mxu0
  %6248 = vmatpush.bf16.msra.mxu0 %v5470
  %6249 = vmatpush.bf16.msra.mxu0 %v5463
  %6250 = vmatpush.bf16.msra.mxu0 %v5456
  %6251 = vmatpush.bf16.msra.mxu0 %v5449
  %6252 = vmatpush.bf16.msra.mxu0 %v5442
  %6253 = vmatpush.bf16.msra.mxu0 %v5435
  %6254 = vmatpush.bf16.msra.mxu0 %v5428
  %6255 = vmatpush.bf16.msra.mxu0 %v5421
  %6256 = vmatmul.bf16.gmra.mxu0 %v3256
  %v6257 = vpop.f32.mrf.mxu0
  %v6258 = vadd.f32 %v6245, %v6257
  %v6259 = vpop.f32.mrf.mxu0
  %6260 = vdwg.mxu0
  %6261 = vmatpush.bf16.msra.mxu0 %v5526
  %6262 = vmatpush.bf16.msra.mxu0 %v5519
  %6263 = vmatpush.bf16.msra.mxu0 %v5512
  %6264 = vmatpush.bf16.msra.mxu0 %v5505
  %6265 = vmatpush.bf16.msra.mxu0 %v5498
  %6266 = vmatpush.bf16.msra.mxu0 %v5491
  %6267 = vmatpush.bf16.msra.mxu0 %v5484
  %6268 = vmatpush.bf16.msra.mxu0 %v5477
  %6269 = vmatmul.bf16.gmra.mxu0 %v3257
  %v6270 = vpop.f32.mrf.mxu0
  %v6271 = vadd.f32 %v6258, %v6270
  %v6272 = vpop.f32.mrf.mxu0
  %6273 = vdwg.mxu0
  %6274 = vmatpush.bf16.msra.mxu0 %v5582
  %6275 = vmatpush.bf16.msra.mxu0 %v5575
  %6276 = vmatpush.bf16.msra.mxu0 %v5568
  %6277 = vmatpush.bf16.msra.mxu0 %v5561
  %6278 = vmatpush.bf16.msra.mxu0 %v5554
  %6279 = vmatpush.bf16.msra.mxu0 %v5547
  %6280 = vmatpush.bf16.msra.mxu0 %v5540
  %6281 = vmatpush.bf16.msra.mxu0 %v5533
  %6282 = vmatmul.bf16.gmra.mxu0 %v3258
  %v6283 = vpop.f32.mrf.mxu0
  %v6284 = vadd.f32 %v6271, %v6283
  %v6285 = vpop.f32.mrf.mxu0
  %6286 = vdwg.mxu0
  %6287 = vmatpush.bf16.msra.mxu0 %v5638
  %6288 = vmatpush.bf16.msra.mxu0 %v5631
  %6289 = vmatpush.bf16.msra.mxu0 %v5624
  %6290 = vmatpush.bf16.msra.mxu0 %v5617
  %6291 = vmatpush.bf16.msra.mxu0 %v5610
  %6292 = vmatpush.bf16.msra.mxu0 %v5603
  %6293 = vmatpush.bf16.msra.mxu0 %v5596
  %6294 = vmatpush.bf16.msra.mxu0 %v5589
  %6295 = vmatmul.bf16.gmra.mxu0 %v3259
  %v6296 = vpop.f32.mrf.mxu0
  %v6297 = vadd.f32 %v6284, %v6296
  %v6298 = vpop.f32.mrf.mxu0
  %6299 = vdwg.mxu0
  %6300 = vmatpush.bf16.msra.mxu0 %v5247
  %6301 = vmatpush.bf16.msra.mxu0 %v5240
  %6302 = vmatpush.bf16.msra.mxu0 %v5233
  %6303 = vmatpush.bf16.msra.mxu0 %v5226
  %6304 = vmatpush.bf16.msra.mxu0 %v5219
  %6305 = vmatpush.bf16.msra.mxu0 %v5212
  %6306 = vmatpush.bf16.msra.mxu0 %v5205
  %6307 = vmatpush.bf16.msra.mxu0 %v5198
  %6308 = vmatmul.bf16.gmra.mxu0 %v3252
  %v6309 = vpop.f32.mrf.mxu0
  %v6310 = vadd.f32 %v3776, %v6309
  %v6311 = vpop.f32.mrf.mxu0
  %6312 = vdwg.mxu0
  %6313 = vmatpush.bf16.msra.mxu0 %v5303
  %6314 = vmatpush.bf16.msra.mxu0 %v5296
  %6315 = vmatpush.bf16.msra.mxu0 %v5289
  %6316 = vmatpush.bf16.msra.mxu0 %v5282
  %6317 = vmatpush.bf16.msra.mxu0 %v5275
  %6318 = vmatpush.bf16.msra.mxu0 %v5268
  %6319 = vmatpush.bf16.msra.mxu0 %v5261
  %6320 = vmatpush.bf16.msra.mxu0 %v5254
  %6321 = vmatmul.bf16.gmra.mxu0 %v3253
  %v6322 = vpop.f32.mrf.mxu0
  %v6323 = vadd.f32 %v6310, %v6322
  %v6324 = vpop.f32.mrf.mxu0
  %6325 = vdwg.mxu0
  %6326 = vmatpush.bf16.msra.mxu0 %v5359
  %6327 = vmatpush.bf16.msra.mxu0 %v5352
  %6328 = vmatpush.bf16.msra.mxu0 %v5345
  %6329 = vmatpush.bf16.msra.mxu0 %v5338
  %6330 = vmatpush.bf16.msra.mxu0 %v5331
  %6331 = vmatpush.bf16.msra.mxu0 %v5324
  %6332 = vmatpush.bf16.msra.mxu0 %v5317
  %6333 = vmatpush.bf16.msra.mxu0 %v5310
  %6334 = vmatmul.bf16.gmra.mxu0 %v3254
  %v6335 = vpop.f32.mrf.mxu0
  %v6336 = vadd.f32 %v6323, %v6335
  %v6337 = vpop.f32.mrf.mxu0
  %6338 = vdwg.mxu0
  %6339 = vmatpush.bf16.msra.mxu0 %v5415
  %6340 = vmatpush.bf16.msra.mxu0 %v5408
  %6341 = vmatpush.bf16.msra.mxu0 %v5401
  %6342 = vmatpush.bf16.msra.mxu0 %v5394
  %6343 = vmatpush.bf16.msra.mxu0 %v5387
  %6344 = vmatpush.bf16.msra.mxu0 %v5380
  %6345 = vmatpush.bf16.msra.mxu0 %v5373
  %6346 = vmatpush.bf16.msra.mxu0 %v5366
  %6347 = vmatmul.bf16.gmra.mxu0 %v3255
  %v6348 = vpop.f32.mrf.mxu0
  %v6349 = vadd.f32 %v6336, %v6348
  %v6350 = vpop.f32.mrf.mxu0
  %6351 = vdwg.mxu0
  %6352 = vmatpush.bf16.msra.mxu0 %v5471
  %6353 = vmatpush.bf16.msra.mxu0 %v5464
  %6354 = vmatpush.bf16.msra.mxu0 %v5457
  %6355 = vmatpush.bf16.msra.mxu0 %v5450
  %6356 = vmatpush.bf16.msra.mxu0 %v5443
  %6357 = vmatpush.bf16.msra.mxu0 %v5436
  %6358 = vmatpush.bf16.msra.mxu0 %v5429
  %6359 = vmatpush.bf16.msra.mxu0 %v5422
  %6360 = vmatmul.bf16.gmra.mxu0 %v3256
  %v6361 = vpop.f32.mrf.mxu0
  %v6362 = vadd.f32 %v6349, %v6361
  %v6363 = vpop.f32.mrf.mxu0
  %6364 = vdwg.mxu0
  %6365 = vmatpush.bf16.msra.mxu0 %v5527
  %6366 = vmatpush.bf16.msra.mxu0 %v5520
  %6367 = vmatpush.bf16.msra.mxu0 %v5513
  %6368 = vmatpush.bf16.msra.mxu0 %v5506
  %6369 = vmatpush.bf16.msra.mxu0 %v5499
  %6370 = vmatpush.bf16.msra.mxu0 %v5492
  %6371 = vmatpush.bf16.msra.mxu0 %v5485
  %6372 = vmatpush.bf16.msra.mxu0 %v5478
  %6373 = vmatmul.bf16.gmra.mxu0 %v3257
  %v6374 = vpop.f32.mrf.mxu0
  %v6375 = vadd.f32 %v6362, %v6374
  %v6376 = vpop.f32.mrf.mxu0
  %6377 = vdwg.mxu0
  %6378 = vmatpush.bf16.msra.mxu0 %v5583
  %6379 = vmatpush.bf16.msra.mxu0 %v5576
  %6380 = vmatpush.bf16.msra.mxu0 %v5569
  %6381 = vmatpush.bf16.msra.mxu0 %v5562
  %6382 = vmatpush.bf16.msra.mxu0 %v5555
  %6383 = vmatpush.bf16.msra.mxu0 %v5548
  %6384 = vmatpush.bf16.msra.mxu0 %v5541
  %6385 = vmatpush.bf16.msra.mxu0 %v5534
  %6386 = vmatmul.bf16.gmra.mxu0 %v3258
  %v6387 = vpop.f32.mrf.mxu0
  %v6388 = vadd.f32 %v6375, %v6387
  %v6389 = vpop.f32.mrf.mxu0
  %6390 = vdwg.mxu0
  %6391 = vmatpush.bf16.msra.mxu0 %v5639
  %6392 = vmatpush.bf16.msra.mxu0 %v5632
  %6393 = vmatpush.bf16.msra.mxu0 %v5625
  %6394 = vmatpush.bf16.msra.mxu0 %v5618
  %6395 = vmatpush.bf16.msra.mxu0 %v5611
  %6396 = vmatpush.bf16.msra.mxu0 %v5604
  %6397 = vmatpush.bf16.msra.mxu0 %v5597
  %6398 = vmatpush.bf16.msra.mxu0 %v5590
  %6399 = vmatmul.bf16.gmra.mxu0 %v3259
  %v6400 = vpop.f32.mrf.mxu0
  %v6401 = vadd.f32 %v6388, %v6400
  %v6402 = vpop.f32.mrf.mxu0
  %6403 = vdwg.mxu0
  %6404 = vmatpush.bf16.msra.mxu0 %v5248
  %6405 = vmatpush.bf16.msra.mxu0 %v5241
  %6406 = vmatpush.bf16.msra.mxu0 %v5234
  %6407 = vmatpush.bf16.msra.mxu0 %v5227
  %6408 = vmatpush.bf16.msra.mxu0 %v5220
  %6409 = vmatpush.bf16.msra.mxu0 %v5213
  %6410 = vmatpush.bf16.msra.mxu0 %v5206
  %6411 = vmatpush.bf16.msra.mxu0 %v5199
  %6412 = vmatmul.bf16.gmra.mxu0 %v3252
  %v6413 = vpop.f32.mrf.mxu0
  %v6414 = vadd.f32 %v3777, %v6413
  %v6415 = vpop.f32.mrf.mxu0
  %6416 = vdwg.mxu0
  %6417 = vmatpush.bf16.msra.mxu0 %v5304
  %6418 = vmatpush.bf16.msra.mxu0 %v5297
  %6419 = vmatpush.bf16.msra.mxu0 %v5290
  %6420 = vmatpush.bf16.msra.mxu0 %v5283
  %6421 = vmatpush.bf16.msra.mxu0 %v5276
  %6422 = vmatpush.bf16.msra.mxu0 %v5269
  %6423 = vmatpush.bf16.msra.mxu0 %v5262
  %6424 = vmatpush.bf16.msra.mxu0 %v5255
  %6425 = vmatmul.bf16.gmra.mxu0 %v3253
  %v6426 = vpop.f32.mrf.mxu0
  %v6427 = vadd.f32 %v6414, %v6426
  %v6428 = vpop.f32.mrf.mxu0
  %6429 = vdwg.mxu0
  %6430 = vmatpush.bf16.msra.mxu0 %v5360
  %6431 = vmatpush.bf16.msra.mxu0 %v5353
  %6432 = vmatpush.bf16.msra.mxu0 %v5346
  %6433 = vmatpush.bf16.msra.mxu0 %v5339
  %6434 = vmatpush.bf16.msra.mxu0 %v5332
  %6435 = vmatpush.bf16.msra.mxu0 %v5325
  %6436 = vmatpush.bf16.msra.mxu0 %v5318
  %6437 = vmatpush.bf16.msra.mxu0 %v5311
  %6438 = vmatmul.bf16.gmra.mxu0 %v3254
  %v6439 = vpop.f32.mrf.mxu0
  %v6440 = vadd.f32 %v6427, %v6439
  %v6441 = vpop.f32.mrf.mxu0
  %6442 = vdwg.mxu0
  %6443 = vmatpush.bf16.msra.mxu0 %v5416
  %6444 = vmatpush.bf16.msra.mxu0 %v5409
  %6445 = vmatpush.bf16.msra.mxu0 %v5402
  %6446 = vmatpush.bf16.msra.mxu0 %v5395
  %6447 = vmatpush.bf16.msra.mxu0 %v5388
  %6448 = vmatpush.bf16.msra.mxu0 %v5381
  %6449 = vmatpush.bf16.msra.mxu0 %v5374
  %6450 = vmatpush.bf16.msra.mxu0 %v5367
  %6451 = vmatmul.bf16.gmra.mxu0 %v3255
  %v6452 = vpop.f32.mrf.mxu0
  %v6453 = vadd.f32 %v6440, %v6452
  %v6454 = vpop.f32.mrf.mxu0
  %6455 = vdwg.mxu0
  %6456 = vmatpush.bf16.msra.mxu0 %v5472
  %6457 = vmatpush.bf16.msra.mxu0 %v5465
  %6458 = vmatpush.bf16.msra.mxu0 %v5458
  %6459 = vmatpush.bf16.msra.mxu0 %v5451
  %6460 = vmatpush.bf16.msra.mxu0 %v5444
  %6461 = vmatpush.bf16.msra.mxu0 %v5437
  %6462 = vmatpush.bf16.msra.mxu0 %v5430
  %6463 = vmatpush.bf16.msra.mxu0 %v5423
  %6464 = vmatmul.bf16.gmra.mxu0 %v3256
  %v6465 = vpop.f32.mrf.mxu0
  %v6466 = vadd.f32 %v6453, %v6465
  %v6467 = vpop.f32.mrf.mxu0
  %6468 = vdwg.mxu0
  %6469 = vmatpush.bf16.msra.mxu0 %v5528
  %6470 = vmatpush.bf16.msra.mxu0 %v5521
  %6471 = vmatpush.bf16.msra.mxu0 %v5514
  %6472 = vmatpush.bf16.msra.mxu0 %v5507
  %6473 = vmatpush.bf16.msra.mxu0 %v5500
  %6474 = vmatpush.bf16.msra.mxu0 %v5493
  %6475 = vmatpush.bf16.msra.mxu0 %v5486
  %6476 = vmatpush.bf16.msra.mxu0 %v5479
  %6477 = vmatmul.bf16.gmra.mxu0 %v3257
  %v6478 = vpop.f32.mrf.mxu0
  %v6479 = vadd.f32 %v6466, %v6478
  %v6480 = vpop.f32.mrf.mxu0
  %6481 = vdwg.mxu0
  %6482 = vmatpush.bf16.msra.mxu0 %v5584
  %6483 = vmatpush.bf16.msra.mxu0 %v5577
  %6484 = vmatpush.bf16.msra.mxu0 %v5570
  %6485 = vmatpush.bf16.msra.mxu0 %v5563
  %6486 = vmatpush.bf16.msra.mxu0 %v5556
  %6487 = vmatpush.bf16.msra.mxu0 %v5549
  %6488 = vmatpush.bf16.msra.mxu0 %v5542
  %6489 = vmatpush.bf16.msra.mxu0 %v5535
  %6490 = vmatmul.bf16.gmra.mxu0 %v3258
  %v6491 = vpop.f32.mrf.mxu0
  %v6492 = vadd.f32 %v6479, %v6491
  %v6493 = vpop.f32.mrf.mxu0
  %6494 = vdwg.mxu0
  %6495 = vmatpush.bf16.msra.mxu0 %v5640
  %6496 = vmatpush.bf16.msra.mxu0 %v5633
  %6497 = vmatpush.bf16.msra.mxu0 %v5626
  %6498 = vmatpush.bf16.msra.mxu0 %v5619
  %6499 = vmatpush.bf16.msra.mxu0 %v5612
  %6500 = vmatpush.bf16.msra.mxu0 %v5605
  %6501 = vmatpush.bf16.msra.mxu0 %v5598
  %6502 = vmatpush.bf16.msra.mxu0 %v5591
  %6503 = vmatmul.bf16.gmra.mxu0 %v3259
  %v6504 = vpop.f32.mrf.mxu0
  %v6505 = vadd.f32 %v6492, %v6504
  %v6506 = vpop.f32.mrf.mxu0
  %6507 = vdwg.mxu0
  %6508 = vmatpush.bf16.msra.mxu0 %v5249
  %6509 = vmatpush.bf16.msra.mxu0 %v5242
  %6510 = vmatpush.bf16.msra.mxu0 %v5235
  %6511 = vmatpush.bf16.msra.mxu0 %v5228
  %6512 = vmatpush.bf16.msra.mxu0 %v5221
  %6513 = vmatpush.bf16.msra.mxu0 %v5214
  %6514 = vmatpush.bf16.msra.mxu0 %v5207
  %6515 = vmatpush.bf16.msra.mxu0 %v5200
  %6516 = vmatmul.bf16.gmra.mxu0 %v3252
  %v6517 = vpop.f32.mrf.mxu0
  %v6518 = vadd.f32 %v3778, %v6517
  %v6519 = vpop.f32.mrf.mxu0
  %6520 = vdwg.mxu0
  %6521 = vmatpush.bf16.msra.mxu0 %v5305
  %6522 = vmatpush.bf16.msra.mxu0 %v5298
  %6523 = vmatpush.bf16.msra.mxu0 %v5291
  %6524 = vmatpush.bf16.msra.mxu0 %v5284
  %6525 = vmatpush.bf16.msra.mxu0 %v5277
  %6526 = vmatpush.bf16.msra.mxu0 %v5270
  %6527 = vmatpush.bf16.msra.mxu0 %v5263
  %6528 = vmatpush.bf16.msra.mxu0 %v5256
  %6529 = vmatmul.bf16.gmra.mxu0 %v3253
  %v6530 = vpop.f32.mrf.mxu0
  %v6531 = vadd.f32 %v6518, %v6530
  %v6532 = vpop.f32.mrf.mxu0
  %6533 = vdwg.mxu0
  %6534 = vmatpush.bf16.msra.mxu0 %v5361
  %6535 = vmatpush.bf16.msra.mxu0 %v5354
  %6536 = vmatpush.bf16.msra.mxu0 %v5347
  %6537 = vmatpush.bf16.msra.mxu0 %v5340
  %6538 = vmatpush.bf16.msra.mxu0 %v5333
  %6539 = vmatpush.bf16.msra.mxu0 %v5326
  %6540 = vmatpush.bf16.msra.mxu0 %v5319
  %6541 = vmatpush.bf16.msra.mxu0 %v5312
  %6542 = vmatmul.bf16.gmra.mxu0 %v3254
  %v6543 = vpop.f32.mrf.mxu0
  %v6544 = vadd.f32 %v6531, %v6543
  %v6545 = vpop.f32.mrf.mxu0
  %6546 = vdwg.mxu0
  %6547 = vmatpush.bf16.msra.mxu0 %v5417
  %6548 = vmatpush.bf16.msra.mxu0 %v5410
  %6549 = vmatpush.bf16.msra.mxu0 %v5403
  %6550 = vmatpush.bf16.msra.mxu0 %v5396
  %6551 = vmatpush.bf16.msra.mxu0 %v5389
  %6552 = vmatpush.bf16.msra.mxu0 %v5382
  %6553 = vmatpush.bf16.msra.mxu0 %v5375
  %6554 = vmatpush.bf16.msra.mxu0 %v5368
  %6555 = vmatmul.bf16.gmra.mxu0 %v3255
  %v6556 = vpop.f32.mrf.mxu0
  %v6557 = vadd.f32 %v6544, %v6556
  %v6558 = vpop.f32.mrf.mxu0
  %6559 = vdwg.mxu0
  %6560 = vmatpush.bf16.msra.mxu0 %v5473
  %6561 = vmatpush.bf16.msra.mxu0 %v5466
  %6562 = vmatpush.bf16.msra.mxu0 %v5459
  %6563 = vmatpush.bf16.msra.mxu0 %v5452
  %6564 = vmatpush.bf16.msra.mxu0 %v5445
  %6565 = vmatpush.bf16.msra.mxu0 %v5438
  %6566 = vmatpush.bf16.msra.mxu0 %v5431
  %6567 = vmatpush.bf16.msra.mxu0 %v5424
  %6568 = vmatmul.bf16.gmra.mxu0 %v3256
  %v6569 = vpop.f32.mrf.mxu0
  %v6570 = vadd.f32 %v6557, %v6569
  %v6571 = vpop.f32.mrf.mxu0
  %6572 = vdwg.mxu0
  %6573 = vmatpush.bf16.msra.mxu0 %v5529
  %6574 = vmatpush.bf16.msra.mxu0 %v5522
  %6575 = vmatpush.bf16.msra.mxu0 %v5515
  %6576 = vmatpush.bf16.msra.mxu0 %v5508
  %6577 = vmatpush.bf16.msra.mxu0 %v5501
  %6578 = vmatpush.bf16.msra.mxu0 %v5494
  %6579 = vmatpush.bf16.msra.mxu0 %v5487
  %6580 = vmatpush.bf16.msra.mxu0 %v5480
  %6581 = vmatmul.bf16.gmra.mxu0 %v3257
  %v6582 = vpop.f32.mrf.mxu0
  %v6583 = vadd.f32 %v6570, %v6582
  %v6584 = vpop.f32.mrf.mxu0
  %6585 = vdwg.mxu0
  %6586 = vmatpush.bf16.msra.mxu0 %v5585
  %6587 = vmatpush.bf16.msra.mxu0 %v5578
  %6588 = vmatpush.bf16.msra.mxu0 %v5571
  %6589 = vmatpush.bf16.msra.mxu0 %v5564
  %6590 = vmatpush.bf16.msra.mxu0 %v5557
  %6591 = vmatpush.bf16.msra.mxu0 %v5550
  %6592 = vmatpush.bf16.msra.mxu0 %v5543
  %6593 = vmatpush.bf16.msra.mxu0 %v5536
  %6594 = vmatmul.bf16.gmra.mxu0 %v3258
  %v6595 = vpop.f32.mrf.mxu0
  %v6596 = vadd.f32 %v6583, %v6595
  %v6597 = vpop.f32.mrf.mxu0
  %6598 = vdwg.mxu0
  %6599 = vmatpush.bf16.msra.mxu0 %v5641
  %6600 = vmatpush.bf16.msra.mxu0 %v5634
  %6601 = vmatpush.bf16.msra.mxu0 %v5627
  %6602 = vmatpush.bf16.msra.mxu0 %v5620
  %6603 = vmatpush.bf16.msra.mxu0 %v5613
  %6604 = vmatpush.bf16.msra.mxu0 %v5606
  %6605 = vmatpush.bf16.msra.mxu0 %v5599
  %6606 = vmatpush.bf16.msra.mxu0 %v5592
  %6607 = vmatmul.bf16.gmra.mxu0 %v3259
  %v6608 = vpop.f32.mrf.mxu0
  %v6609 = vadd.f32 %v6596, %v6608
  %v6610 = vpop.f32.mrf.mxu0
  %6611 = vdwg.mxu0
  %6612 = vmatpush.bf16.msra.mxu0 %v5250
  %6613 = vmatpush.bf16.msra.mxu0 %v5243
  %6614 = vmatpush.bf16.msra.mxu0 %v5236
  %6615 = vmatpush.bf16.msra.mxu0 %v5229
  %6616 = vmatpush.bf16.msra.mxu0 %v5222
  %6617 = vmatpush.bf16.msra.mxu0 %v5215
  %6618 = vmatpush.bf16.msra.mxu0 %v5208
  %6619 = vmatpush.bf16.msra.mxu0 %v5201
  %6620 = vmatmul.bf16.gmra.mxu0 %v3252
  %v6621 = vpop.f32.mrf.mxu0
  %v6622 = vadd.f32 %v3779, %v6621
  %v6623 = vpop.f32.mrf.mxu0
  %6624 = vdwg.mxu0
  %6625 = vmatpush.bf16.msra.mxu0 %v5306
  %6626 = vmatpush.bf16.msra.mxu0 %v5299
  %6627 = vmatpush.bf16.msra.mxu0 %v5292
  %6628 = vmatpush.bf16.msra.mxu0 %v5285
  %6629 = vmatpush.bf16.msra.mxu0 %v5278
  %6630 = vmatpush.bf16.msra.mxu0 %v5271
  %6631 = vmatpush.bf16.msra.mxu0 %v5264
  %6632 = vmatpush.bf16.msra.mxu0 %v5257
  %6633 = vmatmul.bf16.gmra.mxu0 %v3253
  %v6634 = vpop.f32.mrf.mxu0
  %v6635 = vadd.f32 %v6622, %v6634
  %v6636 = vpop.f32.mrf.mxu0
  %6637 = vdwg.mxu0
  %6638 = vmatpush.bf16.msra.mxu0 %v5362
  %6639 = vmatpush.bf16.msra.mxu0 %v5355
  %6640 = vmatpush.bf16.msra.mxu0 %v5348
  %6641 = vmatpush.bf16.msra.mxu0 %v5341
  %6642 = vmatpush.bf16.msra.mxu0 %v5334
  %6643 = vmatpush.bf16.msra.mxu0 %v5327
  %6644 = vmatpush.bf16.msra.mxu0 %v5320
  %6645 = vmatpush.bf16.msra.mxu0 %v5313
  %6646 = vmatmul.bf16.gmra.mxu0 %v3254
  %v6647 = vpop.f32.mrf.mxu0
  %v6648 = vadd.f32 %v6635, %v6647
  %v6649 = vpop.f32.mrf.mxu0
  %6650 = vdwg.mxu0
  %6651 = vmatpush.bf16.msra.mxu0 %v5418
  %6652 = vmatpush.bf16.msra.mxu0 %v5411
  %6653 = vmatpush.bf16.msra.mxu0 %v5404
  %6654 = vmatpush.bf16.msra.mxu0 %v5397
  %6655 = vmatpush.bf16.msra.mxu0 %v5390
  %6656 = vmatpush.bf16.msra.mxu0 %v5383
  %6657 = vmatpush.bf16.msra.mxu0 %v5376
  %6658 = vmatpush.bf16.msra.mxu0 %v5369
  %6659 = vmatmul.bf16.gmra.mxu0 %v3255
  %v6660 = vpop.f32.mrf.mxu0
  %v6661 = vadd.f32 %v6648, %v6660
  %v6662 = vpop.f32.mrf.mxu0
  %6663 = vdwg.mxu0
  %6664 = vmatpush.bf16.msra.mxu0 %v5474
  %6665 = vmatpush.bf16.msra.mxu0 %v5467
  %6666 = vmatpush.bf16.msra.mxu0 %v5460
  %6667 = vmatpush.bf16.msra.mxu0 %v5453
  %6668 = vmatpush.bf16.msra.mxu0 %v5446
  %6669 = vmatpush.bf16.msra.mxu0 %v5439
  %6670 = vmatpush.bf16.msra.mxu0 %v5432
  %6671 = vmatpush.bf16.msra.mxu0 %v5425
  %6672 = vmatmul.bf16.gmra.mxu0 %v3256
  %v6673 = vpop.f32.mrf.mxu0
  %v6674 = vadd.f32 %v6661, %v6673
  %v6675 = vpop.f32.mrf.mxu0
  %6676 = vdwg.mxu0
  %6677 = vmatpush.bf16.msra.mxu0 %v5530
  %6678 = vmatpush.bf16.msra.mxu0 %v5523
  %6679 = vmatpush.bf16.msra.mxu0 %v5516
  %6680 = vmatpush.bf16.msra.mxu0 %v5509
  %6681 = vmatpush.bf16.msra.mxu0 %v5502
  %6682 = vmatpush.bf16.msra.mxu0 %v5495
  %6683 = vmatpush.bf16.msra.mxu0 %v5488
  %6684 = vmatpush.bf16.msra.mxu0 %v5481
  %6685 = vmatmul.bf16.gmra.mxu0 %v3257
  %v6686 = vpop.f32.mrf.mxu0
  %v6687 = vadd.f32 %v6674, %v6686
  %v6688 = vpop.f32.mrf.mxu0
  %6689 = vdwg.mxu0
  %6690 = vmatpush.bf16.msra.mxu0 %v5586
  %6691 = vmatpush.bf16.msra.mxu0 %v5579
  %6692 = vmatpush.bf16.msra.mxu0 %v5572
  %6693 = vmatpush.bf16.msra.mxu0 %v5565
  %6694 = vmatpush.bf16.msra.mxu0 %v5558
  %6695 = vmatpush.bf16.msra.mxu0 %v5551
  %6696 = vmatpush.bf16.msra.mxu0 %v5544
  %6697 = vmatpush.bf16.msra.mxu0 %v5537
  %6698 = vmatmul.bf16.gmra.mxu0 %v3258
  %v6699 = vpop.f32.mrf.mxu0
  %v6700 = vadd.f32 %v6687, %v6699
  %v6701 = vpop.f32.mrf.mxu0
  %6702 = vdwg.mxu0
  %6703 = vmatpush.bf16.msra.mxu0 %v5642
  %6704 = vmatpush.bf16.msra.mxu0 %v5635
  %6705 = vmatpush.bf16.msra.mxu0 %v5628
  %6706 = vmatpush.bf16.msra.mxu0 %v5621
  %6707 = vmatpush.bf16.msra.mxu0 %v5614
  %6708 = vmatpush.bf16.msra.mxu0 %v5607
  %6709 = vmatpush.bf16.msra.mxu0 %v5600
  %6710 = vmatpush.bf16.msra.mxu0 %v5593
  %6711 = vmatmul.bf16.gmra.mxu0 %v3259
  %v6712 = vpop.f32.mrf.mxu0
  %v6713 = vadd.f32 %v6700, %v6712
  %v6714 = vpop.f32.mrf.mxu0
  %6715 = vdwg.mxu0
  %6716 = vmatpush.bf16.msra.mxu0 %v5251
  %6717 = vmatpush.bf16.msra.mxu0 %v5244
  %6718 = vmatpush.bf16.msra.mxu0 %v5237
  %6719 = vmatpush.bf16.msra.mxu0 %v5230
  %6720 = vmatpush.bf16.msra.mxu0 %v5223
  %6721 = vmatpush.bf16.msra.mxu0 %v5216
  %6722 = vmatpush.bf16.msra.mxu0 %v5209
  %6723 = vmatpush.bf16.msra.mxu0 %v5202
  %6724 = vmatmul.bf16.gmra.mxu0 %v3252
  %v6725 = vpop.f32.mrf.mxu0
  %v6726 = vadd.f32 %v3780, %v6725
  %v6727 = vpop.f32.mrf.mxu0
  %6728 = vdwg.mxu0
  %6729 = vmatpush.bf16.msra.mxu0 %v5307
  %6730 = vmatpush.bf16.msra.mxu0 %v5300
  %6731 = vmatpush.bf16.msra.mxu0 %v5293
  %6732 = vmatpush.bf16.msra.mxu0 %v5286
  %6733 = vmatpush.bf16.msra.mxu0 %v5279
  %6734 = vmatpush.bf16.msra.mxu0 %v5272
  %6735 = vmatpush.bf16.msra.mxu0 %v5265
  %6736 = vmatpush.bf16.msra.mxu0 %v5258
  %6737 = vmatmul.bf16.gmra.mxu0 %v3253
  %v6738 = vpop.f32.mrf.mxu0
  %v6739 = vadd.f32 %v6726, %v6738
  %v6740 = vpop.f32.mrf.mxu0
  %6741 = vdwg.mxu0
  %6742 = vmatpush.bf16.msra.mxu0 %v5363
  %6743 = vmatpush.bf16.msra.mxu0 %v5356
  %6744 = vmatpush.bf16.msra.mxu0 %v5349
  %6745 = vmatpush.bf16.msra.mxu0 %v5342
  %6746 = vmatpush.bf16.msra.mxu0 %v5335
  %6747 = vmatpush.bf16.msra.mxu0 %v5328
  %6748 = vmatpush.bf16.msra.mxu0 %v5321
  %6749 = vmatpush.bf16.msra.mxu0 %v5314
  %6750 = vmatmul.bf16.gmra.mxu0 %v3254
  %v6751 = vpop.f32.mrf.mxu0
  %v6752 = vadd.f32 %v6739, %v6751
  %v6753 = vpop.f32.mrf.mxu0
  %6754 = vdwg.mxu0
  %6755 = vmatpush.bf16.msra.mxu0 %v5419
  %6756 = vmatpush.bf16.msra.mxu0 %v5412
  %6757 = vmatpush.bf16.msra.mxu0 %v5405
  %6758 = vmatpush.bf16.msra.mxu0 %v5398
  %6759 = vmatpush.bf16.msra.mxu0 %v5391
  %6760 = vmatpush.bf16.msra.mxu0 %v5384
  %6761 = vmatpush.bf16.msra.mxu0 %v5377
  %6762 = vmatpush.bf16.msra.mxu0 %v5370
  %6763 = vmatmul.bf16.gmra.mxu0 %v3255
  %v6764 = vpop.f32.mrf.mxu0
  %v6765 = vadd.f32 %v6752, %v6764
  %v6766 = vpop.f32.mrf.mxu0
  %6767 = vdwg.mxu0
  %6768 = vmatpush.bf16.msra.mxu0 %v5475
  %6769 = vmatpush.bf16.msra.mxu0 %v5468
  %6770 = vmatpush.bf16.msra.mxu0 %v5461
  %6771 = vmatpush.bf16.msra.mxu0 %v5454
  %6772 = vmatpush.bf16.msra.mxu0 %v5447
  %6773 = vmatpush.bf16.msra.mxu0 %v5440
  %6774 = vmatpush.bf16.msra.mxu0 %v5433
  %6775 = vmatpush.bf16.msra.mxu0 %v5426
  %6776 = vmatmul.bf16.gmra.mxu0 %v3256
  %v6777 = vpop.f32.mrf.mxu0
  %v6778 = vadd.f32 %v6765, %v6777
  %v6779 = vpop.f32.mrf.mxu0
  %6780 = vdwg.mxu0
  %6781 = vmatpush.bf16.msra.mxu0 %v5531
  %6782 = vmatpush.bf16.msra.mxu0 %v5524
  %6783 = vmatpush.bf16.msra.mxu0 %v5517
  %6784 = vmatpush.bf16.msra.mxu0 %v5510
  %6785 = vmatpush.bf16.msra.mxu0 %v5503
  %6786 = vmatpush.bf16.msra.mxu0 %v5496
  %6787 = vmatpush.bf16.msra.mxu0 %v5489
  %6788 = vmatpush.bf16.msra.mxu0 %v5482
  %6789 = vmatmul.bf16.gmra.mxu0 %v3257
  %v6790 = vpop.f32.mrf.mxu0
  %v6791 = vadd.f32 %v6778, %v6790
  %v6792 = vpop.f32.mrf.mxu0
  %6793 = vdwg.mxu0
  %6794 = vmatpush.bf16.msra.mxu0 %v5587
  %6795 = vmatpush.bf16.msra.mxu0 %v5580
  %6796 = vmatpush.bf16.msra.mxu0 %v5573
  %6797 = vmatpush.bf16.msra.mxu0 %v5566
  %6798 = vmatpush.bf16.msra.mxu0 %v5559
  %6799 = vmatpush.bf16.msra.mxu0 %v5552
  %6800 = vmatpush.bf16.msra.mxu0 %v5545
  %6801 = vmatpush.bf16.msra.mxu0 %v5538
  %6802 = vmatmul.bf16.gmra.mxu0 %v3258
  %v6803 = vpop.f32.mrf.mxu0
  %v6804 = vadd.f32 %v6791, %v6803
  %v6805 = vpop.f32.mrf.mxu0
  %6806 = vdwg.mxu0
  %6807 = vmatpush.bf16.msra.mxu0 %v5643
  %6808 = vmatpush.bf16.msra.mxu0 %v5636
  %6809 = vmatpush.bf16.msra.mxu0 %v5629
  %6810 = vmatpush.bf16.msra.mxu0 %v5622
  %6811 = vmatpush.bf16.msra.mxu0 %v5615
  %6812 = vmatpush.bf16.msra.mxu0 %v5608
  %6813 = vmatpush.bf16.msra.mxu0 %v5601
  %6814 = vmatpush.bf16.msra.mxu0 %v5594
  %6815 = vmatmul.bf16.gmra.mxu0 %v3259
  %v6816 = vpop.f32.mrf.mxu0
  %v6817 = vadd.f32 %v6804, %v6816
  %v6818 = vpop.f32.mrf.mxu0
  %6819 = vdwg.mxu0
  %v6820 = vtanh.pop %v6193
  %v6821 = vtanh.pop %v6297
  %v6822 = vtanh.pop %v6401
  %v6823 = vtanh.pop %v6505
  %v6824 = vtanh.pop %v6609
  %v6825 = vtanh.pop %v6713
  %v6826 = vtanh.pop %v6817
  %6827 = vst [vmem:[%s14] sm:$0xff] %v6820
  %6828 = vst [vmem:[%s14 + $0x8] sm:$0xff] %v6821
  %6829 = vst [vmem:[%s14 + $0x10] sm:$0xff] %v6822
  %6830 = vst [vmem:[%s14 + $0x18] sm:$0xff] %v6823
  %6831 = vst [vmem:[%s14 + $0x20] sm:$0xff] %v6824
  %6832 = vst [vmem:[%s14 + $0x28] sm:$0xff] %v6825
  %vm6833 = vcmask 130048
  %6834 = vst.msk [vmem:[%s14 + $0x30] sm:$0xff] %vm6833, %v6826
  // Predicated region
  $region58: #{generator_forward.1} parent=0 // pred_check
    _
  $region59: #{generator_forward.1} parent=0 // pred_check_branch
    %6836 = sbr.rel (0) target = $region61
  $region60: #{generator_forward.1} parent=0 // pred_region
    _
  $region61: #{generator_forward.1} parent=0 // pred_fallthru
    _
  // Predicated region
  $region62: #{generator_forward.1} parent=0 // pred_check
    _
  $region63: #{generator_forward.1} parent=0 // pred_check_branch
    %6838 = sbr.rel (0) target = $region65
  $region64: #{generator_forward.1} parent=0 // pred_region
    _
  $region65: #{generator_forward.1} parent=0 // pred_fallthru
    _

</llo_original>
